<compile_context>
chip_gen: v5e
topology: v5e:2x2
jax: 0.10.0
libtpu: 0.0.40
codegen_flags: <defaults>
</compile_context>

<pallas_src>
import functools

import jax
import jax.numpy as jnp
from jax import lax
from jax.experimental import pallas as pl
from jax.experimental.pallas import tpu as pltpu

LEAKY_SLOPE = 0.2
BN_EPS = 1e-5  # PyTorch BatchNorm2d default; training-mode batch statistics.


def _unet_innermost_kernel(xph_ref, wdp_ref, wup_ref, gamma_ref, beta_ref,
                           out_ref):
    # xph_ref : (4, N, H/2+1, W/2+1, Cin)  stride-2 phases of zero-padded input
    # wdp_ref : (16*Cin, Cf)               down-conv weights, all taps packed
    # wup_ref : (4, 4*Cf, Co)              packed up-conv weights per out phase
    # gamma_ref, beta_ref : (1, Co)
    # out_ref : (N*Hd*Wd, 4*Co)            lane index = (2*r + s)*Co + co
    _, N, Hp, Wp, Cin = xph_ref.shape
    Cf = wdp_ref.shape[-1]
    Co = wup_ref.shape[-1]
    Hd, Wd = Hp - 1, Wp - 1
    M = N * Hd * Wd
    mxu_dtype = wdp_ref.dtype  # matmul operand dtype (f32 or bf16), acc is f32

    # ---- down path: LeakyReLU(0.2) -> Conv2d(k=4, s=2, p=1, bias=False) ----
    # All 16 (phase p,q; tap a,b) contributions packed into one matmul
    # with K = 16*Cin (instead of 4 matmuls of K = 4*Cin).
    xa = []
    for i in range(4):
        v = xph_ref[i]                                 # (N, Hp, Wp, Cin)
        xa.append(jnp.maximum(v, LEAKY_SLOPE * v).astype(mxu_dtype))
    patch = jnp.concatenate(
        [xa[2 * p + q][:, a:a + Hd, b:b + Wd, :]
         for p in range(2) for q in range(2)
         for a in range(2) for b in range(2)],
        axis=-1).reshape(M, 16 * Cin)
    acc = jnp.dot(patch, wdp_ref[...], preferred_element_type=jnp.float32)

    # ---- ReLU; keep h register-resident, build the 1-wide zero border as a
    # value (no VMEM scratch, no misaligned partial stores) ----
    h = jnp.maximum(acc, 0.0).reshape(N, Hd, Wd, Cf).astype(mxu_dtype)
    zr = jnp.zeros((N, 1, Wd, Cf), mxu_dtype)
    zc = jnp.zeros((N, Hd + 2, 1, Cf), mxu_dtype)
    hp = jnp.concatenate([zr, h, zr], axis=1)          # (N, Hd+2, Wd,   Cf)
    hp = jnp.concatenate([zc, hp, zc], axis=2)         # (N, Hd+2, Wd+2, Cf)

    # ---- up path: ConvTranspose2d(k=4, s=2, p=1, bias=False), one packed
    # matmul per output parity phase; BN statistics fused into the loop ----
    outs = []
    tot = jnp.zeros((1, Co), jnp.float32)
    tot2 = jnp.zeros((1, Co), jnp.float32)
    for r in range(2):
        for s in range(2):
            up_patch = jnp.concatenate(
                [hp[:, a + r:a + r + Hd, b + s:b + s + Wd, :]
                 for a in (0, 1) for b in (0, 1)],
                axis=-1).reshape(M, 4 * Cf)
            u = jnp.dot(up_patch, wup_ref[2 * r + s],
                        preferred_element_type=jnp.float32)
            outs.append(u)
            tot = tot + jnp.sum(u, axis=0, keepdims=True)
            tot2 = tot2 + jnp.sum(u * u, axis=0, keepdims=True)

    # ---- BatchNorm2d (training-mode batch stats, biased variance), folded
    # into a single per-channel scale/shift; single lane-packed store ----
    cnt = 4.0 * M
    mean = tot / cnt
    var = jnp.maximum(tot2 / cnt - mean * mean, 0.0)
    scale = gamma_ref[...] * lax.rsqrt(var + BN_EPS)   # (1, Co), EUP rsqrt
    shift = beta_ref[...] - mean * scale
    out_ref[...] = jnp.concatenate(
        [outs[i] * scale + shift for i in range(4)], axis=-1)   # (M, 4*Co)


@functools.partial(jax.jit, static_argnames=("mxu_dtype",))
def unet_innermost_forward(x_nchw, wd_torch, wu_torch, gamma, beta, *,
                           mxu_dtype=jnp.float32):
    """Innermost UnetSkipConnectionBlock forward.

    x_nchw   : (N, input_nc, H, W)                 (H, W assumed even)
    wd_torch : (inner_nc, input_nc, 4, 4)          nn.Conv2d weight (OIHW)
    wu_torch : (inner_nc, outer_nc, 4, 4)          nn.ConvTranspose2d weight (IOHW)
    returns  : (N, input_nc + outer_nc, H, W)  ==  torch.cat([x, model(x)], 1)
    """
    N, Cin, H, W = x_nchw.shape
    Hd, Wd = H // 2, W // 2
    Cf = wd_torch.shape[0]
    Co = wu_torch.shape[1]

    # NCHW -> NHWC, zero-pad by 1, split into the 4 stride-2 input phases
    # (pure layout glue, done once in XLA).
    x = jnp.transpose(x_nchw, (0, 2, 3, 1)).astype(jnp.float32)
    xpad = jnp.pad(x, ((0, 0), (1, 1), (1, 1), (0, 0)))
    xph = jnp.stack(
        [xpad[:, p::2, q::2, :] for p in range(2) for q in range(2)], axis=0)

    # Pack conv taps along the contraction dim (done once in the wrapper).
    # Down: all 16 (p,q,a,b) taps -> one (16*Cin, Cf) weight, K-index order
    # matches the in-kernel patch concatenation order.
    wd = jnp.transpose(wd_torch, (2, 3, 1, 0)).astype(jnp.float32)   # (4,4,Cin,Cf)
    wu = jnp.transpose(wu_torch, (2, 3, 0, 1)).astype(jnp.float32)   # (4,4,Cf,Co)
    wdp = jnp.concatenate(
        [wd[2 * a + p, 2 * b + q]
         for p in range(2) for q in range(2)
         for a in range(2) for b in range(2)],
        axis=0).astype(mxu_dtype)                                    # (16*Cin, Cf)
    # Up: one (4*Cf, Co) weight per output parity phase (kernel spatially
    # flipped, tap offsets folded in).
    wup = jnp.stack([
        jnp.concatenate([wu[3 - r - 2 * a, 3 - s - 2 * b]
                         for a in range(2) for b in range(2)], axis=0)
        for r in range(2) for s in range(2)], axis=0).astype(mxu_dtype)  # (4,4*Cf,Co)

    gamma2 = gamma.reshape(1, Co).astype(jnp.float32)
    beta2 = beta.reshape(1, Co).astype(jnp.float32)

    # Single un-pipelined invocation: whole arrays resident in VMEM, nothing
    # double-buffered.  Footprint here is ~100 KiB; re-derive tiling + limit
    # if reused at larger spatial sizes (v7x VMEM is 64 MiB).
    M = N * Hd * Wd
    outph = pl.pallas_call(
        _unet_innermost_kernel,
        out_shape=jax.ShapeDtypeStruct((M, 4 * Co), jnp.float32),
        in_specs=[pl.BlockSpec(memory_space=pltpu.MemorySpace.VMEM)] * 5,
        out_specs=pl.BlockSpec(memory_space=pltpu.MemorySpace.VMEM),
        compiler_params=pltpu.CompilerParams(vmem_limit_bytes=32 * 1024 * 1024),
    )(xph, wdp, wup, gamma2, beta2)

    # Re-interleave output phases:
    #   out[n, 2*yy+r, 2*xx+s, co] = outph[n*Hd*Wd + yy*Wd + xx, (2r+s)*Co + co]
    o = outph.reshape(N, Hd, Wd, 2, 2, Co).transpose(0, 1, 3, 2, 4, 5)
    o = o.reshape(N, H, W, Co)
    o_nchw = jnp.transpose(o, (0, 3, 1, 2))

    # Skip connection: torch.cat([x, model(x)], dim=1)
    return jnp.concatenate([x_nchw.astype(jnp.float32), o_nchw], axis=1)


def _reference_forward(x_nchw, wd_torch, wu_torch, gamma, beta):
    """Pure-JAX reference mirroring the PyTorch innermost block (NCHW)."""
    a = jnp.where(x_nchw >= 0, x_nchw, LEAKY_SLOPE * x_nchw)
    h = lax.conv_general_dilated(a, wd_torch, (2, 2), ((1, 1), (1, 1)),
                                 dimension_numbers=('NCHW', 'OIHW', 'NCHW'),
                                 precision=lax.Precision.HIGHEST)
    h = jnp.maximum(h, 0.0)
    wu_conv = jnp.transpose(wu_torch, (1, 0, 2, 3))[:, :, ::-1, ::-1]
    u = lax.conv_general_dilated(h, wu_conv, (1, 1), ((2, 2), (2, 2)),
                                 lhs_dilation=(2, 2),
                                 dimension_numbers=('NCHW', 'OIHW', 'NCHW'),
                                 precision=lax.Precision.HIGHEST)
    mean = u.mean(axis=(0, 2, 3), keepdims=True)
    var = u.var(axis=(0, 2, 3), keepdims=True)
    bn = (u - mean) / jnp.sqrt(var + BN_EPS)
    bn = bn * gamma[None, :, None, None] + beta[None, :, None, None]
    return jnp.concatenate([x_nchw, bn], axis=1)


if __name__ == "__main__":
    key = jax.random.PRNGKey(0)
    k1, k2, k3 = jax.random.split(key, 3)

    N, H, W = 2, 16, 16
    outer_nc = input_nc = 4     # input_nc defaults to outer_nc in the module
    inner_nc = 8

    x = jax.random.normal(k1, (N, input_nc, H, W), jnp.float32)
    wd = 0.05 * jax.random.normal(k2, (inner_nc, input_nc, 4, 4), jnp.float32)
    wu = 0.05 * jax.random.normal(k3, (inner_nc, outer_nc, 4, 4), jnp.float32)
    gamma = jnp.ones((outer_nc,), jnp.float32)   # BatchNorm2d affine init
    beta = jnp.zeros((outer_nc,), jnp.float32)

    ref = _reference_forward(x, wd, wu, gamma, beta)

    # f32 MXU-operand path: must match the reference tightly.
    out = unet_innermost_forward(x, wd, wu, gamma, beta, mxu_dtype=jnp.float32)
    out = jax.block_until_ready(out)
    assert out.shape == (N, input_nc + outer_nc, H, W)
    err = float(jnp.max(jnp.abs(out - ref)))
    assert err < 1e-3, f"f32 path max abs error vs reference: {err}"

    # bf16 MXU-operand path (v5e/v6e perf path; f32 accumulation). Loose sanity
    # bound: BN rescales to unit variance so operand rounding shows up at ~1e-2.
    out_bf = unet_innermost_forward(x, wd, wu, gamma, beta,
                                    mxu_dtype=jnp.bfloat16)
    out_bf = jax.block_until_ready(out_bf)
    err_bf = float(jnp.max(jnp.abs(out_bf - ref)))
    assert err_bf < 1e-1, f"bf16 path max abs error vs reference: {err_bf}"

    print("KERNEL_OK")
</pallas_src>

<mosaic_0001>
module attributes {stable_mosaic.version = 11 : i64} {
  func.func @_unet_innermost_kernel(%arg0: memref<4x2x9x9x4xf32, #tpu.memory_space<vmem>>, %arg1: memref<64x8xf32, #tpu.memory_space<vmem>>, %arg2: memref<4x32x4xf32, #tpu.memory_space<vmem>>, %arg3: memref<1x4xf32, #tpu.memory_space<vmem>>, %arg4: memref<1x4xf32, #tpu.memory_space<vmem>>, %arg5: memref<128x16xf32, #tpu.memory_space<vmem>>) attributes {dimension_semantics = [], scalar_prefetch = 0 : i64, scratch_operands = 0 : i64, tpu.core_type = #tpu.core_type<tc>} {
    %c0 = arith.constant 0 : index
    %c0_0 = arith.constant 0 : index
    %c0_1 = arith.constant 0 : index
    %c0_2 = arith.constant 0 : index
    %c0_3 = arith.constant 0 : index
    %0 = vector.load %arg0[%c0, %c0_0, %c0_1, %c0_2, %c0_3] : memref<4x2x9x9x4xf32, #tpu.memory_space<vmem>>, vector<1x2x9x9x4xf32>
    %1 = vector.shape_cast %0 : vector<1x2x9x9x4xf32> to vector<2x9x9x4xf32>
    %cst = arith.constant 2.000000e-01 : f32
    %2 = vector.broadcast %cst : f32 to vector<2x9x9x4xf32>
    %3 = arith.mulf %2, %1 : vector<2x9x9x4xf32>
    %4 = arith.maximumf %1, %3 : vector<2x9x9x4xf32>
    %c1 = arith.constant 1 : index
    %c0_4 = arith.constant 0 : index
    %c0_5 = arith.constant 0 : index
    %c0_6 = arith.constant 0 : index
    %c0_7 = arith.constant 0 : index
    %5 = vector.load %arg0[%c1, %c0_4, %c0_5, %c0_6, %c0_7] : memref<4x2x9x9x4xf32, #tpu.memory_space<vmem>>, vector<1x2x9x9x4xf32>
    %6 = vector.shape_cast %5 : vector<1x2x9x9x4xf32> to vector<2x9x9x4xf32>
    %cst_8 = arith.constant 2.000000e-01 : f32
    %7 = vector.broadcast %cst_8 : f32 to vector<2x9x9x4xf32>
    %8 = arith.mulf %7, %6 : vector<2x9x9x4xf32>
    %9 = arith.maximumf %6, %8 : vector<2x9x9x4xf32>
    %c2 = arith.constant 2 : index
    %c0_9 = arith.constant 0 : index
    %c0_10 = arith.constant 0 : index
    %c0_11 = arith.constant 0 : index
    %c0_12 = arith.constant 0 : index
    %10 = vector.load %arg0[%c2, %c0_9, %c0_10, %c0_11, %c0_12] : memref<4x2x9x9x4xf32, #tpu.memory_space<vmem>>, vector<1x2x9x9x4xf32>
    %11 = vector.shape_cast %10 : vector<1x2x9x9x4xf32> to vector<2x9x9x4xf32>
    %cst_13 = arith.constant 2.000000e-01 : f32
    %12 = vector.broadcast %cst_13 : f32 to vector<2x9x9x4xf32>
    %13 = arith.mulf %12, %11 : vector<2x9x9x4xf32>
    %14 = arith.maximumf %11, %13 : vector<2x9x9x4xf32>
    %c3 = arith.constant 3 : index
    %c0_14 = arith.constant 0 : index
    %c0_15 = arith.constant 0 : index
    %c0_16 = arith.constant 0 : index
    %c0_17 = arith.constant 0 : index
    %15 = vector.load %arg0[%c3, %c0_14, %c0_15, %c0_16, %c0_17] : memref<4x2x9x9x4xf32, #tpu.memory_space<vmem>>, vector<1x2x9x9x4xf32>
    %16 = vector.shape_cast %15 : vector<1x2x9x9x4xf32> to vector<2x9x9x4xf32>
    %cst_18 = arith.constant 2.000000e-01 : f32
    %17 = vector.broadcast %cst_18 : f32 to vector<2x9x9x4xf32>
    %18 = arith.mulf %17, %16 : vector<2x9x9x4xf32>
    %19 = arith.maximumf %16, %18 : vector<2x9x9x4xf32>
    %20 = vector.extract_strided_slice %4 {offsets = [0, 0, 0, 0], sizes = [2, 8, 8, 4], strides = [1, 1, 1, 1]} : vector<2x9x9x4xf32> to vector<2x8x8x4xf32>
    %21 = vector.extract_strided_slice %4 {offsets = [0, 0, 1, 0], sizes = [2, 8, 8, 4], strides = [1, 1, 1, 1]} : vector<2x9x9x4xf32> to vector<2x8x8x4xf32>
    %22 = vector.extract_strided_slice %4 {offsets = [0, 1, 0, 0], sizes = [2, 8, 8, 4], strides = [1, 1, 1, 1]} : vector<2x9x9x4xf32> to vector<2x8x8x4xf32>
    %23 = vector.extract_strided_slice %4 {offsets = [0, 1, 1, 0], sizes = [2, 8, 8, 4], strides = [1, 1, 1, 1]} : vector<2x9x9x4xf32> to vector<2x8x8x4xf32>
    %24 = vector.extract_strided_slice %9 {offsets = [0, 0, 0, 0], sizes = [2, 8, 8, 4], strides = [1, 1, 1, 1]} : vector<2x9x9x4xf32> to vector<2x8x8x4xf32>
    %25 = vector.extract_strided_slice %9 {offsets = [0, 0, 1, 0], sizes = [2, 8, 8, 4], strides = [1, 1, 1, 1]} : vector<2x9x9x4xf32> to vector<2x8x8x4xf32>
    %26 = vector.extract_strided_slice %9 {offsets = [0, 1, 0, 0], sizes = [2, 8, 8, 4], strides = [1, 1, 1, 1]} : vector<2x9x9x4xf32> to vector<2x8x8x4xf32>
    %27 = vector.extract_strided_slice %9 {offsets = [0, 1, 1, 0], sizes = [2, 8, 8, 4], strides = [1, 1, 1, 1]} : vector<2x9x9x4xf32> to vector<2x8x8x4xf32>
    %28 = vector.extract_strided_slice %14 {offsets = [0, 0, 0, 0], sizes = [2, 8, 8, 4], strides = [1, 1, 1, 1]} : vector<2x9x9x4xf32> to vector<2x8x8x4xf32>
    %29 = vector.extract_strided_slice %14 {offsets = [0, 0, 1, 0], sizes = [2, 8, 8, 4], strides = [1, 1, 1, 1]} : vector<2x9x9x4xf32> to vector<2x8x8x4xf32>
    %30 = vector.extract_strided_slice %14 {offsets = [0, 1, 0, 0], sizes = [2, 8, 8, 4], strides = [1, 1, 1, 1]} : vector<2x9x9x4xf32> to vector<2x8x8x4xf32>
    %31 = vector.extract_strided_slice %14 {offsets = [0, 1, 1, 0], sizes = [2, 8, 8, 4], strides = [1, 1, 1, 1]} : vector<2x9x9x4xf32> to vector<2x8x8x4xf32>
    %32 = vector.extract_strided_slice %19 {offsets = [0, 0, 0, 0], sizes = [2, 8, 8, 4], strides = [1, 1, 1, 1]} : vector<2x9x9x4xf32> to vector<2x8x8x4xf32>
    %33 = vector.extract_strided_slice %19 {offsets = [0, 0, 1, 0], sizes = [2, 8, 8, 4], strides = [1, 1, 1, 1]} : vector<2x9x9x4xf32> to vector<2x8x8x4xf32>
    %34 = vector.extract_strided_slice %19 {offsets = [0, 1, 0, 0], sizes = [2, 8, 8, 4], strides = [1, 1, 1, 1]} : vector<2x9x9x4xf32> to vector<2x8x8x4xf32>
    %35 = vector.extract_strided_slice %19 {offsets = [0, 1, 1, 0], sizes = [2, 8, 8, 4], strides = [1, 1, 1, 1]} : vector<2x9x9x4xf32> to vector<2x8x8x4xf32>
    %36 = tpu.concatenate %20, %21, %22, %23, %24, %25, %26, %27, %28, %29, %30, %31, %32, %33, %34, %35 in 3 : vector<2x8x8x4xf32>, vector<2x8x8x4xf32>, vector<2x8x8x4xf32>, vector<2x8x8x4xf32>, vector<2x8x8x4xf32>, vector<2x8x8x4xf32>, vector<2x8x8x4xf32>, vector<2x8x8x4xf32>, vector<2x8x8x4xf32>, vector<2x8x8x4xf32>, vector<2x8x8x4xf32>, vector<2x8x8x4xf32>, vector<2x8x8x4xf32>, vector<2x8x8x4xf32>, vector<2x8x8x4xf32>, vector<2x8x8x4xf32> -> vector<2x8x8x64xf32>
    %37 = vector.shape_cast %36 : vector<2x8x8x64xf32> to vector<128x64xf32>
    %c0_19 = arith.constant 0 : index
    %c0_20 = arith.constant 0 : index
    %38 = vector.load %arg1[%c0_19, %c0_20] : memref<64x8xf32, #tpu.memory_space<vmem>>, vector<64x8xf32>
    %cst_21 = arith.constant dense<0.000000e+00> : vector<128x8xf32>
    %39 = tpu.matmul %37, %38, %cst_21 {dimension_numbers = #tpu.dot_dimension_numbers<[1], [0], [0], [1], [0, 0, 1, 1], [], []>} : vector<128x64xf32>, vector<64x8xf32>, vector<128x8xf32> -> vector<128x8xf32>
    %cst_22 = arith.constant 0.000000e+00 : f32
    %40 = vector.broadcast %cst_22 : f32 to vector<128x8xf32>
    %41 = arith.maximumf %39, %40 : vector<128x8xf32>
    %42 = vector.shape_cast %41 : vector<128x8xf32> to vector<2x8x8x8xf32>
    %cst_23 = arith.constant 0.000000e+00 : f32
    %43 = vector.broadcast %cst_23 : f32 to vector<2x1x8x8xf32>
    %cst_24 = arith.constant 0.000000e+00 : f32
    %44 = vector.broadcast %cst_24 : f32 to vector<2x10x1x8xf32>
    %45 = tpu.concatenate %43, %42, %43 in 1 : vector<2x1x8x8xf32>, vector<2x8x8x8xf32>, vector<2x1x8x8xf32> -> vector<2x10x8x8xf32>
    %46 = tpu.concatenate %44, %45, %44 in 2 : vector<2x10x1x8xf32>, vector<2x10x8x8xf32>, vector<2x10x1x8xf32> -> vector<2x10x10x8xf32>
    %cst_25 = arith.constant 0.000000e+00 : f32
    %47 = vector.broadcast %cst_25 : f32 to vector<1x4xf32>
    %cst_26 = arith.constant 0.000000e+00 : f32
    %48 = vector.broadcast %cst_26 : f32 to vector<1x4xf32>
    %49 = vector.extract_strided_slice %46 {offsets = [0, 0, 0, 0], sizes = [2, 8, 8, 8], strides = [1, 1, 1, 1]} : vector<2x10x10x8xf32> to vector<2x8x8x8xf32>
    %50 = vector.extract_strided_slice %46 {offsets = [0, 0, 1, 0], sizes = [2, 8, 8, 8], strides = [1, 1, 1, 1]} : vector<2x10x10x8xf32> to vector<2x8x8x8xf32>
    %51 = vector.extract_strided_slice %46 {offsets = [0, 1, 0, 0], sizes = [2, 8, 8, 8], strides = [1, 1, 1, 1]} : vector<2x10x10x8xf32> to vector<2x8x8x8xf32>
    %52 = vector.extract_strided_slice %46 {offsets = [0, 1, 1, 0], sizes = [2, 8, 8, 8], strides = [1, 1, 1, 1]} : vector<2x10x10x8xf32> to vector<2x8x8x8xf32>
    %53 = tpu.concatenate %49, %50, %51, %52 in 3 : vector<2x8x8x8xf32>, vector<2x8x8x8xf32>, vector<2x8x8x8xf32>, vector<2x8x8x8xf32> -> vector<2x8x8x32xf32>
    %54 = vector.shape_cast %53 : vector<2x8x8x32xf32> to vector<128x32xf32>
    %c0_27 = arith.constant 0 : index
    %c0_28 = arith.constant 0 : index
    %c0_29 = arith.constant 0 : index
    %55 = vector.load %arg2[%c0_27, %c0_28, %c0_29] : memref<4x32x4xf32, #tpu.memory_space<vmem>>, vector<1x32x4xf32>
    %56 = vector.shape_cast %55 : vector<1x32x4xf32> to vector<32x4xf32>
    %cst_30 = arith.constant dense<0.000000e+00> : vector<128x4xf32>
    %57 = tpu.matmul %54, %56, %cst_30 {dimension_numbers = #tpu.dot_dimension_numbers<[1], [0], [0], [1], [0, 0, 1, 1], [], []>} : vector<128x32xf32>, vector<32x4xf32>, vector<128x4xf32> -> vector<128x4xf32>
    %cst_31 = arith.constant dense<0.000000e+00> : vector<4xf32>
    %58 = vector.multi_reduction <add>, %57, %cst_31 [0] : vector<128x4xf32> to vector<4xf32>
    %59 = vector.shape_cast %58 : vector<4xf32> to vector<1x4xf32>
    %60 = arith.addf %47, %59 : vector<1x4xf32>
    %61 = arith.mulf %57, %57 : vector<128x4xf32>
    %cst_32 = arith.constant dense<0.000000e+00> : vector<4xf32>
    %62 = vector.multi_reduction <add>, %61, %cst_32 [0] : vector<128x4xf32> to vector<4xf32>
    %63 = vector.shape_cast %62 : vector<4xf32> to vector<1x4xf32>
    %64 = arith.addf %48, %63 : vector<1x4xf32>
    %65 = vector.extract_strided_slice %46 {offsets = [0, 0, 1, 0], sizes = [2, 8, 8, 8], strides = [1, 1, 1, 1]} : vector<2x10x10x8xf32> to vector<2x8x8x8xf32>
    %66 = vector.extract_strided_slice %46 {offsets = [0, 0, 2, 0], sizes = [2, 8, 8, 8], strides = [1, 1, 1, 1]} : vector<2x10x10x8xf32> to vector<2x8x8x8xf32>
    %67 = vector.extract_strided_slice %46 {offsets = [0, 1, 1, 0], sizes = [2, 8, 8, 8], strides = [1, 1, 1, 1]} : vector<2x10x10x8xf32> to vector<2x8x8x8xf32>
    %68 = vector.extract_strided_slice %46 {offsets = [0, 1, 2, 0], sizes = [2, 8, 8, 8], strides = [1, 1, 1, 1]} : vector<2x10x10x8xf32> to vector<2x8x8x8xf32>
    %69 = tpu.concatenate %65, %66, %67, %68 in 3 : vector<2x8x8x8xf32>, vector<2x8x8x8xf32>, vector<2x8x8x8xf32>, vector<2x8x8x8xf32> -> vector<2x8x8x32xf32>
    %70 = vector.shape_cast %69 : vector<2x8x8x32xf32> to vector<128x32xf32>
    %c1_33 = arith.constant 1 : index
    %c0_34 = arith.constant 0 : index
    %c0_35 = arith.constant 0 : index
    %71 = vector.load %arg2[%c1_33, %c0_34, %c0_35] : memref<4x32x4xf32, #tpu.memory_space<vmem>>, vector<1x32x4xf32>
    %72 = vector.shape_cast %71 : vector<1x32x4xf32> to vector<32x4xf32>
    %cst_36 = arith.constant dense<0.000000e+00> : vector<128x4xf32>
    %73 = tpu.matmul %70, %72, %cst_36 {dimension_numbers = #tpu.dot_dimension_numbers<[1], [0], [0], [1], [0, 0, 1, 1], [], []>} : vector<128x32xf32>, vector<32x4xf32>, vector<128x4xf32> -> vector<128x4xf32>
    %cst_37 = arith.constant dense<0.000000e+00> : vector<4xf32>
    %74 = vector.multi_reduction <add>, %73, %cst_37 [0] : vector<128x4xf32> to vector<4xf32>
    %75 = vector.shape_cast %74 : vector<4xf32> to vector<1x4xf32>
    %76 = arith.addf %60, %75 : vector<1x4xf32>
    %77 = arith.mulf %73, %73 : vector<128x4xf32>
    %cst_38 = arith.constant dense<0.000000e+00> : vector<4xf32>
    %78 = vector.multi_reduction <add>, %77, %cst_38 [0] : vector<128x4xf32> to vector<4xf32>
    %79 = vector.shape_cast %78 : vector<4xf32> to vector<1x4xf32>
    %80 = arith.addf %64, %79 : vector<1x4xf32>
    %81 = vector.extract_strided_slice %46 {offsets = [0, 1, 0, 0], sizes = [2, 8, 8, 8], strides = [1, 1, 1, 1]} : vector<2x10x10x8xf32> to vector<2x8x8x8xf32>
    %82 = vector.extract_strided_slice %46 {offsets = [0, 1, 1, 0], sizes = [2, 8, 8, 8], strides = [1, 1, 1, 1]} : vector<2x10x10x8xf32> to vector<2x8x8x8xf32>
    %83 = vector.extract_strided_slice %46 {offsets = [0, 2, 0, 0], sizes = [2, 8, 8, 8], strides = [1, 1, 1, 1]} : vector<2x10x10x8xf32> to vector<2x8x8x8xf32>
    %84 = vector.extract_strided_slice %46 {offsets = [0, 2, 1, 0], sizes = [2, 8, 8, 8], strides = [1, 1, 1, 1]} : vector<2x10x10x8xf32> to vector<2x8x8x8xf32>
    %85 = tpu.concatenate %81, %82, %83, %84 in 3 : vector<2x8x8x8xf32>, vector<2x8x8x8xf32>, vector<2x8x8x8xf32>, vector<2x8x8x8xf32> -> vector<2x8x8x32xf32>
    %86 = vector.shape_cast %85 : vector<2x8x8x32xf32> to vector<128x32xf32>
    %c2_39 = arith.constant 2 : index
    %c0_40 = arith.constant 0 : index
    %c0_41 = arith.constant 0 : index
    %87 = vector.load %arg2[%c2_39, %c0_40, %c0_41] : memref<4x32x4xf32, #tpu.memory_space<vmem>>, vector<1x32x4xf32>
    %88 = vector.shape_cast %87 : vector<1x32x4xf32> to vector<32x4xf32>
    %cst_42 = arith.constant dense<0.000000e+00> : vector<128x4xf32>
    %89 = tpu.matmul %86, %88, %cst_42 {dimension_numbers = #tpu.dot_dimension_numbers<[1], [0], [0], [1], [0, 0, 1, 1], [], []>} : vector<128x32xf32>, vector<32x4xf32>, vector<128x4xf32> -> vector<128x4xf32>
    %cst_43 = arith.constant dense<0.000000e+00> : vector<4xf32>
    %90 = vector.multi_reduction <add>, %89, %cst_43 [0] : vector<128x4xf32> to vector<4xf32>
    %91 = vector.shape_cast %90 : vector<4xf32> to vector<1x4xf32>
    %92 = arith.addf %76, %91 : vector<1x4xf32>
    %93 = arith.mulf %89, %89 : vector<128x4xf32>
    %cst_44 = arith.constant dense<0.000000e+00> : vector<4xf32>
    %94 = vector.multi_reduction <add>, %93, %cst_44 [0] : vector<128x4xf32> to vector<4xf32>
    %95 = vector.shape_cast %94 : vector<4xf32> to vector<1x4xf32>
    %96 = arith.addf %80, %95 : vector<1x4xf32>
    %97 = vector.extract_strided_slice %46 {offsets = [0, 1, 1, 0], sizes = [2, 8, 8, 8], strides = [1, 1, 1, 1]} : vector<2x10x10x8xf32> to vector<2x8x8x8xf32>
    %98 = vector.extract_strided_slice %46 {offsets = [0, 1, 2, 0], sizes = [2, 8, 8, 8], strides = [1, 1, 1, 1]} : vector<2x10x10x8xf32> to vector<2x8x8x8xf32>
    %99 = vector.extract_strided_slice %46 {offsets = [0, 2, 1, 0], sizes = [2, 8, 8, 8], strides = [1, 1, 1, 1]} : vector<2x10x10x8xf32> to vector<2x8x8x8xf32>
    %100 = vector.extract_strided_slice %46 {offsets = [0, 2, 2, 0], sizes = [2, 8, 8, 8], strides = [1, 1, 1, 1]} : vector<2x10x10x8xf32> to vector<2x8x8x8xf32>
    %101 = tpu.concatenate %97, %98, %99, %100 in 3 : vector<2x8x8x8xf32>, vector<2x8x8x8xf32>, vector<2x8x8x8xf32>, vector<2x8x8x8xf32> -> vector<2x8x8x32xf32>
    %102 = vector.shape_cast %101 : vector<2x8x8x32xf32> to vector<128x32xf32>
    %c3_45 = arith.constant 3 : index
    %c0_46 = arith.constant 0 : index
    %c0_47 = arith.constant 0 : index
    %103 = vector.load %arg2[%c3_45, %c0_46, %c0_47] : memref<4x32x4xf32, #tpu.memory_space<vmem>>, vector<1x32x4xf32>
    %104 = vector.shape_cast %103 : vector<1x32x4xf32> to vector<32x4xf32>
    %cst_48 = arith.constant dense<0.000000e+00> : vector<128x4xf32>
    %105 = tpu.matmul %102, %104, %cst_48 {dimension_numbers = #tpu.dot_dimension_numbers<[1], [0], [0], [1], [0, 0, 1, 1], [], []>} : vector<128x32xf32>, vector<32x4xf32>, vector<128x4xf32> -> vector<128x4xf32>
    %cst_49 = arith.constant dense<0.000000e+00> : vector<4xf32>
    %106 = vector.multi_reduction <add>, %105, %cst_49 [0] : vector<128x4xf32> to vector<4xf32>
    %107 = vector.shape_cast %106 : vector<4xf32> to vector<1x4xf32>
    %108 = arith.addf %92, %107 : vector<1x4xf32>
    %109 = arith.mulf %105, %105 : vector<128x4xf32>
    %cst_50 = arith.constant dense<0.000000e+00> : vector<4xf32>
    %110 = vector.multi_reduction <add>, %109, %cst_50 [0] : vector<128x4xf32> to vector<4xf32>
    %111 = vector.shape_cast %110 : vector<4xf32> to vector<1x4xf32>
    %112 = arith.addf %96, %111 : vector<1x4xf32>
    %cst_51 = arith.constant 5.120000e+02 : f32
    %113 = vector.broadcast %cst_51 : f32 to vector<1x4xf32>
    %114 = arith.divf %108, %113 : vector<1x4xf32>
    %cst_52 = arith.constant 5.120000e+02 : f32
    %115 = vector.broadcast %cst_52 : f32 to vector<1x4xf32>
    %116 = arith.divf %112, %115 : vector<1x4xf32>
    %117 = arith.mulf %114, %114 : vector<1x4xf32>
    %118 = arith.subf %116, %117 : vector<1x4xf32>
    %cst_53 = arith.constant 0.000000e+00 : f32
    %119 = vector.broadcast %cst_53 : f32 to vector<1x4xf32>
    %120 = arith.maximumf %118, %119 : vector<1x4xf32>
    %c0_54 = arith.constant 0 : index
    %c0_55 = arith.constant 0 : index
    %121 = vector.load %arg3[%c0_54, %c0_55] : memref<1x4xf32, #tpu.memory_space<vmem>>, vector<1x4xf32>
    %cst_56 = arith.constant 9.99999974E-6 : f32
    %122 = vector.broadcast %cst_56 : f32 to vector<1x4xf32>
    %123 = arith.addf %120, %122 : vector<1x4xf32>
    %124 = math.rsqrt %123 : vector<1x4xf32>
    %125 = arith.mulf %121, %124 : vector<1x4xf32>
    %c0_57 = arith.constant 0 : index
    %c0_58 = arith.constant 0 : index
    %126 = vector.load %arg4[%c0_57, %c0_58] : memref<1x4xf32, #tpu.memory_space<vmem>>, vector<1x4xf32>
    %127 = arith.mulf %114, %125 : vector<1x4xf32>
    %128 = arith.subf %126, %127 : vector<1x4xf32>
    %129 = vector.broadcast %125 : vector<1x4xf32> to vector<128x4xf32>
    %130 = arith.mulf %57, %129 : vector<128x4xf32>
    %131 = vector.broadcast %128 : vector<1x4xf32> to vector<128x4xf32>
    %132 = arith.addf %130, %131 : vector<128x4xf32>
    %133 = vector.broadcast %125 : vector<1x4xf32> to vector<128x4xf32>
    %134 = arith.mulf %73, %133 : vector<128x4xf32>
    %135 = vector.broadcast %128 : vector<1x4xf32> to vector<128x4xf32>
    %136 = arith.addf %134, %135 : vector<128x4xf32>
    %137 = vector.broadcast %125 : vector<1x4xf32> to vector<128x4xf32>
    %138 = arith.mulf %89, %137 : vector<128x4xf32>
    %139 = vector.broadcast %128 : vector<1x4xf32> to vector<128x4xf32>
    %140 = arith.addf %138, %139 : vector<128x4xf32>
    %141 = vector.broadcast %125 : vector<1x4xf32> to vector<128x4xf32>
    %142 = arith.mulf %105, %141 : vector<128x4xf32>
    %143 = vector.broadcast %128 : vector<1x4xf32> to vector<128x4xf32>
    %144 = arith.addf %142, %143 : vector<128x4xf32>
    %145 = tpu.concatenate %132, %136, %140, %144 in 1 : vector<128x4xf32>, vector<128x4xf32>, vector<128x4xf32>, vector<128x4xf32> -> vector<128x16xf32>
    %c0_59 = arith.constant 0 : index
    %c0_60 = arith.constant 0 : index
    %146 = vector.load %arg5[%c0_59, %c0_60] : memref<128x16xf32, #tpu.memory_space<vmem>>, vector<128x16xf32>
    tpu.vector_store %arg5[%c0_59, %c0_60], %145 {strides = array<i32>} : memref<128x16xf32, #tpu.memory_space<vmem>>, vector<128x16xf32>,
    return
  }
}

</mosaic_0001>

<llo_original>
// kernel: unet_innermost_forward.1
$region0: #{unet_innermost_forward.1}
  #allocation0 [shape = 'u32[]', space=smem, size = 0x4, offset = 0x4, fixed_abs, tag = 'smem constant byte address 0x4 - core index']
  #allocation1 [shape = 'u32[72,128]{1,0:T(1,128)}', space=vmem, size = 0x9000, scoped, tag = 'internal scratch']
  %s0 = inlined_call_operand.vmem [shape: f32[4,2,9,9,4], index: 0, kind: input, shape index: {}]
  %s1 = inlined_call_operand.vmem [shape: f32[64,8], index: 1, kind: input, shape index: {}]
  %s2 = inlined_call_operand.vmem [shape: f32[4,32,4], index: 2, kind: input, shape index: {}]
  %s3 = inlined_call_operand.vmem [shape: f32[1,4], index: 3, kind: input, shape index: {}]
  %s4 = inlined_call_operand.vmem [shape: f32[1,4], index: 4, kind: input, shape index: {}]
  %s5 = inlined_call_operand.vmem [shape: f32[128,16], index: 5, kind: output, shape index: {}]
  %s6 = sld [smem:[#allocation0]]
  $region30: #{unet_innermost_forward.1} parent=0
    _
  %s8 = ssub.s32 1, %s6
  %s9 = scalar_select 0, %s8, %s6
  // Predicated region
  $region2: #{unet_innermost_forward.1} parent=0 // pred_check
    _
  $region3: #{unet_innermost_forward.1} parent=0 // pred_check_branch
    %11 = sbr.rel (0) target = $region5
  $region4: #{unet_innermost_forward.1} parent=0 // pred_region
    _
  $region5: #{unet_innermost_forward.1} parent=0 // pred_fallthru
    _
  // Predicated region
  $region6: #{unet_innermost_forward.1} parent=0 // pred_check
    _
  $region7: #{unet_innermost_forward.1} parent=0 // pred_check_branch
    %13 = sbr.rel (0) target = $region9
  $region8: #{unet_innermost_forward.1} parent=0 // pred_region
    _
  $region9: #{unet_innermost_forward.1} parent=0 // pred_fallthru
    _
  // Predicated region
  $region10: #{unet_innermost_forward.1} parent=0 // pred_check
    _
  $region11: #{unet_innermost_forward.1} parent=0 // pred_check_branch
    %15 = sbr.rel (0) target = $region13
  $region12: #{unet_innermost_forward.1} parent=0 // pred_region
    _
  $region13: #{unet_innermost_forward.1} parent=0 // pred_fallthru
    _
  // Predicated region
  $region14: #{unet_innermost_forward.1} parent=0 // pred_check
    _
  $region15: #{unet_innermost_forward.1} parent=0 // pred_check_branch
    %17 = sbr.rel (0) target = $region17
  $region16: #{unet_innermost_forward.1} parent=0 // pred_region
    _
  $region17: #{unet_innermost_forward.1} parent=0 // pred_fallthru
    _
  // Predicated region
  $region18: #{unet_innermost_forward.1} parent=0 // pred_check
    _
  $region19: #{unet_innermost_forward.1} parent=0 // pred_check_branch
    %19 = sbr.rel (0) target = $region21
  $region20: #{unet_innermost_forward.1} parent=0 // pred_region
    _
  $region21: #{unet_innermost_forward.1} parent=0 // pred_fallthru
    _
  %v20 = vld [vmem:[%s0] sm:$0xff]
  %v21 = vld [vmem:[%s0 + $0x8] sm:$0x1]
  %v22 = vld [vmem:[%s0 + $0x10] sm:$0xff]
  %v23 = vld [vmem:[%s0 + $0x18] sm:$0x1]
  %v24 = vld [vmem:[%s0 + $0x20] sm:$0xff]
  %v25 = vld [vmem:[%s0 + $0x28] sm:$0x1]
  %v26 = vld [vmem:[%s0 + $0x30] sm:$0xff]
  %v27 = vld [vmem:[%s0 + $0x38] sm:$0x1]
  %v28 = vld [vmem:[%s0 + $0x40] sm:$0xff]
  %v29 = vld [vmem:[%s0 + $0x48] sm:$0x1]
  %v30 = vld [vmem:[%s0 + $0x50] sm:$0xff]
  %v31 = vld [vmem:[%s0 + $0x58] sm:$0x1]
  %v32 = vld [vmem:[%s0 + $0x60] sm:$0xff]
  %v33 = vld [vmem:[%s0 + $0x68] sm:$0x1]
  %v34 = vld [vmem:[%s0 + $0x70] sm:$0xff]
  %v35 = vld [vmem:[%s0 + $0x78] sm:$0x1]
  %v36 = vld [vmem:[%s0 + $0x80] sm:$0xff]
  %v37 = vld [vmem:[%s0 + $0x88] sm:$0x1]
  %v38 = vld [vmem:[%s0 + $0x90] sm:$0xff]
  %v39 = vld [vmem:[%s0 + $0x98] sm:$0x1]
  %v40 = vld [vmem:[%s0 + $0xa0] sm:$0xff]
  %v41 = vld [vmem:[%s0 + $0xa8] sm:$0x1]
  %v42 = vld [vmem:[%s0 + $0xb0] sm:$0xff]
  %v43 = vld [vmem:[%s0 + $0xb8] sm:$0x1]
  %v44 = vld [vmem:[%s0 + $0xc0] sm:$0xff]
  %v45 = vld [vmem:[%s0 + $0xc8] sm:$0x1]
  %v46 = vld [vmem:[%s0 + $0xd0] sm:$0xff]
  %v47 = vld [vmem:[%s0 + $0xd8] sm:$0x1]
  %v48 = vld [vmem:[%s0 + $0xe0] sm:$0xff]
  %v49 = vld [vmem:[%s0 + $0xe8] sm:$0x1]
  %v50 = vld [vmem:[%s0 + $0xf0] sm:$0xff]
  %v51 = vld [vmem:[%s0 + $0xf8] sm:$0x1]
  %v52 = vld [vmem:[%s0 + $0x100] sm:$0xff]
  %v53 = vld [vmem:[%s0 + $0x108] sm:$0x1]
  %v54 = vld [vmem:[%s0 + $0x110] sm:$0xff]
  %v55 = vld [vmem:[%s0 + $0x118] sm:$0x1]
  %v56 = vmul.f32 %v20, 0.2
  %v57 = vmul.f32 %v21, 0.2
  %v58 = vmul.f32 %v22, 0.2
  %v59 = vmul.f32 %v23, 0.2
  %v60 = vmul.f32 %v24, 0.2
  %v61 = vmul.f32 %v25, 0.2
  %v62 = vmul.f32 %v26, 0.2
  %v63 = vmul.f32 %v27, 0.2
  %v64 = vmul.f32 %v28, 0.2
  %v65 = vmul.f32 %v29, 0.2
  %v66 = vmul.f32 %v30, 0.2
  %v67 = vmul.f32 %v31, 0.2
  %v68 = vmul.f32 %v32, 0.2
  %v69 = vmul.f32 %v33, 0.2
  %v70 = vmul.f32 %v34, 0.2
  %v71 = vmul.f32 %v35, 0.2
  %v72 = vmul.f32 %v36, 0.2
  %v73 = vmul.f32 %v37, 0.2
  %v74 = vmul.f32 %v38, 0.2
  %v75 = vmul.f32 %v39, 0.2
  %v76 = vmul.f32 %v40, 0.2
  %v77 = vmul.f32 %v41, 0.2
  %v78 = vmul.f32 %v42, 0.2
  %v79 = vmul.f32 %v43, 0.2
  %v80 = vmul.f32 %v44, 0.2
  %v81 = vmul.f32 %v45, 0.2
  %v82 = vmul.f32 %v46, 0.2
  %v83 = vmul.f32 %v47, 0.2
  %v84 = vmul.f32 %v48, 0.2
  %v85 = vmul.f32 %v49, 0.2
  %v86 = vmul.f32 %v50, 0.2
  %v87 = vmul.f32 %v51, 0.2
  %v88 = vmul.f32 %v52, 0.2
  %v89 = vmul.f32 %v53, 0.2
  %v90 = vmul.f32 %v54, 0.2
  %v91 = vmul.f32 %v55, 0.2
  %v92 = vmax.f32 %v20, %v56
  %v93 = vmax.f32 %v21, %v57
  %v94 = vmax.f32 %v22, %v58
  %v95 = vmax.f32 %v23, %v59
  %v96 = vmax.f32 %v24, %v60
  %v97 = vmax.f32 %v25, %v61
  %v98 = vmax.f32 %v26, %v62
  %v99 = vmax.f32 %v27, %v63
  %v100 = vmax.f32 %v28, %v64
  %v101 = vmax.f32 %v29, %v65
  %v102 = vmax.f32 %v30, %v66
  %v103 = vmax.f32 %v31, %v67
  %v104 = vmax.f32 %v32, %v68
  %v105 = vmax.f32 %v33, %v69
  %v106 = vmax.f32 %v34, %v70
  %v107 = vmax.f32 %v35, %v71
  %v108 = vmax.f32 %v36, %v72
  %v109 = vmax.f32 %v37, %v73
  %v110 = vmax.f32 %v38, %v74
  %v111 = vmax.f32 %v39, %v75
  %v112 = vmax.f32 %v40, %v76
  %v113 = vmax.f32 %v41, %v77
  %v114 = vmax.f32 %v42, %v78
  %v115 = vmax.f32 %v43, %v79
  %v116 = vmax.f32 %v44, %v80
  %v117 = vmax.f32 %v45, %v81
  %v118 = vmax.f32 %v46, %v82
  %v119 = vmax.f32 %v47, %v83
  %v120 = vmax.f32 %v48, %v84
  %v121 = vmax.f32 %v49, %v85
  %v122 = vmax.f32 %v50, %v86
  %v123 = vmax.f32 %v51, %v87
  %v124 = vmax.f32 %v52, %v88
  %v125 = vmax.f32 %v53, %v89
  %v126 = vmax.f32 %v54, %v90
  %v127 = vmax.f32 %v55, %v91
  %s128 = scalar_lea.vmem %s0, 288
  %v129 = vld [vmem:[%s128] sm:$0xff]
  %v130 = vld [vmem:[%s128 + $0x8] sm:$0x1]
  %v131 = vld [vmem:[%s128 + $0x10] sm:$0xff]
  %v132 = vld [vmem:[%s128 + $0x18] sm:$0x1]
  %v133 = vld [vmem:[%s128 + $0x20] sm:$0xff]
  %v134 = vld [vmem:[%s128 + $0x28] sm:$0x1]
  %v135 = vld [vmem:[%s128 + $0x30] sm:$0xff]
  %v136 = vld [vmem:[%s128 + $0x38] sm:$0x1]
  %v137 = vld [vmem:[%s128 + $0x40] sm:$0xff]
  %v138 = vld [vmem:[%s128 + $0x48] sm:$0x1]
  %v139 = vld [vmem:[%s128 + $0x50] sm:$0xff]
  %v140 = vld [vmem:[%s128 + $0x58] sm:$0x1]
  %v141 = vld [vmem:[%s128 + $0x60] sm:$0xff]
  %v142 = vld [vmem:[%s128 + $0x68] sm:$0x1]
  %v143 = vld [vmem:[%s128 + $0x70] sm:$0xff]
  %v144 = vld [vmem:[%s128 + $0x78] sm:$0x1]
  %v145 = vld [vmem:[%s128 + $0x80] sm:$0xff]
  %v146 = vld [vmem:[%s128 + $0x88] sm:$0x1]
  %v147 = vld [vmem:[%s128 + $0x90] sm:$0xff]
  %v148 = vld [vmem:[%s128 + $0x98] sm:$0x1]
  %v149 = vld [vmem:[%s128 + $0xa0] sm:$0xff]
  %v150 = vld [vmem:[%s128 + $0xa8] sm:$0x1]
  %v151 = vld [vmem:[%s128 + $0xb0] sm:$0xff]
  %v152 = vld [vmem:[%s128 + $0xb8] sm:$0x1]
  %v153 = vld [vmem:[%s128 + $0xc0] sm:$0xff]
  %v154 = vld [vmem:[%s128 + $0xc8] sm:$0x1]
  %v155 = vld [vmem:[%s128 + $0xd0] sm:$0xff]
  %v156 = vld [vmem:[%s128 + $0xd8] sm:$0x1]
  %v157 = vld [vmem:[%s128 + $0xe0] sm:$0xff]
  %v158 = vld [vmem:[%s128 + $0xe8] sm:$0x1]
  %v159 = vld [vmem:[%s128 + $0xf0] sm:$0xff]
  %v160 = vld [vmem:[%s128 + $0xf8] sm:$0x1]
  %v161 = vld [vmem:[%s128 + $0x100] sm:$0xff]
  %v162 = vld [vmem:[%s128 + $0x108] sm:$0x1]
  %v163 = vld [vmem:[%s128 + $0x110] sm:$0xff]
  %v164 = vld [vmem:[%s128 + $0x118] sm:$0x1]
  %v165 = vmul.f32 %v129, 0.2
  %v166 = vmul.f32 %v130, 0.2
  %v167 = vmul.f32 %v131, 0.2
  %v168 = vmul.f32 %v132, 0.2
  %v169 = vmul.f32 %v133, 0.2
  %v170 = vmul.f32 %v134, 0.2
  %v171 = vmul.f32 %v135, 0.2
  %v172 = vmul.f32 %v136, 0.2
  %v173 = vmul.f32 %v137, 0.2
  %v174 = vmul.f32 %v138, 0.2
  %v175 = vmul.f32 %v139, 0.2
  %v176 = vmul.f32 %v140, 0.2
  %v177 = vmul.f32 %v141, 0.2
  %v178 = vmul.f32 %v142, 0.2
  %v179 = vmul.f32 %v143, 0.2
  %v180 = vmul.f32 %v144, 0.2
  %v181 = vmul.f32 %v145, 0.2
  %v182 = vmul.f32 %v146, 0.2
  %v183 = vmul.f32 %v147, 0.2
  %v184 = vmul.f32 %v148, 0.2
  %v185 = vmul.f32 %v149, 0.2
  %v186 = vmul.f32 %v150, 0.2
  %v187 = vmul.f32 %v151, 0.2
  %v188 = vmul.f32 %v152, 0.2
  %v189 = vmul.f32 %v153, 0.2
  %v190 = vmul.f32 %v154, 0.2
  %v191 = vmul.f32 %v155, 0.2
  %v192 = vmul.f32 %v156, 0.2
  %v193 = vmul.f32 %v157, 0.2
  %v194 = vmul.f32 %v158, 0.2
  %v195 = vmul.f32 %v159, 0.2
  %v196 = vmul.f32 %v160, 0.2
  %v197 = vmul.f32 %v161, 0.2
  %v198 = vmul.f32 %v162, 0.2
  %v199 = vmul.f32 %v163, 0.2
  %v200 = vmul.f32 %v164, 0.2
  %v201 = vmax.f32 %v129, %v165
  %v202 = vmax.f32 %v130, %v166
  %v203 = vmax.f32 %v131, %v167
  %v204 = vmax.f32 %v132, %v168
  %v205 = vmax.f32 %v133, %v169
  %v206 = vmax.f32 %v134, %v170
  %v207 = vmax.f32 %v135, %v171
  %v208 = vmax.f32 %v136, %v172
  %v209 = vmax.f32 %v137, %v173
  %v210 = vmax.f32 %v138, %v174
  %v211 = vmax.f32 %v139, %v175
  %v212 = vmax.f32 %v140, %v176
  %v213 = vmax.f32 %v141, %v177
  %v214 = vmax.f32 %v142, %v178
  %v215 = vmax.f32 %v143, %v179
  %v216 = vmax.f32 %v144, %v180
  %v217 = vmax.f32 %v145, %v181
  %v218 = vmax.f32 %v146, %v182
  %v219 = vmax.f32 %v147, %v183
  %v220 = vmax.f32 %v148, %v184
  %v221 = vmax.f32 %v149, %v185
  %v222 = vmax.f32 %v150, %v186
  %v223 = vmax.f32 %v151, %v187
  %v224 = vmax.f32 %v152, %v188
  %v225 = vmax.f32 %v153, %v189
  %v226 = vmax.f32 %v154, %v190
  %v227 = vmax.f32 %v155, %v191
  %v228 = vmax.f32 %v156, %v192
  %v229 = vmax.f32 %v157, %v193
  %v230 = vmax.f32 %v158, %v194
  %v231 = vmax.f32 %v159, %v195
  %v232 = vmax.f32 %v160, %v196
  %v233 = vmax.f32 %v161, %v197
  %v234 = vmax.f32 %v162, %v198
  %v235 = vmax.f32 %v163, %v199
  %v236 = vmax.f32 %v164, %v200
  %s237 = scalar_lea.vmem %s0, 576
  %v238 = vld [vmem:[%s237] sm:$0xff]
  %v239 = vld [vmem:[%s237 + $0x8] sm:$0x1]
  %v240 = vld [vmem:[%s237 + $0x10] sm:$0xff]
  %v241 = vld [vmem:[%s237 + $0x18] sm:$0x1]
  %v242 = vld [vmem:[%s237 + $0x20] sm:$0xff]
  %v243 = vld [vmem:[%s237 + $0x28] sm:$0x1]
  %v244 = vld [vmem:[%s237 + $0x30] sm:$0xff]
  %v245 = vld [vmem:[%s237 + $0x38] sm:$0x1]
  %v246 = vld [vmem:[%s237 + $0x40] sm:$0xff]
  %v247 = vld [vmem:[%s237 + $0x48] sm:$0x1]
  %v248 = vld [vmem:[%s237 + $0x50] sm:$0xff]
  %v249 = vld [vmem:[%s237 + $0x58] sm:$0x1]
  %v250 = vld [vmem:[%s237 + $0x60] sm:$0xff]
  %v251 = vld [vmem:[%s237 + $0x68] sm:$0x1]
  %v252 = vld [vmem:[%s237 + $0x70] sm:$0xff]
  %v253 = vld [vmem:[%s237 + $0x78] sm:$0x1]
  %v254 = vld [vmem:[%s237 + $0x80] sm:$0xff]
  %v255 = vld [vmem:[%s237 + $0x88] sm:$0x1]
  %v256 = vld [vmem:[%s237 + $0x90] sm:$0xff]
  %v257 = vld [vmem:[%s237 + $0x98] sm:$0x1]
  %v258 = vld [vmem:[%s237 + $0xa0] sm:$0xff]
  %v259 = vld [vmem:[%s237 + $0xa8] sm:$0x1]
  %v260 = vld [vmem:[%s237 + $0xb0] sm:$0xff]
  %v261 = vld [vmem:[%s237 + $0xb8] sm:$0x1]
  %v262 = vld [vmem:[%s237 + $0xc0] sm:$0xff]
  %v263 = vld [vmem:[%s237 + $0xc8] sm:$0x1]
  %v264 = vld [vmem:[%s237 + $0xd0] sm:$0xff]
  %v265 = vld [vmem:[%s237 + $0xd8] sm:$0x1]
  %v266 = vld [vmem:[%s237 + $0xe0] sm:$0xff]
  %v267 = vld [vmem:[%s237 + $0xe8] sm:$0x1]
  %v268 = vld [vmem:[%s237 + $0xf0] sm:$0xff]
  %v269 = vld [vmem:[%s237 + $0xf8] sm:$0x1]
  %v270 = vld [vmem:[%s237 + $0x100] sm:$0xff]
  %v271 = vld [vmem:[%s237 + $0x108] sm:$0x1]
  %v272 = vld [vmem:[%s237 + $0x110] sm:$0xff]
  %v273 = vld [vmem:[%s237 + $0x118] sm:$0x1]
  %v274 = vmul.f32 %v238, 0.2
  %v275 = vmul.f32 %v239, 0.2
  %v276 = vmul.f32 %v240, 0.2
  %v277 = vmul.f32 %v241, 0.2
  %v278 = vmul.f32 %v242, 0.2
  %v279 = vmul.f32 %v243, 0.2
  %v280 = vmul.f32 %v244, 0.2
  %v281 = vmul.f32 %v245, 0.2
  %v282 = vmul.f32 %v246, 0.2
  %v283 = vmul.f32 %v247, 0.2
  %v284 = vmul.f32 %v248, 0.2
  %v285 = vmul.f32 %v249, 0.2
  %v286 = vmul.f32 %v250, 0.2
  %v287 = vmul.f32 %v251, 0.2
  %v288 = vmul.f32 %v252, 0.2
  %v289 = vmul.f32 %v253, 0.2
  %v290 = vmul.f32 %v254, 0.2
  %v291 = vmul.f32 %v255, 0.2
  %v292 = vmul.f32 %v256, 0.2
  %v293 = vmul.f32 %v257, 0.2
  %v294 = vmul.f32 %v258, 0.2
  %v295 = vmul.f32 %v259, 0.2
  %v296 = vmul.f32 %v260, 0.2
  %v297 = vmul.f32 %v261, 0.2
  %v298 = vmul.f32 %v262, 0.2
  %v299 = vmul.f32 %v263, 0.2
  %v300 = vmul.f32 %v264, 0.2
  %v301 = vmul.f32 %v265, 0.2
  %v302 = vmul.f32 %v266, 0.2
  %v303 = vmul.f32 %v267, 0.2
  %v304 = vmul.f32 %v268, 0.2
  %v305 = vmul.f32 %v269, 0.2
  %v306 = vmul.f32 %v270, 0.2
  %v307 = vmul.f32 %v271, 0.2
  %v308 = vmul.f32 %v272, 0.2
  %v309 = vmul.f32 %v273, 0.2
  %v310 = vmax.f32 %v238, %v274
  %v311 = vmax.f32 %v239, %v275
  %v312 = vmax.f32 %v240, %v276
  %v313 = vmax.f32 %v241, %v277
  %v314 = vmax.f32 %v242, %v278
  %v315 = vmax.f32 %v243, %v279
  %v316 = vmax.f32 %v244, %v280
  %v317 = vmax.f32 %v245, %v281
  %v318 = vmax.f32 %v246, %v282
  %v319 = vmax.f32 %v247, %v283
  %v320 = vmax.f32 %v248, %v284
  %v321 = vmax.f32 %v249, %v285
  %v322 = vmax.f32 %v250, %v286
  %v323 = vmax.f32 %v251, %v287
  %v324 = vmax.f32 %v252, %v288
  %v325 = vmax.f32 %v253, %v289
  %v326 = vmax.f32 %v254, %v290
  %v327 = vmax.f32 %v255, %v291
  %v328 = vmax.f32 %v256, %v292
  %v329 = vmax.f32 %v257, %v293
  %v330 = vmax.f32 %v258, %v294
  %v331 = vmax.f32 %v259, %v295
  %v332 = vmax.f32 %v260, %v296
  %v333 = vmax.f32 %v261, %v297
  %v334 = vmax.f32 %v262, %v298
  %v335 = vmax.f32 %v263, %v299
  %v336 = vmax.f32 %v264, %v300
  %v337 = vmax.f32 %v265, %v301
  %v338 = vmax.f32 %v266, %v302
  %v339 = vmax.f32 %v267, %v303
  %v340 = vmax.f32 %v268, %v304
  %v341 = vmax.f32 %v269, %v305
  %v342 = vmax.f32 %v270, %v306
  %v343 = vmax.f32 %v271, %v307
  %v344 = vmax.f32 %v272, %v308
  %v345 = vmax.f32 %v273, %v309
  %s346 = scalar_lea.vmem %s0, 864
  %v347 = vld [vmem:[%s346] sm:$0xff]
  %v348 = vld [vmem:[%s346 + $0x8] sm:$0x1]
  %v349 = vld [vmem:[%s346 + $0x10] sm:$0xff]
  %v350 = vld [vmem:[%s346 + $0x18] sm:$0x1]
  %v351 = vld [vmem:[%s346 + $0x20] sm:$0xff]
  %v352 = vld [vmem:[%s346 + $0x28] sm:$0x1]
  %v353 = vld [vmem:[%s346 + $0x30] sm:$0xff]
  %v354 = vld [vmem:[%s346 + $0x38] sm:$0x1]
  %v355 = vld [vmem:[%s346 + $0x40] sm:$0xff]
  %v356 = vld [vmem:[%s346 + $0x48] sm:$0x1]
  %v357 = vld [vmem:[%s346 + $0x50] sm:$0xff]
  %v358 = vld [vmem:[%s346 + $0x58] sm:$0x1]
  %v359 = vld [vmem:[%s346 + $0x60] sm:$0xff]
  %v360 = vld [vmem:[%s346 + $0x68] sm:$0x1]
  %v361 = vld [vmem:[%s346 + $0x70] sm:$0xff]
  %v362 = vld [vmem:[%s346 + $0x78] sm:$0x1]
  %v363 = vld [vmem:[%s346 + $0x80] sm:$0xff]
  %v364 = vld [vmem:[%s346 + $0x88] sm:$0x1]
  %v365 = vld [vmem:[%s346 + $0x90] sm:$0xff]
  %v366 = vld [vmem:[%s346 + $0x98] sm:$0x1]
  %v367 = vld [vmem:[%s346 + $0xa0] sm:$0xff]
  %v368 = vld [vmem:[%s346 + $0xa8] sm:$0x1]
  %v369 = vld [vmem:[%s346 + $0xb0] sm:$0xff]
  %v370 = vld [vmem:[%s346 + $0xb8] sm:$0x1]
  %v371 = vld [vmem:[%s346 + $0xc0] sm:$0xff]
  %v372 = vld [vmem:[%s346 + $0xc8] sm:$0x1]
  %v373 = vld [vmem:[%s346 + $0xd0] sm:$0xff]
  %v374 = vld [vmem:[%s346 + $0xd8] sm:$0x1]
  %v375 = vld [vmem:[%s346 + $0xe0] sm:$0xff]
  %v376 = vld [vmem:[%s346 + $0xe8] sm:$0x1]
  %v377 = vld [vmem:[%s346 + $0xf0] sm:$0xff]
  %v378 = vld [vmem:[%s346 + $0xf8] sm:$0x1]
  %v379 = vld [vmem:[%s346 + $0x100] sm:$0xff]
  %v380 = vld [vmem:[%s346 + $0x108] sm:$0x1]
  %v381 = vld [vmem:[%s346 + $0x110] sm:$0xff]
  %v382 = vld [vmem:[%s346 + $0x118] sm:$0x1]
  %v383 = vmul.f32 %v347, 0.2
  %v384 = vmul.f32 %v348, 0.2
  %v385 = vmul.f32 %v349, 0.2
  %v386 = vmul.f32 %v350, 0.2
  %v387 = vmul.f32 %v351, 0.2
  %v388 = vmul.f32 %v352, 0.2
  %v389 = vmul.f32 %v353, 0.2
  %v390 = vmul.f32 %v354, 0.2
  %v391 = vmul.f32 %v355, 0.2
  %v392 = vmul.f32 %v356, 0.2
  %v393 = vmul.f32 %v357, 0.2
  %v394 = vmul.f32 %v358, 0.2
  %v395 = vmul.f32 %v359, 0.2
  %v396 = vmul.f32 %v360, 0.2
  %v397 = vmul.f32 %v361, 0.2
  %v398 = vmul.f32 %v362, 0.2
  %v399 = vmul.f32 %v363, 0.2
  %v400 = vmul.f32 %v364, 0.2
  %v401 = vmul.f32 %v365, 0.2
  %v402 = vmul.f32 %v366, 0.2
  %v403 = vmul.f32 %v367, 0.2
  %v404 = vmul.f32 %v368, 0.2
  %v405 = vmul.f32 %v369, 0.2
  %v406 = vmul.f32 %v370, 0.2
  %v407 = vmul.f32 %v371, 0.2
  %v408 = vmul.f32 %v372, 0.2
  %v409 = vmul.f32 %v373, 0.2
  %v410 = vmul.f32 %v374, 0.2
  %v411 = vmul.f32 %v375, 0.2
  %v412 = vmul.f32 %v376, 0.2
  %v413 = vmul.f32 %v377, 0.2
  %v414 = vmul.f32 %v378, 0.2
  %v415 = vmul.f32 %v379, 0.2
  %v416 = vmul.f32 %v380, 0.2
  %v417 = vmul.f32 %v381, 0.2
  %v418 = vmul.f32 %v382, 0.2
  %v419 = vmax.f32 %v347, %v383
  %v420 = vmax.f32 %v348, %v384
  %v421 = vmax.f32 %v349, %v385
  %v422 = vmax.f32 %v350, %v386
  %v423 = vmax.f32 %v351, %v387
  %v424 = vmax.f32 %v352, %v388
  %v425 = vmax.f32 %v353, %v389
  %v426 = vmax.f32 %v354, %v390
  %v427 = vmax.f32 %v355, %v391
  %v428 = vmax.f32 %v356, %v392
  %v429 = vmax.f32 %v357, %v393
  %v430 = vmax.f32 %v358, %v394
  %v431 = vmax.f32 %v359, %v395
  %v432 = vmax.f32 %v360, %v396
  %v433 = vmax.f32 %v361, %v397
  %v434 = vmax.f32 %v362, %v398
  %v435 = vmax.f32 %v363, %v399
  %v436 = vmax.f32 %v364, %v400
  %v437 = vmax.f32 %v365, %v401
  %v438 = vmax.f32 %v366, %v402
  %v439 = vmax.f32 %v367, %v403
  %v440 = vmax.f32 %v368, %v404
  %v441 = vmax.f32 %v369, %v405
  %v442 = vmax.f32 %v370, %v406
  %v443 = vmax.f32 %v371, %v407
  %v444 = vmax.f32 %v372, %v408
  %v445 = vmax.f32 %v373, %v409
  %v446 = vmax.f32 %v374, %v410
  %v447 = vmax.f32 %v375, %v411
  %v448 = vmax.f32 %v376, %v412
  %v449 = vmax.f32 %v377, %v413
  %v450 = vmax.f32 %v378, %v414
  %v451 = vmax.f32 %v379, %v415
  %v452 = vmax.f32 %v380, %v416
  %v453 = vmax.f32 %v381, %v417
  %v454 = vmax.f32 %v382, %v418
  %vm487 = vcmask 1046528
  %v488 = vrot.slane %v92, 1
  %v489 = vrot.slane %v93, 1
  %v490 = vsel %vm487, %v488, %v489
  %v491 = vrot.slane %v94, 1
  %v492 = vrot.slane %v95, 1
  %v493 = vsel %vm487, %v491, %v492
  %v494 = vrot.slane %v96, 1
  %v495 = vrot.slane %v97, 1
  %v496 = vsel %vm487, %v494, %v495
  %v497 = vrot.slane %v98, 1
  %v498 = vrot.slane %v99, 1
  %v499 = vsel %vm487, %v497, %v498
  %v500 = vrot.slane %v100, 1
  %v501 = vrot.slane %v101, 1
  %v502 = vsel %vm487, %v500, %v501
  %v503 = vrot.slane %v102, 1
  %v504 = vrot.slane %v103, 1
  %v505 = vsel %vm487, %v503, %v504
  %v506 = vrot.slane %v104, 1
  %v507 = vrot.slane %v105, 1
  %v508 = vsel %vm487, %v506, %v507
  %v509 = vrot.slane %v106, 1
  %v510 = vrot.slane %v107, 1
  %v511 = vsel %vm487, %v509, %v510
  %v512 = vrot.slane %v110, 1
  %v513 = vrot.slane %v111, 1
  %v514 = vsel %vm487, %v512, %v513
  %v515 = vrot.slane %v112, 1
  %v516 = vrot.slane %v113, 1
  %v517 = vsel %vm487, %v515, %v516
  %v518 = vrot.slane %v114, 1
  %v519 = vrot.slane %v115, 1
  %v520 = vsel %vm487, %v518, %v519
  %v521 = vrot.slane %v116, 1
  %v522 = vrot.slane %v117, 1
  %v523 = vsel %vm487, %v521, %v522
  %v524 = vrot.slane %v118, 1
  %v525 = vrot.slane %v119, 1
  %v526 = vsel %vm487, %v524, %v525
  %v527 = vrot.slane %v120, 1
  %v528 = vrot.slane %v121, 1
  %v529 = vsel %vm487, %v527, %v528
  %v530 = vrot.slane %v122, 1
  %v531 = vrot.slane %v123, 1
  %v532 = vsel %vm487, %v530, %v531
  %v533 = vrot.slane %v124, 1
  %v534 = vrot.slane %v125, 1
  %v535 = vsel %vm487, %v533, %v534
  %536 = vrot.lane.b32.xlu0 %v490, 4
  %v537 = vpop.permute.xlu0 %536
  %538 = vrot.lane.b32.xlu0 %v493, 4
  %v539 = vpop.permute.xlu0 %538
  %540 = vrot.lane.b32.xlu0 %v496, 4
  %v541 = vpop.permute.xlu0 %540
  %542 = vrot.lane.b32.xlu0 %v499, 4
  %v543 = vpop.permute.xlu0 %542
  %544 = vrot.lane.b32.xlu0 %v502, 4
  %v545 = vpop.permute.xlu0 %544
  %546 = vrot.lane.b32.xlu0 %v505, 4
  %v547 = vpop.permute.xlu0 %546
  %548 = vrot.lane.b32.xlu0 %v508, 4
  %v549 = vpop.permute.xlu0 %548
  %550 = vrot.lane.b32.xlu0 %v511, 4
  %v551 = vpop.permute.xlu0 %550
  %552 = vrot.lane.b32.xlu0 %v514, 4
  %v553 = vpop.permute.xlu0 %552
  %554 = vrot.lane.b32.xlu0 %v517, 4
  %v555 = vpop.permute.xlu0 %554
  %556 = vrot.lane.b32.xlu0 %v520, 4
  %v557 = vpop.permute.xlu0 %556
  %558 = vrot.lane.b32.xlu0 %v523, 4
  %v559 = vpop.permute.xlu0 %558
  %560 = vrot.lane.b32.xlu0 %v526, 4
  %v561 = vpop.permute.xlu0 %560
  %562 = vrot.lane.b32.xlu0 %v529, 4
  %v563 = vpop.permute.xlu0 %562
  %564 = vrot.lane.b32.xlu0 %v532, 4
  %v565 = vpop.permute.xlu0 %564
  %566 = vrot.lane.b32.xlu0 %v535, 4
  %v567 = vpop.permute.xlu0 %566
  %586 = vrot.lane.b32.xlu0 %v94, 8
  %v587 = vpop.permute.xlu0 %586
  %588 = vrot.lane.b32.xlu0 %v96, 8
  %v589 = vpop.permute.xlu0 %588
  %590 = vrot.lane.b32.xlu0 %v98, 8
  %v591 = vpop.permute.xlu0 %590
  %592 = vrot.lane.b32.xlu0 %v100, 8
  %v593 = vpop.permute.xlu0 %592
  %594 = vrot.lane.b32.xlu0 %v102, 8
  %v595 = vpop.permute.xlu0 %594
  %596 = vrot.lane.b32.xlu0 %v104, 8
  %v597 = vpop.permute.xlu0 %596
  %598 = vrot.lane.b32.xlu0 %v106, 8
  %v599 = vpop.permute.xlu0 %598
  %600 = vrot.lane.b32.xlu0 %v108, 8
  %v601 = vpop.permute.xlu0 %600
  %602 = vrot.lane.b32.xlu0 %v112, 8
  %v603 = vpop.permute.xlu0 %602
  %604 = vrot.lane.b32.xlu0 %v114, 8
  %v605 = vpop.permute.xlu0 %604
  %606 = vrot.lane.b32.xlu0 %v116, 8
  %v607 = vpop.permute.xlu0 %606
  %608 = vrot.lane.b32.xlu0 %v118, 8
  %v609 = vpop.permute.xlu0 %608
  %610 = vrot.lane.b32.xlu0 %v120, 8
  %v611 = vpop.permute.xlu0 %610
  %612 = vrot.lane.b32.xlu0 %v122, 8
  %v613 = vpop.permute.xlu0 %612
  %614 = vrot.lane.b32.xlu0 %v124, 8
  %v615 = vpop.permute.xlu0 %614
  %616 = vrot.lane.b32.xlu0 %v126, 8
  %v617 = vpop.permute.xlu0 %616
  %v636 = vrot.slane %v108, 1
  %v637 = vrot.slane %v109, 1
  %v638 = vsel %vm487, %v636, %v637
  %v639 = vrot.slane %v126, 1
  %v640 = vrot.slane %v127, 1
  %v641 = vsel %vm487, %v639, %v640
  %642 = vrot.lane.b32.xlu0 %v493, 12
  %v643 = vpop.permute.xlu0 %642
  %644 = vrot.lane.b32.xlu0 %v496, 12
  %v645 = vpop.permute.xlu0 %644
  %646 = vrot.lane.b32.xlu0 %v499, 12
  %v647 = vpop.permute.xlu0 %646
  %648 = vrot.lane.b32.xlu0 %v502, 12
  %v649 = vpop.permute.xlu0 %648
  %650 = vrot.lane.b32.xlu0 %v505, 12
  %v651 = vpop.permute.xlu0 %650
  %652 = vrot.lane.b32.xlu0 %v508, 12
  %v653 = vpop.permute.xlu0 %652
  %654 = vrot.lane.b32.xlu0 %v511, 12
  %v655 = vpop.permute.xlu0 %654
  %656 = vrot.lane.b32.xlu0 %v638, 12
  %v657 = vpop.permute.xlu0 %656
  %658 = vrot.lane.b32.xlu0 %v517, 12
  %v659 = vpop.permute.xlu0 %658
  %660 = vrot.lane.b32.xlu0 %v520, 12
  %v661 = vpop.permute.xlu0 %660
  %662 = vrot.lane.b32.xlu0 %v523, 12
  %v663 = vpop.permute.xlu0 %662
  %664 = vrot.lane.b32.xlu0 %v526, 12
  %v665 = vpop.permute.xlu0 %664
  %666 = vrot.lane.b32.xlu0 %v529, 12
  %v667 = vpop.permute.xlu0 %666
  %668 = vrot.lane.b32.xlu0 %v532, 12
  %v669 = vpop.permute.xlu0 %668
  %670 = vrot.lane.b32.xlu0 %v535, 12
  %v671 = vpop.permute.xlu0 %670
  %672 = vrot.lane.b32.xlu0 %v641, 12
  %v673 = vpop.permute.xlu0 %672
  %706 = vrot.lane.b32.xlu0 %v201, 16
  %v707 = vpop.permute.xlu0 %706
  %708 = vrot.lane.b32.xlu0 %v203, 16
  %v709 = vpop.permute.xlu0 %708
  %710 = vrot.lane.b32.xlu0 %v205, 16
  %v711 = vpop.permute.xlu0 %710
  %712 = vrot.lane.b32.xlu0 %v207, 16
  %v713 = vpop.permute.xlu0 %712
  %714 = vrot.lane.b32.xlu0 %v209, 16
  %v715 = vpop.permute.xlu0 %714
  %716 = vrot.lane.b32.xlu0 %v211, 16
  %v717 = vpop.permute.xlu0 %716
  %718 = vrot.lane.b32.xlu0 %v213, 16
  %v719 = vpop.permute.xlu0 %718
  %720 = vrot.lane.b32.xlu0 %v215, 16
  %v721 = vpop.permute.xlu0 %720
  %722 = vrot.lane.b32.xlu0 %v219, 16
  %v723 = vpop.permute.xlu0 %722
  %724 = vrot.lane.b32.xlu0 %v221, 16
  %v725 = vpop.permute.xlu0 %724
  %726 = vrot.lane.b32.xlu0 %v223, 16
  %v727 = vpop.permute.xlu0 %726
  %728 = vrot.lane.b32.xlu0 %v225, 16
  %v729 = vpop.permute.xlu0 %728
  %730 = vrot.lane.b32.xlu0 %v227, 16
  %v731 = vpop.permute.xlu0 %730
  %732 = vrot.lane.b32.xlu0 %v229, 16
  %v733 = vpop.permute.xlu0 %732
  %734 = vrot.lane.b32.xlu0 %v231, 16
  %v735 = vpop.permute.xlu0 %734
  %736 = vrot.lane.b32.xlu0 %v233, 16
  %v737 = vpop.permute.xlu0 %736
  %v770 = vrot.slane %v201, 1
  %v771 = vrot.slane %v202, 1
  %v772 = vsel %vm487, %v770, %v771
  %v773 = vrot.slane %v203, 1
  %v774 = vrot.slane %v204, 1
  %v775 = vsel %vm487, %v773, %v774
  %v776 = vrot.slane %v205, 1
  %v777 = vrot.slane %v206, 1
  %v778 = vsel %vm487, %v776, %v777
  %v779 = vrot.slane %v207, 1
  %v780 = vrot.slane %v208, 1
  %v781 = vsel %vm487, %v779, %v780
  %v782 = vrot.slane %v209, 1
  %v783 = vrot.slane %v210, 1
  %v784 = vsel %vm487, %v782, %v783
  %v785 = vrot.slane %v211, 1
  %v786 = vrot.slane %v212, 1
  %v787 = vsel %vm487, %v785, %v786
  %v788 = vrot.slane %v213, 1
  %v789 = vrot.slane %v214, 1
  %v790 = vsel %vm487, %v788, %v789
  %v791 = vrot.slane %v215, 1
  %v792 = vrot.slane %v216, 1
  %v793 = vsel %vm487, %v791, %v792
  %v794 = vrot.slane %v219, 1
  %v795 = vrot.slane %v220, 1
  %v796 = vsel %vm487, %v794, %v795
  %v797 = vrot.slane %v221, 1
  %v798 = vrot.slane %v222, 1
  %v799 = vsel %vm487, %v797, %v798
  %v800 = vrot.slane %v223, 1
  %v801 = vrot.slane %v224, 1
  %v802 = vsel %vm487, %v800, %v801
  %v803 = vrot.slane %v225, 1
  %v804 = vrot.slane %v226, 1
  %v805 = vsel %vm487, %v803, %v804
  %v806 = vrot.slane %v227, 1
  %v807 = vrot.slane %v228, 1
  %v808 = vsel %vm487, %v806, %v807
  %v809 = vrot.slane %v229, 1
  %v810 = vrot.slane %v230, 1
  %v811 = vsel %vm487, %v809, %v810
  %v812 = vrot.slane %v231, 1
  %v813 = vrot.slane %v232, 1
  %v814 = vsel %vm487, %v812, %v813
  %v815 = vrot.slane %v233, 1
  %v816 = vrot.slane %v234, 1
  %v817 = vsel %vm487, %v815, %v816
  %818 = vrot.lane.b32.xlu0 %v772, 20
  %v819 = vpop.permute.xlu0 %818
  %820 = vrot.lane.b32.xlu0 %v775, 20
  %v821 = vpop.permute.xlu0 %820
  %822 = vrot.lane.b32.xlu0 %v778, 20
  %v823 = vpop.permute.xlu0 %822
  %824 = vrot.lane.b32.xlu0 %v781, 20
  %v825 = vpop.permute.xlu0 %824
  %826 = vrot.lane.b32.xlu0 %v784, 20
  %v827 = vpop.permute.xlu0 %826
  %828 = vrot.lane.b32.xlu0 %v787, 20
  %v829 = vpop.permute.xlu0 %828
  %830 = vrot.lane.b32.xlu0 %v790, 20
  %v831 = vpop.permute.xlu0 %830
  %832 = vrot.lane.b32.xlu0 %v793, 20
  %v833 = vpop.permute.xlu0 %832
  %834 = vrot.lane.b32.xlu0 %v796, 20
  %v835 = vpop.permute.xlu0 %834
  %836 = vrot.lane.b32.xlu0 %v799, 20
  %v837 = vpop.permute.xlu0 %836
  %838 = vrot.lane.b32.xlu0 %v802, 20
  %v839 = vpop.permute.xlu0 %838
  %840 = vrot.lane.b32.xlu0 %v805, 20
  %v841 = vpop.permute.xlu0 %840
  %842 = vrot.lane.b32.xlu0 %v808, 20
  %v843 = vpop.permute.xlu0 %842
  %844 = vrot.lane.b32.xlu0 %v811, 20
  %v845 = vpop.permute.xlu0 %844
  %846 = vrot.lane.b32.xlu0 %v814, 20
  %v847 = vpop.permute.xlu0 %846
  %848 = vrot.lane.b32.xlu0 %v817, 20
  %v849 = vpop.permute.xlu0 %848
  %868 = vrot.lane.b32.xlu0 %v203, 24
  %v869 = vpop.permute.xlu0 %868
  %870 = vrot.lane.b32.xlu0 %v205, 24
  %v871 = vpop.permute.xlu0 %870
  %872 = vrot.lane.b32.xlu0 %v207, 24
  %v873 = vpop.permute.xlu0 %872
  %874 = vrot.lane.b32.xlu0 %v209, 24
  %v875 = vpop.permute.xlu0 %874
  %876 = vrot.lane.b32.xlu0 %v211, 24
  %v877 = vpop.permute.xlu0 %876
  %878 = vrot.lane.b32.xlu0 %v213, 24
  %v879 = vpop.permute.xlu0 %878
  %880 = vrot.lane.b32.xlu0 %v215, 24
  %v881 = vpop.permute.xlu0 %880
  %882 = vrot.lane.b32.xlu0 %v217, 24
  %v883 = vpop.permute.xlu0 %882
  %884 = vrot.lane.b32.xlu0 %v221, 24
  %v885 = vpop.permute.xlu0 %884
  %886 = vrot.lane.b32.xlu0 %v223, 24
  %v887 = vpop.permute.xlu0 %886
  %888 = vrot.lane.b32.xlu0 %v225, 24
  %v889 = vpop.permute.xlu0 %888
  %890 = vrot.lane.b32.xlu0 %v227, 24
  %v891 = vpop.permute.xlu0 %890
  %892 = vrot.lane.b32.xlu0 %v229, 24
  %v893 = vpop.permute.xlu0 %892
  %894 = vrot.lane.b32.xlu0 %v231, 24
  %v895 = vpop.permute.xlu0 %894
  %896 = vrot.lane.b32.xlu0 %v233, 24
  %v897 = vpop.permute.xlu0 %896
  %898 = vrot.lane.b32.xlu0 %v235, 24
  %v899 = vpop.permute.xlu0 %898
  %v918 = vrot.slane %v217, 1
  %v919 = vrot.slane %v218, 1
  %v920 = vsel %vm487, %v918, %v919
  %v921 = vrot.slane %v235, 1
  %v922 = vrot.slane %v236, 1
  %v923 = vsel %vm487, %v921, %v922
  %924 = vrot.lane.b32.xlu0 %v775, 28
  %v925 = vpop.permute.xlu0 %924
  %926 = vrot.lane.b32.xlu0 %v778, 28
  %v927 = vpop.permute.xlu0 %926
  %928 = vrot.lane.b32.xlu0 %v781, 28
  %v929 = vpop.permute.xlu0 %928
  %930 = vrot.lane.b32.xlu0 %v784, 28
  %v931 = vpop.permute.xlu0 %930
  %932 = vrot.lane.b32.xlu0 %v787, 28
  %v933 = vpop.permute.xlu0 %932
  %934 = vrot.lane.b32.xlu0 %v790, 28
  %v935 = vpop.permute.xlu0 %934
  %936 = vrot.lane.b32.xlu0 %v793, 28
  %v937 = vpop.permute.xlu0 %936
  %938 = vrot.lane.b32.xlu0 %v920, 28
  %v939 = vpop.permute.xlu0 %938
  %940 = vrot.lane.b32.xlu0 %v799, 28
  %v941 = vpop.permute.xlu0 %940
  %942 = vrot.lane.b32.xlu0 %v802, 28
  %v943 = vpop.permute.xlu0 %942
  %944 = vrot.lane.b32.xlu0 %v805, 28
  %v945 = vpop.permute.xlu0 %944
  %946 = vrot.lane.b32.xlu0 %v808, 28
  %v947 = vpop.permute.xlu0 %946
  %948 = vrot.lane.b32.xlu0 %v811, 28
  %v949 = vpop.permute.xlu0 %948
  %950 = vrot.lane.b32.xlu0 %v814, 28
  %v951 = vpop.permute.xlu0 %950
  %952 = vrot.lane.b32.xlu0 %v817, 28
  %v953 = vpop.permute.xlu0 %952
  %954 = vrot.lane.b32.xlu0 %v923, 28
  %v955 = vpop.permute.xlu0 %954
  %988 = vrot.lane.b32.xlu0 %v310, 32
  %v989 = vpop.permute.xlu0 %988
  %990 = vrot.lane.b32.xlu0 %v312, 32
  %v991 = vpop.permute.xlu0 %990
  %992 = vrot.lane.b32.xlu0 %v314, 32
  %v993 = vpop.permute.xlu0 %992
  %994 = vrot.lane.b32.xlu0 %v316, 32
  %v995 = vpop.permute.xlu0 %994
  %996 = vrot.lane.b32.xlu0 %v318, 32
  %v997 = vpop.permute.xlu0 %996
  %998 = vrot.lane.b32.xlu0 %v320, 32
  %v999 = vpop.permute.xlu0 %998
  %1000 = vrot.lane.b32.xlu0 %v322, 32
  %v1001 = vpop.permute.xlu0 %1000
  %1002 = vrot.lane.b32.xlu0 %v324, 32
  %v1003 = vpop.permute.xlu0 %1002
  %1004 = vrot.lane.b32.xlu0 %v328, 32
  %v1005 = vpop.permute.xlu0 %1004
  %1006 = vrot.lane.b32.xlu0 %v330, 32
  %v1007 = vpop.permute.xlu0 %1006
  %1008 = vrot.lane.b32.xlu0 %v332, 32
  %v1009 = vpop.permute.xlu0 %1008
  %1010 = vrot.lane.b32.xlu0 %v334, 32
  %v1011 = vpop.permute.xlu0 %1010
  %1012 = vrot.lane.b32.xlu0 %v336, 32
  %v1013 = vpop.permute.xlu0 %1012
  %1014 = vrot.lane.b32.xlu0 %v338, 32
  %v1015 = vpop.permute.xlu0 %1014
  %1016 = vrot.lane.b32.xlu0 %v340, 32
  %v1017 = vpop.permute.xlu0 %1016
  %1018 = vrot.lane.b32.xlu0 %v342, 32
  %v1019 = vpop.permute.xlu0 %1018
  %v1052 = vrot.slane %v310, 1
  %v1053 = vrot.slane %v311, 1
  %v1054 = vsel %vm487, %v1052, %v1053
  %v1055 = vrot.slane %v312, 1
  %v1056 = vrot.slane %v313, 1
  %v1057 = vsel %vm487, %v1055, %v1056
  %v1058 = vrot.slane %v314, 1
  %v1059 = vrot.slane %v315, 1
  %v1060 = vsel %vm487, %v1058, %v1059
  %v1061 = vrot.slane %v316, 1
  %v1062 = vrot.slane %v317, 1
  %v1063 = vsel %vm487, %v1061, %v1062
  %v1064 = vrot.slane %v318, 1
  %v1065 = vrot.slane %v319, 1
  %v1066 = vsel %vm487, %v1064, %v1065
  %v1067 = vrot.slane %v320, 1
  %v1068 = vrot.slane %v321, 1
  %v1069 = vsel %vm487, %v1067, %v1068
  %v1070 = vrot.slane %v322, 1
  %v1071 = vrot.slane %v323, 1
  %v1072 = vsel %vm487, %v1070, %v1071
  %v1073 = vrot.slane %v324, 1
  %v1074 = vrot.slane %v325, 1
  %v1075 = vsel %vm487, %v1073, %v1074
  %v1076 = vrot.slane %v328, 1
  %v1077 = vrot.slane %v329, 1
  %v1078 = vsel %vm487, %v1076, %v1077
  %v1079 = vrot.slane %v330, 1
  %v1080 = vrot.slane %v331, 1
  %v1081 = vsel %vm487, %v1079, %v1080
  %v1082 = vrot.slane %v332, 1
  %v1083 = vrot.slane %v333, 1
  %v1084 = vsel %vm487, %v1082, %v1083
  %v1085 = vrot.slane %v334, 1
  %v1086 = vrot.slane %v335, 1
  %v1087 = vsel %vm487, %v1085, %v1086
  %v1088 = vrot.slane %v336, 1
  %v1089 = vrot.slane %v337, 1
  %v1090 = vsel %vm487, %v1088, %v1089
  %v1091 = vrot.slane %v338, 1
  %v1092 = vrot.slane %v339, 1
  %v1093 = vsel %vm487, %v1091, %v1092
  %v1094 = vrot.slane %v340, 1
  %v1095 = vrot.slane %v341, 1
  %v1096 = vsel %vm487, %v1094, %v1095
  %v1097 = vrot.slane %v342, 1
  %v1098 = vrot.slane %v343, 1
  %v1099 = vsel %vm487, %v1097, %v1098
  %1100 = vrot.lane.b32.xlu0 %v1054, 36
  %v1101 = vpop.permute.xlu0 %1100
  %1102 = vrot.lane.b32.xlu0 %v1057, 36
  %v1103 = vpop.permute.xlu0 %1102
  %1104 = vrot.lane.b32.xlu0 %v1060, 36
  %v1105 = vpop.permute.xlu0 %1104
  %1106 = vrot.lane.b32.xlu0 %v1063, 36
  %v1107 = vpop.permute.xlu0 %1106
  %1108 = vrot.lane.b32.xlu0 %v1066, 36
  %v1109 = vpop.permute.xlu0 %1108
  %1110 = vrot.lane.b32.xlu0 %v1069, 36
  %v1111 = vpop.permute.xlu0 %1110
  %1112 = vrot.lane.b32.xlu0 %v1072, 36
  %v1113 = vpop.permute.xlu0 %1112
  %1114 = vrot.lane.b32.xlu0 %v1075, 36
  %v1115 = vpop.permute.xlu0 %1114
  %1116 = vrot.lane.b32.xlu0 %v1078, 36
  %v1117 = vpop.permute.xlu0 %1116
  %1118 = vrot.lane.b32.xlu0 %v1081, 36
  %v1119 = vpop.permute.xlu0 %1118
  %1120 = vrot.lane.b32.xlu0 %v1084, 36
  %v1121 = vpop.permute.xlu0 %1120
  %1122 = vrot.lane.b32.xlu0 %v1087, 36
  %v1123 = vpop.permute.xlu0 %1122
  %1124 = vrot.lane.b32.xlu0 %v1090, 36
  %v1125 = vpop.permute.xlu0 %1124
  %1126 = vrot.lane.b32.xlu0 %v1093, 36
  %v1127 = vpop.permute.xlu0 %1126
  %1128 = vrot.lane.b32.xlu0 %v1096, 36
  %v1129 = vpop.permute.xlu0 %1128
  %1130 = vrot.lane.b32.xlu0 %v1099, 36
  %v1131 = vpop.permute.xlu0 %1130
  %1150 = vrot.lane.b32.xlu0 %v312, 40
  %v1151 = vpop.permute.xlu0 %1150
  %1152 = vrot.lane.b32.xlu0 %v314, 40
  %v1153 = vpop.permute.xlu0 %1152
  %1154 = vrot.lane.b32.xlu0 %v316, 40
  %v1155 = vpop.permute.xlu0 %1154
  %1156 = vrot.lane.b32.xlu0 %v318, 40
  %v1157 = vpop.permute.xlu0 %1156
  %1158 = vrot.lane.b32.xlu0 %v320, 40
  %v1159 = vpop.permute.xlu0 %1158
  %1160 = vrot.lane.b32.xlu0 %v322, 40
  %v1161 = vpop.permute.xlu0 %1160
  %1162 = vrot.lane.b32.xlu0 %v324, 40
  %v1163 = vpop.permute.xlu0 %1162
  %1164 = vrot.lane.b32.xlu0 %v326, 40
  %v1165 = vpop.permute.xlu0 %1164
  %1166 = vrot.lane.b32.xlu0 %v330, 40
  %v1167 = vpop.permute.xlu0 %1166
  %1168 = vrot.lane.b32.xlu0 %v332, 40
  %v1169 = vpop.permute.xlu0 %1168
  %1170 = vrot.lane.b32.xlu0 %v334, 40
  %v1171 = vpop.permute.xlu0 %1170
  %1172 = vrot.lane.b32.xlu0 %v336, 40
  %v1173 = vpop.permute.xlu0 %1172
  %1174 = vrot.lane.b32.xlu0 %v338, 40
  %v1175 = vpop.permute.xlu0 %1174
  %1176 = vrot.lane.b32.xlu0 %v340, 40
  %v1177 = vpop.permute.xlu0 %1176
  %1178 = vrot.lane.b32.xlu0 %v342, 40
  %v1179 = vpop.permute.xlu0 %1178
  %1180 = vrot.lane.b32.xlu0 %v344, 40
  %v1181 = vpop.permute.xlu0 %1180
  %v1200 = vrot.slane %v326, 1
  %v1201 = vrot.slane %v327, 1
  %v1202 = vsel %vm487, %v1200, %v1201
  %v1203 = vrot.slane %v344, 1
  %v1204 = vrot.slane %v345, 1
  %v1205 = vsel %vm487, %v1203, %v1204
  %1206 = vrot.lane.b32.xlu0 %v1057, 44
  %v1207 = vpop.permute.xlu0 %1206
  %1208 = vrot.lane.b32.xlu0 %v1060, 44
  %v1209 = vpop.permute.xlu0 %1208
  %1210 = vrot.lane.b32.xlu0 %v1063, 44
  %v1211 = vpop.permute.xlu0 %1210
  %1212 = vrot.lane.b32.xlu0 %v1066, 44
  %v1213 = vpop.permute.xlu0 %1212
  %1214 = vrot.lane.b32.xlu0 %v1069, 44
  %v1215 = vpop.permute.xlu0 %1214
  %1216 = vrot.lane.b32.xlu0 %v1072, 44
  %v1217 = vpop.permute.xlu0 %1216
  %1218 = vrot.lane.b32.xlu0 %v1075, 44
  %v1219 = vpop.permute.xlu0 %1218
  %1220 = vrot.lane.b32.xlu0 %v1202, 44
  %v1221 = vpop.permute.xlu0 %1220
  %1222 = vrot.lane.b32.xlu0 %v1081, 44
  %v1223 = vpop.permute.xlu0 %1222
  %1224 = vrot.lane.b32.xlu0 %v1084, 44
  %v1225 = vpop.permute.xlu0 %1224
  %1226 = vrot.lane.b32.xlu0 %v1087, 44
  %v1227 = vpop.permute.xlu0 %1226
  %1228 = vrot.lane.b32.xlu0 %v1090, 44
  %v1229 = vpop.permute.xlu0 %1228
  %1230 = vrot.lane.b32.xlu0 %v1093, 44
  %v1231 = vpop.permute.xlu0 %1230
  %1232 = vrot.lane.b32.xlu0 %v1096, 44
  %v1233 = vpop.permute.xlu0 %1232
  %1234 = vrot.lane.b32.xlu0 %v1099, 44
  %v1235 = vpop.permute.xlu0 %1234
  %1236 = vrot.lane.b32.xlu0 %v1205, 44
  %v1237 = vpop.permute.xlu0 %1236
  %1270 = vrot.lane.b32.xlu0 %v419, 48
  %v1271 = vpop.permute.xlu0 %1270
  %1272 = vrot.lane.b32.xlu0 %v421, 48
  %v1273 = vpop.permute.xlu0 %1272
  %1274 = vrot.lane.b32.xlu0 %v423, 48
  %v1275 = vpop.permute.xlu0 %1274
  %1276 = vrot.lane.b32.xlu0 %v425, 48
  %v1277 = vpop.permute.xlu0 %1276
  %1278 = vrot.lane.b32.xlu0 %v427, 48
  %v1279 = vpop.permute.xlu0 %1278
  %1280 = vrot.lane.b32.xlu0 %v429, 48
  %v1281 = vpop.permute.xlu0 %1280
  %1282 = vrot.lane.b32.xlu0 %v431, 48
  %v1283 = vpop.permute.xlu0 %1282
  %1284 = vrot.lane.b32.xlu0 %v433, 48
  %v1285 = vpop.permute.xlu0 %1284
  %1286 = vrot.lane.b32.xlu0 %v437, 48
  %v1287 = vpop.permute.xlu0 %1286
  %1288 = vrot.lane.b32.xlu0 %v439, 48
  %v1289 = vpop.permute.xlu0 %1288
  %1290 = vrot.lane.b32.xlu0 %v441, 48
  %v1291 = vpop.permute.xlu0 %1290
  %1292 = vrot.lane.b32.xlu0 %v443, 48
  %v1293 = vpop.permute.xlu0 %1292
  %1294 = vrot.lane.b32.xlu0 %v445, 48
  %v1295 = vpop.permute.xlu0 %1294
  %1296 = vrot.lane.b32.xlu0 %v447, 48
  %v1297 = vpop.permute.xlu0 %1296
  %1298 = vrot.lane.b32.xlu0 %v449, 48
  %v1299 = vpop.permute.xlu0 %1298
  %1300 = vrot.lane.b32.xlu0 %v451, 48
  %v1301 = vpop.permute.xlu0 %1300
  %v1334 = vrot.slane %v419, 1
  %v1335 = vrot.slane %v420, 1
  %v1336 = vsel %vm487, %v1334, %v1335
  %v1337 = vrot.slane %v421, 1
  %v1338 = vrot.slane %v422, 1
  %v1339 = vsel %vm487, %v1337, %v1338
  %v1340 = vrot.slane %v423, 1
  %v1341 = vrot.slane %v424, 1
  %v1342 = vsel %vm487, %v1340, %v1341
  %v1343 = vrot.slane %v425, 1
  %v1344 = vrot.slane %v426, 1
  %v1345 = vsel %vm487, %v1343, %v1344
  %v1346 = vrot.slane %v427, 1
  %v1347 = vrot.slane %v428, 1
  %v1348 = vsel %vm487, %v1346, %v1347
  %v1349 = vrot.slane %v429, 1
  %v1350 = vrot.slane %v430, 1
  %v1351 = vsel %vm487, %v1349, %v1350
  %v1352 = vrot.slane %v431, 1
  %v1353 = vrot.slane %v432, 1
  %v1354 = vsel %vm487, %v1352, %v1353
  %v1355 = vrot.slane %v433, 1
  %v1356 = vrot.slane %v434, 1
  %v1357 = vsel %vm487, %v1355, %v1356
  %v1358 = vrot.slane %v437, 1
  %v1359 = vrot.slane %v438, 1
  %v1360 = vsel %vm487, %v1358, %v1359
  %v1361 = vrot.slane %v439, 1
  %v1362 = vrot.slane %v440, 1
  %v1363 = vsel %vm487, %v1361, %v1362
  %v1364 = vrot.slane %v441, 1
  %v1365 = vrot.slane %v442, 1
  %v1366 = vsel %vm487, %v1364, %v1365
  %v1367 = vrot.slane %v443, 1
  %v1368 = vrot.slane %v444, 1
  %v1369 = vsel %vm487, %v1367, %v1368
  %v1370 = vrot.slane %v445, 1
  %v1371 = vrot.slane %v446, 1
  %v1372 = vsel %vm487, %v1370, %v1371
  %v1373 = vrot.slane %v447, 1
  %v1374 = vrot.slane %v448, 1
  %v1375 = vsel %vm487, %v1373, %v1374
  %v1376 = vrot.slane %v449, 1
  %v1377 = vrot.slane %v450, 1
  %v1378 = vsel %vm487, %v1376, %v1377
  %v1379 = vrot.slane %v451, 1
  %v1380 = vrot.slane %v452, 1
  %v1381 = vsel %vm487, %v1379, %v1380
  %1382 = vrot.lane.b32.xlu0 %v1336, 52
  %v1383 = vpop.permute.xlu0 %1382
  %1384 = vrot.lane.b32.xlu0 %v1339, 52
  %v1385 = vpop.permute.xlu0 %1384
  %1386 = vrot.lane.b32.xlu0 %v1342, 52
  %v1387 = vpop.permute.xlu0 %1386
  %1388 = vrot.lane.b32.xlu0 %v1345, 52
  %v1389 = vpop.permute.xlu0 %1388
  %1390 = vrot.lane.b32.xlu0 %v1348, 52
  %v1391 = vpop.permute.xlu0 %1390
  %1392 = vrot.lane.b32.xlu0 %v1351, 52
  %v1393 = vpop.permute.xlu0 %1392
  %1394 = vrot.lane.b32.xlu0 %v1354, 52
  %v1395 = vpop.permute.xlu0 %1394
  %1396 = vrot.lane.b32.xlu0 %v1357, 52
  %v1397 = vpop.permute.xlu0 %1396
  %1398 = vrot.lane.b32.xlu0 %v1360, 52
  %v1399 = vpop.permute.xlu0 %1398
  %1400 = vrot.lane.b32.xlu0 %v1363, 52
  %v1401 = vpop.permute.xlu0 %1400
  %1402 = vrot.lane.b32.xlu0 %v1366, 52
  %v1403 = vpop.permute.xlu0 %1402
  %1404 = vrot.lane.b32.xlu0 %v1369, 52
  %v1405 = vpop.permute.xlu0 %1404
  %1406 = vrot.lane.b32.xlu0 %v1372, 52
  %v1407 = vpop.permute.xlu0 %1406
  %1408 = vrot.lane.b32.xlu0 %v1375, 52
  %v1409 = vpop.permute.xlu0 %1408
  %1410 = vrot.lane.b32.xlu0 %v1378, 52
  %v1411 = vpop.permute.xlu0 %1410
  %1412 = vrot.lane.b32.xlu0 %v1381, 52
  %v1413 = vpop.permute.xlu0 %1412
  %1432 = vrot.lane.b32.xlu0 %v421, 56
  %v1433 = vpop.permute.xlu0 %1432
  %1434 = vrot.lane.b32.xlu0 %v423, 56
  %v1435 = vpop.permute.xlu0 %1434
  %1436 = vrot.lane.b32.xlu0 %v425, 56
  %v1437 = vpop.permute.xlu0 %1436
  %1438 = vrot.lane.b32.xlu0 %v427, 56
  %v1439 = vpop.permute.xlu0 %1438
  %1440 = vrot.lane.b32.xlu0 %v429, 56
  %v1441 = vpop.permute.xlu0 %1440
  %1442 = vrot.lane.b32.xlu0 %v431, 56
  %v1443 = vpop.permute.xlu0 %1442
  %1444 = vrot.lane.b32.xlu0 %v433, 56
  %v1445 = vpop.permute.xlu0 %1444
  %1446 = vrot.lane.b32.xlu0 %v435, 56
  %v1447 = vpop.permute.xlu0 %1446
  %1448 = vrot.lane.b32.xlu0 %v439, 56
  %v1449 = vpop.permute.xlu0 %1448
  %1450 = vrot.lane.b32.xlu0 %v441, 56
  %v1451 = vpop.permute.xlu0 %1450
  %1452 = vrot.lane.b32.xlu0 %v443, 56
  %v1453 = vpop.permute.xlu0 %1452
  %1454 = vrot.lane.b32.xlu0 %v445, 56
  %v1455 = vpop.permute.xlu0 %1454
  %1456 = vrot.lane.b32.xlu0 %v447, 56
  %v1457 = vpop.permute.xlu0 %1456
  %1458 = vrot.lane.b32.xlu0 %v449, 56
  %v1459 = vpop.permute.xlu0 %1458
  %1460 = vrot.lane.b32.xlu0 %v451, 56
  %v1461 = vpop.permute.xlu0 %1460
  %1462 = vrot.lane.b32.xlu0 %v453, 56
  %v1463 = vpop.permute.xlu0 %1462
  %v1482 = vrot.slane %v435, 1
  %v1483 = vrot.slane %v436, 1
  %v1484 = vsel %vm487, %v1482, %v1483
  %v1485 = vrot.slane %v453, 1
  %v1486 = vrot.slane %v454, 1
  %v1487 = vsel %vm487, %v1485, %v1486
  %1488 = vrot.lane.b32.xlu0 %v1339, 60
  %v1489 = vpop.permute.xlu0 %1488
  %1490 = vrot.lane.b32.xlu0 %v1342, 60
  %v1491 = vpop.permute.xlu0 %1490
  %1492 = vrot.lane.b32.xlu0 %v1345, 60
  %v1493 = vpop.permute.xlu0 %1492
  %1494 = vrot.lane.b32.xlu0 %v1348, 60
  %v1495 = vpop.permute.xlu0 %1494
  %1496 = vrot.lane.b32.xlu0 %v1351, 60
  %v1497 = vpop.permute.xlu0 %1496
  %1498 = vrot.lane.b32.xlu0 %v1354, 60
  %v1499 = vpop.permute.xlu0 %1498
  %1500 = vrot.lane.b32.xlu0 %v1357, 60
  %v1501 = vpop.permute.xlu0 %1500
  %1502 = vrot.lane.b32.xlu0 %v1484, 60
  %v1503 = vpop.permute.xlu0 %1502
  %1504 = vrot.lane.b32.xlu0 %v1363, 60
  %v1505 = vpop.permute.xlu0 %1504
  %1506 = vrot.lane.b32.xlu0 %v1366, 60
  %v1507 = vpop.permute.xlu0 %1506
  %1508 = vrot.lane.b32.xlu0 %v1369, 60
  %v1509 = vpop.permute.xlu0 %1508
  %1510 = vrot.lane.b32.xlu0 %v1372, 60
  %v1511 = vpop.permute.xlu0 %1510
  %1512 = vrot.lane.b32.xlu0 %v1375, 60
  %v1513 = vpop.permute.xlu0 %1512
  %1514 = vrot.lane.b32.xlu0 %v1378, 60
  %v1515 = vpop.permute.xlu0 %1514
  %1516 = vrot.lane.b32.xlu0 %v1381, 60
  %v1517 = vpop.permute.xlu0 %1516
  %1518 = vrot.lane.b32.xlu0 %v1487, 60
  %v1519 = vpop.permute.xlu0 %1518
  %vm1536 = vcmask 31744
  %v1537 = vsel %vm1536, %v92, %v537
  %v1538 = vsel %vm1536, %v94, %v539
  %v1539 = vsel %vm1536, %v96, %v541
  %v1540 = vsel %vm1536, %v98, %v543
  %v1541 = vsel %vm1536, %v100, %v545
  %v1542 = vsel %vm1536, %v102, %v547
  %v1543 = vsel %vm1536, %v104, %v549
  %v1544 = vsel %vm1536, %v106, %v551
  %v1545 = vsel %vm1536, %v110, %v553
  %v1546 = vsel %vm1536, %v112, %v555
  %v1547 = vsel %vm1536, %v114, %v557
  %v1548 = vsel %vm1536, %v116, %v559
  %v1549 = vsel %vm1536, %v118, %v561
  %v1550 = vsel %vm1536, %v120, %v563
  %v1551 = vsel %vm1536, %v122, %v565
  %v1552 = vsel %vm1536, %v124, %v567
  %vm1553 = vcmask 64512
  %v1554 = vsel %vm1553, %v1537, %v587
  %v1555 = vsel %vm1553, %v1538, %v589
  %v1556 = vsel %vm1553, %v1539, %v591
  %v1557 = vsel %vm1553, %v1540, %v593
  %v1558 = vsel %vm1553, %v1541, %v595
  %v1559 = vsel %vm1553, %v1542, %v597
  %v1560 = vsel %vm1553, %v1543, %v599
  %v1561 = vsel %vm1553, %v1544, %v601
  %v1562 = vsel %vm1553, %v1545, %v603
  %v1563 = vsel %vm1553, %v1546, %v605
  %v1564 = vsel %vm1553, %v1547, %v607
  %v1565 = vsel %vm1553, %v1548, %v609
  %v1566 = vsel %vm1553, %v1549, %v611
  %v1567 = vsel %vm1553, %v1550, %v613
  %v1568 = vsel %vm1553, %v1551, %v615
  %v1569 = vsel %vm1553, %v1552, %v617
  %vm1570 = vcmask 97280
  %v1571 = vsel %vm1570, %v1554, %v643
  %v1572 = vsel %vm1570, %v1555, %v645
  %v1573 = vsel %vm1570, %v1556, %v647
  %v1574 = vsel %vm1570, %v1557, %v649
  %v1575 = vsel %vm1570, %v1558, %v651
  %v1576 = vsel %vm1570, %v1559, %v653
  %v1577 = vsel %vm1570, %v1560, %v655
  %v1578 = vsel %vm1570, %v1561, %v657
  %v1579 = vsel %vm1570, %v1562, %v659
  %v1580 = vsel %vm1570, %v1563, %v661
  %v1581 = vsel %vm1570, %v1564, %v663
  %v1582 = vsel %vm1570, %v1565, %v665
  %v1583 = vsel %vm1570, %v1566, %v667
  %v1584 = vsel %vm1570, %v1567, %v669
  %v1585 = vsel %vm1570, %v1568, %v671
  %v1586 = vsel %vm1570, %v1569, %v673
  %vm1587 = vcmask 130048
  %v1588 = vsel %vm1587, %v1571, %v707
  %v1589 = vsel %vm1587, %v1572, %v709
  %v1590 = vsel %vm1587, %v1573, %v711
  %v1591 = vsel %vm1587, %v1574, %v713
  %v1592 = vsel %vm1587, %v1575, %v715
  %v1593 = vsel %vm1587, %v1576, %v717
  %v1594 = vsel %vm1587, %v1577, %v719
  %v1595 = vsel %vm1587, %v1578, %v721
  %v1596 = vsel %vm1587, %v1579, %v723
  %v1597 = vsel %vm1587, %v1580, %v725
  %v1598 = vsel %vm1587, %v1581, %v727
  %v1599 = vsel %vm1587, %v1582, %v729
  %v1600 = vsel %vm1587, %v1583, %v731
  %v1601 = vsel %vm1587, %v1584, %v733
  %v1602 = vsel %vm1587, %v1585, %v735
  %v1603 = vsel %vm1587, %v1586, %v737
  %vm1604 = vcmask 162816
  %v1605 = vsel %vm1604, %v1588, %v819
  %v1606 = vsel %vm1604, %v1589, %v821
  %v1607 = vsel %vm1604, %v1590, %v823
  %v1608 = vsel %vm1604, %v1591, %v825
  %v1609 = vsel %vm1604, %v1592, %v827
  %v1610 = vsel %vm1604, %v1593, %v829
  %v1611 = vsel %vm1604, %v1594, %v831
  %v1612 = vsel %vm1604, %v1595, %v833
  %v1613 = vsel %vm1604, %v1596, %v835
  %v1614 = vsel %vm1604, %v1597, %v837
  %v1615 = vsel %vm1604, %v1598, %v839
  %v1616 = vsel %vm1604, %v1599, %v841
  %v1617 = vsel %vm1604, %v1600, %v843
  %v1618 = vsel %vm1604, %v1601, %v845
  %v1619 = vsel %vm1604, %v1602, %v847
  %v1620 = vsel %vm1604, %v1603, %v849
  %vm1621 = vcmask 195584
  %v1622 = vsel %vm1621, %v1605, %v869
  %v1623 = vsel %vm1621, %v1606, %v871
  %v1624 = vsel %vm1621, %v1607, %v873
  %v1625 = vsel %vm1621, %v1608, %v875
  %v1626 = vsel %vm1621, %v1609, %v877
  %v1627 = vsel %vm1621, %v1610, %v879
  %v1628 = vsel %vm1621, %v1611, %v881
  %v1629 = vsel %vm1621, %v1612, %v883
  %v1630 = vsel %vm1621, %v1613, %v885
  %v1631 = vsel %vm1621, %v1614, %v887
  %v1632 = vsel %vm1621, %v1615, %v889
  %v1633 = vsel %vm1621, %v1616, %v891
  %v1634 = vsel %vm1621, %v1617, %v893
  %v1635 = vsel %vm1621, %v1618, %v895
  %v1636 = vsel %vm1621, %v1619, %v897
  %v1637 = vsel %vm1621, %v1620, %v899
  %vm1638 = vcmask 228352
  %v1639 = vsel %vm1638, %v1622, %v925
  %v1640 = vsel %vm1638, %v1623, %v927
  %v1641 = vsel %vm1638, %v1624, %v929
  %v1642 = vsel %vm1638, %v1625, %v931
  %v1643 = vsel %vm1638, %v1626, %v933
  %v1644 = vsel %vm1638, %v1627, %v935
  %v1645 = vsel %vm1638, %v1628, %v937
  %v1646 = vsel %vm1638, %v1629, %v939
  %v1647 = vsel %vm1638, %v1630, %v941
  %v1648 = vsel %vm1638, %v1631, %v943
  %v1649 = vsel %vm1638, %v1632, %v945
  %v1650 = vsel %vm1638, %v1633, %v947
  %v1651 = vsel %vm1638, %v1634, %v949
  %v1652 = vsel %vm1638, %v1635, %v951
  %v1653 = vsel %vm1638, %v1636, %v953
  %v1654 = vsel %vm1638, %v1637, %v955
  %vm1655 = vcmask 261120
  %v1656 = vsel %vm1655, %v1639, %v989
  %v1657 = vsel %vm1655, %v1640, %v991
  %v1658 = vsel %vm1655, %v1641, %v993
  %v1659 = vsel %vm1655, %v1642, %v995
  %v1660 = vsel %vm1655, %v1643, %v997
  %v1661 = vsel %vm1655, %v1644, %v999
  %v1662 = vsel %vm1655, %v1645, %v1001
  %v1663 = vsel %vm1655, %v1646, %v1003
  %v1664 = vsel %vm1655, %v1647, %v1005
  %v1665 = vsel %vm1655, %v1648, %v1007
  %v1666 = vsel %vm1655, %v1649, %v1009
  %v1667 = vsel %vm1655, %v1650, %v1011
  %v1668 = vsel %vm1655, %v1651, %v1013
  %v1669 = vsel %vm1655, %v1652, %v1015
  %v1670 = vsel %vm1655, %v1653, %v1017
  %v1671 = vsel %vm1655, %v1654, %v1019
  %vm1672 = vcmask 293888
  %v1673 = vsel %vm1672, %v1656, %v1101
  %v1674 = vsel %vm1672, %v1657, %v1103
  %v1675 = vsel %vm1672, %v1658, %v1105
  %v1676 = vsel %vm1672, %v1659, %v1107
  %v1677 = vsel %vm1672, %v1660, %v1109
  %v1678 = vsel %vm1672, %v1661, %v1111
  %v1679 = vsel %vm1672, %v1662, %v1113
  %v1680 = vsel %vm1672, %v1663, %v1115
  %v1681 = vsel %vm1672, %v1664, %v1117
  %v1682 = vsel %vm1672, %v1665, %v1119
  %v1683 = vsel %vm1672, %v1666, %v1121
  %v1684 = vsel %vm1672, %v1667, %v1123
  %v1685 = vsel %vm1672, %v1668, %v1125
  %v1686 = vsel %vm1672, %v1669, %v1127
  %v1687 = vsel %vm1672, %v1670, %v1129
  %v1688 = vsel %vm1672, %v1671, %v1131
  %vm1689 = vcmask 326656
  %v1690 = vsel %vm1689, %v1673, %v1151
  %v1691 = vsel %vm1689, %v1674, %v1153
  %v1692 = vsel %vm1689, %v1675, %v1155
  %v1693 = vsel %vm1689, %v1676, %v1157
  %v1694 = vsel %vm1689, %v1677, %v1159
  %v1695 = vsel %vm1689, %v1678, %v1161
  %v1696 = vsel %vm1689, %v1679, %v1163
  %v1697 = vsel %vm1689, %v1680, %v1165
  %v1698 = vsel %vm1689, %v1681, %v1167
  %v1699 = vsel %vm1689, %v1682, %v1169
  %v1700 = vsel %vm1689, %v1683, %v1171
  %v1701 = vsel %vm1689, %v1684, %v1173
  %v1702 = vsel %vm1689, %v1685, %v1175
  %v1703 = vsel %vm1689, %v1686, %v1177
  %v1704 = vsel %vm1689, %v1687, %v1179
  %v1705 = vsel %vm1689, %v1688, %v1181
  %vm1706 = vcmask 359424
  %v1707 = vsel %vm1706, %v1690, %v1207
  %v1708 = vsel %vm1706, %v1691, %v1209
  %v1709 = vsel %vm1706, %v1692, %v1211
  %v1710 = vsel %vm1706, %v1693, %v1213
  %v1711 = vsel %vm1706, %v1694, %v1215
  %v1712 = vsel %vm1706, %v1695, %v1217
  %v1713 = vsel %vm1706, %v1696, %v1219
  %v1714 = vsel %vm1706, %v1697, %v1221
  %v1715 = vsel %vm1706, %v1698, %v1223
  %v1716 = vsel %vm1706, %v1699, %v1225
  %v1717 = vsel %vm1706, %v1700, %v1227
  %v1718 = vsel %vm1706, %v1701, %v1229
  %v1719 = vsel %vm1706, %v1702, %v1231
  %v1720 = vsel %vm1706, %v1703, %v1233
  %v1721 = vsel %vm1706, %v1704, %v1235
  %v1722 = vsel %vm1706, %v1705, %v1237
  %vm1723 = vcmask 392192
  %v1724 = vsel %vm1723, %v1707, %v1271
  %v1725 = vsel %vm1723, %v1708, %v1273
  %v1726 = vsel %vm1723, %v1709, %v1275
  %v1727 = vsel %vm1723, %v1710, %v1277
  %v1728 = vsel %vm1723, %v1711, %v1279
  %v1729 = vsel %vm1723, %v1712, %v1281
  %v1730 = vsel %vm1723, %v1713, %v1283
  %v1731 = vsel %vm1723, %v1714, %v1285
  %v1732 = vsel %vm1723, %v1715, %v1287
  %v1733 = vsel %vm1723, %v1716, %v1289
  %v1734 = vsel %vm1723, %v1717, %v1291
  %v1735 = vsel %vm1723, %v1718, %v1293
  %v1736 = vsel %vm1723, %v1719, %v1295
  %v1737 = vsel %vm1723, %v1720, %v1297
  %v1738 = vsel %vm1723, %v1721, %v1299
  %v1739 = vsel %vm1723, %v1722, %v1301
  %vm1740 = vcmask 424960
  %v1741 = vsel %vm1740, %v1724, %v1383
  %v1742 = vsel %vm1740, %v1725, %v1385
  %v1743 = vsel %vm1740, %v1726, %v1387
  %v1744 = vsel %vm1740, %v1727, %v1389
  %v1745 = vsel %vm1740, %v1728, %v1391
  %v1746 = vsel %vm1740, %v1729, %v1393
  %v1747 = vsel %vm1740, %v1730, %v1395
  %v1748 = vsel %vm1740, %v1731, %v1397
  %v1749 = vsel %vm1740, %v1732, %v1399
  %v1750 = vsel %vm1740, %v1733, %v1401
  %v1751 = vsel %vm1740, %v1734, %v1403
  %v1752 = vsel %vm1740, %v1735, %v1405
  %v1753 = vsel %vm1740, %v1736, %v1407
  %v1754 = vsel %vm1740, %v1737, %v1409
  %v1755 = vsel %vm1740, %v1738, %v1411
  %v1756 = vsel %vm1740, %v1739, %v1413
  %vm1757 = vcmask 457728
  %v1758 = vsel %vm1757, %v1741, %v1433
  %v1759 = vsel %vm1757, %v1742, %v1435
  %v1760 = vsel %vm1757, %v1743, %v1437
  %v1761 = vsel %vm1757, %v1744, %v1439
  %v1762 = vsel %vm1757, %v1745, %v1441
  %v1763 = vsel %vm1757, %v1746, %v1443
  %v1764 = vsel %vm1757, %v1747, %v1445
  %v1765 = vsel %vm1757, %v1748, %v1447
  %v1766 = vsel %vm1757, %v1749, %v1449
  %v1767 = vsel %vm1757, %v1750, %v1451
  %v1768 = vsel %vm1757, %v1751, %v1453
  %v1769 = vsel %vm1757, %v1752, %v1455
  %v1770 = vsel %vm1757, %v1753, %v1457
  %v1771 = vsel %vm1757, %v1754, %v1459
  %v1772 = vsel %vm1757, %v1755, %v1461
  %v1773 = vsel %vm1757, %v1756, %v1463
  %vm1774 = vcmask 490496
  %v1775 = vsel %vm1774, %v1758, %v1489
  %v1776 = vsel %vm1774, %v1759, %v1491
  %v1777 = vsel %vm1774, %v1760, %v1493
  %v1778 = vsel %vm1774, %v1761, %v1495
  %v1779 = vsel %vm1774, %v1762, %v1497
  %v1780 = vsel %vm1774, %v1763, %v1499
  %v1781 = vsel %vm1774, %v1764, %v1501
  %v1782 = vsel %vm1774, %v1765, %v1503
  %v1783 = vsel %vm1774, %v1766, %v1505
  %v1784 = vsel %vm1774, %v1767, %v1507
  %v1785 = vsel %vm1774, %v1768, %v1509
  %v1786 = vsel %vm1774, %v1769, %v1511
  %v1787 = vsel %vm1774, %v1770, %v1513
  %v1788 = vsel %vm1774, %v1771, %v1515
  %v1789 = vsel %vm1774, %v1772, %v1517
  %v1790 = vsel %vm1774, %v1773, %v1519
  %v1791 = vld [vmem:[%s1] sm:$0xff]
  %v1792 = vld [vmem:[%s1 + $0x8] sm:$0xff]
  %v1793 = vld [vmem:[%s1 + $0x10] sm:$0xff]
  %v1794 = vld [vmem:[%s1 + $0x18] sm:$0xff]
  %v1795 = vld [vmem:[%s1 + $0x20] sm:$0xff]
  %v1796 = vld [vmem:[%s1 + $0x28] sm:$0xff]
  %v1797 = vld [vmem:[%s1 + $0x30] sm:$0xff]
  %v1798 = vld [vmem:[%s1 + $0x38] sm:$0xff]
  %vm1799 = vcmask 523264
  %v1801 = vsel %vm1799, %v1775, 0
  %v1804 = vsel %vm1799, %v1776, 0
  %v1807 = vsel %vm1799, %v1777, 0
  %v1810 = vsel %vm1799, %v1778, 0
  %v1813 = vsel %vm1799, %v1779, 0
  %v1816 = vsel %vm1799, %v1780, 0
  %v1819 = vsel %vm1799, %v1781, 0
  %v1822 = vsel %vm1799, %v1782, 0
  %v1825 = vsel %vm1799, %v1783, 0
  %v1828 = vsel %vm1799, %v1784, 0
  %v1831 = vsel %vm1799, %v1785, 0
  %v1834 = vsel %vm1799, %v1786, 0
  %v1837 = vsel %vm1799, %v1787, 0
  %v1840 = vsel %vm1799, %v1788, 0
  %v1843 = vsel %vm1799, %v1789, 0
  %v1846 = vsel %vm1799, %v1790, 0
  %1848 = vmatpush.msra.mxu0 0.0
  %1849 = vmatpush.msra.mxu0 0.0
  %1850 = vmatpush.msra.mxu0 0.0
  %1851 = vmatpush.msra.mxu0 0.0
  %1852 = vmatpush.msra.mxu0 0.0
  %1853 = vmatpush.msra.mxu0 0.0
  %1854 = vmatpush.msra.mxu0 0.0
  %1855 = vmatpush.msra.mxu0 0.0
  %1856 = vmatpush.msra.mxu0 %v1798
  %1857 = vmatpush.msra.mxu0 %v1797
  %1858 = vmatpush.msra.mxu0 %v1796
  %1859 = vmatpush.msra.mxu0 %v1795
  %1860 = vmatpush.msra.mxu0 %v1794
  %1861 = vmatpush.msra.mxu0 %v1793
  %1862 = vmatpush.msra.mxu0 %v1792
  %1863 = vmatpush.msra.mxu0 %v1791
  %1864 = vmatmul.f32.gmra.mxu0 %v1801
  %v1865 = vpop.f32.mrf.mxu0
  %v1866 = vadd.f32 0.0, %v1865
  %1867 = vmatmul.f32.gmra.mxu0 %v1804
  %v1868 = vpop.f32.mrf.mxu0
  %v1869 = vadd.f32 0.0, %v1868
  %1870 = vmatmul.f32.gmra.mxu0 %v1807
  %v1871 = vpop.f32.mrf.mxu0
  %v1872 = vadd.f32 0.0, %v1871
  %1873 = vmatmul.f32.gmra.mxu0 %v1810
  %v1874 = vpop.f32.mrf.mxu0
  %v1875 = vadd.f32 0.0, %v1874
  %1876 = vmatmul.f32.gmra.mxu0 %v1813
  %v1877 = vpop.f32.mrf.mxu0
  %v1878 = vadd.f32 0.0, %v1877
  %1879 = vmatmul.f32.gmra.mxu0 %v1816
  %v1880 = vpop.f32.mrf.mxu0
  %v1881 = vadd.f32 0.0, %v1880
  %1882 = vmatmul.f32.gmra.mxu0 %v1819
  %v1883 = vpop.f32.mrf.mxu0
  %v1884 = vadd.f32 0.0, %v1883
  %1885 = vmatmul.f32.gmra.mxu0 %v1822
  %v1886 = vpop.f32.mrf.mxu0
  %v1887 = vadd.f32 0.0, %v1886
  %1888 = vmatmul.f32.gmra.mxu0 %v1825
  %v1889 = vpop.f32.mrf.mxu0
  %v1890 = vadd.f32 0.0, %v1889
  %1891 = vmatmul.f32.gmra.mxu0 %v1828
  %v1892 = vpop.f32.mrf.mxu0
  %v1893 = vadd.f32 0.0, %v1892
  %1894 = vmatmul.f32.gmra.mxu0 %v1831
  %v1895 = vpop.f32.mrf.mxu0
  %v1896 = vadd.f32 0.0, %v1895
  %1897 = vmatmul.f32.gmra.mxu0 %v1834
  %v1898 = vpop.f32.mrf.mxu0
  %v1899 = vadd.f32 0.0, %v1898
  %1900 = vmatmul.f32.gmra.mxu0 %v1837
  %v1901 = vpop.f32.mrf.mxu0
  %v1902 = vadd.f32 0.0, %v1901
  %1903 = vmatmul.f32.gmra.mxu0 %v1840
  %v1904 = vpop.f32.mrf.mxu0
  %v1905 = vadd.f32 0.0, %v1904
  %1906 = vmatmul.f32.gmra.mxu0 %v1843
  %v1907 = vpop.f32.mrf.mxu0
  %v1908 = vadd.f32 0.0, %v1907
  %1909 = vmatmul.f32.gmra.mxu0 %v1846
  %v1910 = vpop.f32.mrf.mxu0
  %v1911 = vadd.f32 0.0, %v1910
  %1912 = vdwg.mxu0
  %v1913 = vmax.f32 %v1866, 0.0
  %v1914 = vmax.f32 %v1869, 0.0
  %v1915 = vmax.f32 %v1872, 0.0
  %v1916 = vmax.f32 %v1875, 0.0
  %v1917 = vmax.f32 %v1878, 0.0
  %v1918 = vmax.f32 %v1881, 0.0
  %v1919 = vmax.f32 %v1884, 0.0
  %v1920 = vmax.f32 %v1887, 0.0
  %v1921 = vmax.f32 %v1890, 0.0
  %v1922 = vmax.f32 %v1893, 0.0
  %v1923 = vmax.f32 %v1896, 0.0
  %v1924 = vmax.f32 %v1899, 0.0
  %v1925 = vmax.f32 %v1902, 0.0
  %v1926 = vmax.f32 %v1905, 0.0
  %v1927 = vmax.f32 %v1908, 0.0
  %v1928 = vmax.f32 %v1911, 0.0
  %v1946 = vrot.slane 0.0, 7
  %v1947 = vrot.slane %v1913, 7
  %v1948 = vrot.slane %v1914, 7
  %v1949 = vrot.slane %v1915, 7
  %v1950 = vrot.slane %v1916, 7
  %v1951 = vrot.slane %v1917, 7
  %v1952 = vrot.slane %v1918, 7
  %v1953 = vrot.slane %v1919, 7
  %v1954 = vrot.slane %v1920, 7
  %v1955 = vrot.slane %v1921, 7
  %v1956 = vrot.slane %v1922, 7
  %v1957 = vrot.slane %v1923, 7
  %v1958 = vrot.slane %v1924, 7
  %v1959 = vrot.slane %v1925, 7
  %v1960 = vrot.slane %v1926, 7
  %v1961 = vrot.slane %v1927, 7
  %v1962 = vrot.slane %v1928, 7
  %vm1980 = vcmask 1040384
  %v1981 = vsel %vm1980, 0.0, %v1946
  %v1982 = vsel %vm1980, 0.0, %v1947
  %v1983 = vsel %vm1980, 0.0, %v1948
  %v1984 = vsel %vm1980, 0.0, %v1949
  %v1985 = vsel %vm1980, 0.0, %v1950
  %v1986 = vsel %vm1980, 0.0, %v1951
  %v1987 = vsel %vm1980, 0.0, %v1952
  %v1988 = vsel %vm1980, 0.0, %v1953
  %v1989 = vsel %vm1980, 0.0, %v1954
  %v1990 = vsel %vm1980, 0.0, %v1955
  %v1991 = vsel %vm1980, 0.0, %v1956
  %v1992 = vsel %vm1980, 0.0, %v1957
  %v1993 = vsel %vm1980, 0.0, %v1958
  %v1994 = vsel %vm1980, 0.0, %v1959
  %v1995 = vsel %vm1980, 0.0, %v1960
  %v1996 = vsel %vm1980, 0.0, %v1961
  %v1997 = vsel %vm1980, 0.0, %v1962
  %v1998 = vsel %vm1980, %v1946, 0.0
  %v1999 = vsel %vm1980, %v1947, 0.0
  %v2000 = vsel %vm1980, %v1948, 0.0
  %v2001 = vsel %vm1980, %v1949, 0.0
  %v2002 = vsel %vm1980, %v1950, 0.0
  %v2003 = vsel %vm1980, %v1951, 0.0
  %v2004 = vsel %vm1980, %v1952, 0.0
  %v2005 = vsel %vm1980, %v1953, 0.0
  %v2006 = vsel %vm1980, %v1954, 0.0
  %v2007 = vsel %vm1980, %v1955, 0.0
  %v2008 = vsel %vm1980, %v1956, 0.0
  %v2009 = vsel %vm1980, %v1957, 0.0
  %v2010 = vsel %vm1980, %v1958, 0.0
  %v2011 = vsel %vm1980, %v1959, 0.0
  %v2012 = vsel %vm1980, %v1960, 0.0
  %v2013 = vsel %vm1980, %v1961, 0.0
  %v2014 = vsel %vm1980, %v1962, 0.0
  %v2045 = vrot.slane %v1981, 1
  %v2046 = vrot.slane %v1998, 1
  %v2047 = vsel %vm487, %v2045, %v2046
  %v2048 = vrot.slane %v1982, 1
  %v2049 = vrot.slane %v1999, 1
  %v2050 = vsel %vm487, %v2048, %v2049
  %v2051 = vrot.slane %v1983, 1
  %v2052 = vrot.slane %v2000, 1
  %v2053 = vsel %vm487, %v2051, %v2052
  %v2054 = vrot.slane %v1984, 1
  %v2055 = vrot.slane %v2001, 1
  %v2056 = vsel %vm487, %v2054, %v2055
  %v2057 = vrot.slane %v1985, 1
  %v2058 = vrot.slane %v2002, 1
  %v2059 = vsel %vm487, %v2057, %v2058
  %v2060 = vrot.slane %v1986, 1
  %v2061 = vrot.slane %v2003, 1
  %v2062 = vsel %vm487, %v2060, %v2061
  %v2063 = vrot.slane %v1987, 1
  %v2064 = vrot.slane %v2004, 1
  %v2065 = vsel %vm487, %v2063, %v2064
  %v2066 = vrot.slane %v1988, 1
  %v2067 = vrot.slane %v2005, 1
  %v2068 = vsel %vm487, %v2066, %v2067
  %v2069 = vrot.slane %v1990, 1
  %v2070 = vrot.slane %v2007, 1
  %v2071 = vsel %vm487, %v2069, %v2070
  %v2072 = vrot.slane %v1991, 1
  %v2073 = vrot.slane %v2008, 1
  %v2074 = vsel %vm487, %v2072, %v2073
  %v2075 = vrot.slane %v1992, 1
  %v2076 = vrot.slane %v2009, 1
  %v2077 = vsel %vm487, %v2075, %v2076
  %v2078 = vrot.slane %v1993, 1
  %v2079 = vrot.slane %v2010, 1
  %v2080 = vsel %vm487, %v2078, %v2079
  %v2081 = vrot.slane %v1994, 1
  %v2082 = vrot.slane %v2011, 1
  %v2083 = vsel %vm487, %v2081, %v2082
  %v2084 = vrot.slane %v1995, 1
  %v2085 = vrot.slane %v2012, 1
  %v2086 = vsel %vm487, %v2084, %v2085
  %v2087 = vrot.slane %v1996, 1
  %v2088 = vrot.slane %v2013, 1
  %v2089 = vsel %vm487, %v2087, %v2088
  %2090 = vrot.lane.b32.xlu0 %v2047, 8
  %v2091 = vpop.permute.xlu0 %2090
  %2092 = vrot.lane.b32.xlu0 %v2050, 8
  %v2093 = vpop.permute.xlu0 %2092
  %2094 = vrot.lane.b32.xlu0 %v2053, 8
  %v2095 = vpop.permute.xlu0 %2094
  %2096 = vrot.lane.b32.xlu0 %v2056, 8
  %v2097 = vpop.permute.xlu0 %2096
  %2098 = vrot.lane.b32.xlu0 %v2059, 8
  %v2099 = vpop.permute.xlu0 %2098
  %2100 = vrot.lane.b32.xlu0 %v2062, 8
  %v2101 = vpop.permute.xlu0 %2100
  %2102 = vrot.lane.b32.xlu0 %v2065, 8
  %v2103 = vpop.permute.xlu0 %2102
  %2104 = vrot.lane.b32.xlu0 %v2068, 8
  %v2105 = vpop.permute.xlu0 %2104
  %2106 = vrot.lane.b32.xlu0 %v2071, 8
  %v2107 = vpop.permute.xlu0 %2106
  %2108 = vrot.lane.b32.xlu0 %v2074, 8
  %v2109 = vpop.permute.xlu0 %2108
  %2110 = vrot.lane.b32.xlu0 %v2077, 8
  %v2111 = vpop.permute.xlu0 %2110
  %2112 = vrot.lane.b32.xlu0 %v2080, 8
  %v2113 = vpop.permute.xlu0 %2112
  %2114 = vrot.lane.b32.xlu0 %v2083, 8
  %v2115 = vpop.permute.xlu0 %2114
  %2116 = vrot.lane.b32.xlu0 %v2086, 8
  %v2117 = vpop.permute.xlu0 %2116
  %2118 = vrot.lane.b32.xlu0 %v2089, 8
  %v2119 = vpop.permute.xlu0 %2118
  %2137 = vrot.lane.b32.xlu0 %v1982, 16
  %v2138 = vpop.permute.xlu0 %2137
  %2139 = vrot.lane.b32.xlu0 %v1983, 16
  %v2140 = vpop.permute.xlu0 %2139
  %2141 = vrot.lane.b32.xlu0 %v1984, 16
  %v2142 = vpop.permute.xlu0 %2141
  %2143 = vrot.lane.b32.xlu0 %v1985, 16
  %v2144 = vpop.permute.xlu0 %2143
  %2145 = vrot.lane.b32.xlu0 %v1986, 16
  %v2146 = vpop.permute.xlu0 %2145
  %2147 = vrot.lane.b32.xlu0 %v1987, 16
  %v2148 = vpop.permute.xlu0 %2147
  %2149 = vrot.lane.b32.xlu0 %v1988, 16
  %v2150 = vpop.permute.xlu0 %2149
  %2151 = vrot.lane.b32.xlu0 %v1989, 16
  %v2152 = vpop.permute.xlu0 %2151
  %2153 = vrot.lane.b32.xlu0 %v1990, 16
  %v2154 = vpop.permute.xlu0 %2153
  %2155 = vrot.lane.b32.xlu0 %v1991, 16
  %v2156 = vpop.permute.xlu0 %2155
  %2157 = vrot.lane.b32.xlu0 %v1992, 16
  %v2158 = vpop.permute.xlu0 %2157
  %2159 = vrot.lane.b32.xlu0 %v1993, 16
  %v2160 = vpop.permute.xlu0 %2159
  %2161 = vrot.lane.b32.xlu0 %v1994, 16
  %v2162 = vpop.permute.xlu0 %2161
  %2163 = vrot.lane.b32.xlu0 %v1995, 16
  %v2164 = vpop.permute.xlu0 %2163
  %2165 = vrot.lane.b32.xlu0 %v1996, 16
  %v2166 = vpop.permute.xlu0 %2165
  %2167 = vrot.lane.b32.xlu0 %v1997, 16
  %v2168 = vpop.permute.xlu0 %2167
  %v2187 = vrot.slane %v1989, 1
  %v2188 = vrot.slane %v2006, 1
  %v2189 = vsel %vm487, %v2187, %v2188
  %v2190 = vrot.slane %v1997, 1
  %v2191 = vrot.slane %v2014, 1
  %v2192 = vsel %vm487, %v2190, %v2191
  %2193 = vrot.lane.b32.xlu0 %v2050, 24
  %v2194 = vpop.permute.xlu0 %2193
  %2195 = vrot.lane.b32.xlu0 %v2053, 24
  %v2196 = vpop.permute.xlu0 %2195
  %2197 = vrot.lane.b32.xlu0 %v2056, 24
  %v2198 = vpop.permute.xlu0 %2197
  %2199 = vrot.lane.b32.xlu0 %v2059, 24
  %v2200 = vpop.permute.xlu0 %2199
  %2201 = vrot.lane.b32.xlu0 %v2062, 24
  %v2202 = vpop.permute.xlu0 %2201
  %2203 = vrot.lane.b32.xlu0 %v2065, 24
  %v2204 = vpop.permute.xlu0 %2203
  %2205 = vrot.lane.b32.xlu0 %v2068, 24
  %v2206 = vpop.permute.xlu0 %2205
  %2207 = vrot.lane.b32.xlu0 %v2189, 24
  %v2208 = vpop.permute.xlu0 %2207
  %2209 = vrot.lane.b32.xlu0 %v2071, 24
  %v2210 = vpop.permute.xlu0 %2209
  %2211 = vrot.lane.b32.xlu0 %v2074, 24
  %v2212 = vpop.permute.xlu0 %2211
  %2213 = vrot.lane.b32.xlu0 %v2077, 24
  %v2214 = vpop.permute.xlu0 %2213
  %2215 = vrot.lane.b32.xlu0 %v2080, 24
  %v2216 = vpop.permute.xlu0 %2215
  %2217 = vrot.lane.b32.xlu0 %v2083, 24
  %v2218 = vpop.permute.xlu0 %2217
  %2219 = vrot.lane.b32.xlu0 %v2086, 24
  %v2220 = vpop.permute.xlu0 %2219
  %2221 = vrot.lane.b32.xlu0 %v2089, 24
  %v2222 = vpop.permute.xlu0 %2221
  %2223 = vrot.lane.b32.xlu0 %v2192, 24
  %v2224 = vpop.permute.xlu0 %2223
  %v2241 = vsel %vm1553, %v1981, %v2091
  %v2242 = vsel %vm1553, %v1982, %v2093
  %v2243 = vsel %vm1553, %v1983, %v2095
  %v2244 = vsel %vm1553, %v1984, %v2097
  %v2245 = vsel %vm1553, %v1985, %v2099
  %v2246 = vsel %vm1553, %v1986, %v2101
  %v2247 = vsel %vm1553, %v1987, %v2103
  %v2248 = vsel %vm1553, %v1988, %v2105
  %v2249 = vsel %vm1553, %v1990, %v2107
  %v2250 = vsel %vm1553, %v1991, %v2109
  %v2251 = vsel %vm1553, %v1992, %v2111
  %v2252 = vsel %vm1553, %v1993, %v2113
  %v2253 = vsel %vm1553, %v1994, %v2115
  %v2254 = vsel %vm1553, %v1995, %v2117
  %v2255 = vsel %vm1553, %v1996, %v2119
  %v2256 = vsel %vm1587, %v2241, %v2138
  %v2257 = vsel %vm1587, %v2242, %v2140
  %v2258 = vsel %vm1587, %v2243, %v2142
  %v2259 = vsel %vm1587, %v2244, %v2144
  %v2260 = vsel %vm1587, %v2245, %v2146
  %v2261 = vsel %vm1587, %v2246, %v2148
  %v2262 = vsel %vm1587, %v2247, %v2150
  %v2263 = vsel %vm1587, %v2248, %v2152
  %v2264 = vsel %vm1587, %v2241, %v2154
  %v2265 = vsel %vm1587, %v2249, %v2156
  %v2266 = vsel %vm1587, %v2250, %v2158
  %v2267 = vsel %vm1587, %v2251, %v2160
  %v2268 = vsel %vm1587, %v2252, %v2162
  %v2269 = vsel %vm1587, %v2253, %v2164
  %v2270 = vsel %vm1587, %v2254, %v2166
  %v2271 = vsel %vm1587, %v2255, %v2168
  %v2272 = vsel %vm1621, %v2256, %v2194
  %v2273 = vsel %vm1621, %v2257, %v2196
  %v2274 = vsel %vm1621, %v2258, %v2198
  %v2275 = vsel %vm1621, %v2259, %v2200
  %v2276 = vsel %vm1621, %v2260, %v2202
  %v2277 = vsel %vm1621, %v2261, %v2204
  %v2278 = vsel %vm1621, %v2262, %v2206
  %v2279 = vsel %vm1621, %v2263, %v2208
  %v2280 = vsel %vm1621, %v2264, %v2210
  %v2281 = vsel %vm1621, %v2265, %v2212
  %v2282 = vsel %vm1621, %v2266, %v2214
  %v2283 = vsel %vm1621, %v2267, %v2216
  %v2284 = vsel %vm1621, %v2268, %v2218
  %v2285 = vsel %vm1621, %v2269, %v2220
  %v2286 = vsel %vm1621, %v2270, %v2222
  %v2287 = vsel %vm1621, %v2271, %v2224
  %v2288 = vld [vmem:[%s2] sm:$0xff]
  %v2289 = vld [vmem:[%s2 + $0x8] sm:$0xff]
  %v2290 = vld [vmem:[%s2 + $0x10] sm:$0xff]
  %v2291 = vld [vmem:[%s2 + $0x18] sm:$0xff]
  %v2293 = vsel %vm1655, %v2272, 0
  %v2296 = vsel %vm1655, %v2273, 0
  %v2299 = vsel %vm1655, %v2274, 0
  %v2302 = vsel %vm1655, %v2275, 0
  %v2305 = vsel %vm1655, %v2276, 0
  %v2308 = vsel %vm1655, %v2277, 0
  %v2311 = vsel %vm1655, %v2278, 0
  %v2314 = vsel %vm1655, %v2279, 0
  %v2317 = vsel %vm1655, %v2280, 0
  %v2320 = vsel %vm1655, %v2281, 0
  %v2323 = vsel %vm1655, %v2282, 0
  %v2326 = vsel %vm1655, %v2283, 0
  %v2329 = vsel %vm1655, %v2284, 0
  %v2332 = vsel %vm1655, %v2285, 0
  %v2335 = vsel %vm1655, %v2286, 0
  %v2338 = vsel %vm1655, %v2287, 0
  %2340 = vmatpush.msra.mxu0 0.0
  %2341 = vmatpush.msra.mxu0 0.0
  %2342 = vmatpush.msra.mxu0 0.0
  %2343 = vmatpush.msra.mxu0 0.0
  %2344 = vmatpush.msra.mxu0 0.0
  %2345 = vmatpush.msra.mxu0 0.0
  %2346 = vmatpush.msra.mxu0 0.0
  %2347 = vmatpush.msra.mxu0 0.0
  %2348 = vmatpush.msra.mxu0 0.0
  %2349 = vmatpush.msra.mxu0 0.0
  %2350 = vmatpush.msra.mxu0 0.0
  %2351 = vmatpush.msra.mxu0 0.0
  %2352 = vmatpush.msra.mxu0 %v2291
  %2353 = vmatpush.msra.mxu0 %v2290
  %2354 = vmatpush.msra.mxu0 %v2289
  %2355 = vmatpush.msra.mxu0 %v2288
  %2356 = vmatmul.f32.gmra.mxu0 %v2293
  %v2357 = vpop.f32.mrf.mxu0
  %v2358 = vadd.f32 0.0, %v2357
  %2359 = vmatmul.f32.gmra.mxu0 %v2296
  %v2360 = vpop.f32.mrf.mxu0
  %v2361 = vadd.f32 0.0, %v2360
  %2362 = vmatmul.f32.gmra.mxu0 %v2299
  %v2363 = vpop.f32.mrf.mxu0
  %v2364 = vadd.f32 0.0, %v2363
  %2365 = vmatmul.f32.gmra.mxu0 %v2302
  %v2366 = vpop.f32.mrf.mxu0
  %v2367 = vadd.f32 0.0, %v2366
  %2368 = vmatmul.f32.gmra.mxu0 %v2305
  %v2369 = vpop.f32.mrf.mxu0
  %v2370 = vadd.f32 0.0, %v2369
  %2371 = vmatmul.f32.gmra.mxu0 %v2308
  %v2372 = vpop.f32.mrf.mxu0
  %v2373 = vadd.f32 0.0, %v2372
  %2374 = vmatmul.f32.gmra.mxu0 %v2311
  %v2375 = vpop.f32.mrf.mxu0
  %v2376 = vadd.f32 0.0, %v2375
  %2377 = vmatmul.f32.gmra.mxu0 %v2314
  %v2378 = vpop.f32.mrf.mxu0
  %v2379 = vadd.f32 0.0, %v2378
  %2380 = vmatmul.f32.gmra.mxu0 %v2317
  %v2381 = vpop.f32.mrf.mxu0
  %v2382 = vadd.f32 0.0, %v2381
  %2383 = vmatmul.f32.gmra.mxu0 %v2320
  %v2384 = vpop.f32.mrf.mxu0
  %v2385 = vadd.f32 0.0, %v2384
  %2386 = vmatmul.f32.gmra.mxu0 %v2323
  %v2387 = vpop.f32.mrf.mxu0
  %v2388 = vadd.f32 0.0, %v2387
  %2389 = vmatmul.f32.gmra.mxu0 %v2326
  %v2390 = vpop.f32.mrf.mxu0
  %v2391 = vadd.f32 0.0, %v2390
  %2392 = vmatmul.f32.gmra.mxu0 %v2329
  %v2393 = vpop.f32.mrf.mxu0
  %v2394 = vadd.f32 0.0, %v2393
  %2395 = vmatmul.f32.gmra.mxu0 %v2332
  %v2396 = vpop.f32.mrf.mxu0
  %v2397 = vadd.f32 0.0, %v2396
  %2398 = vmatmul.f32.gmra.mxu0 %v2335
  %v2399 = vpop.f32.mrf.mxu0
  %v2400 = vadd.f32 0.0, %v2399
  %2401 = vmatmul.f32.gmra.mxu0 %v2338
  %v2402 = vpop.f32.mrf.mxu0
  %v2403 = vadd.f32 0.0, %v2402
  %2404 = vdwg.mxu0
  %v2405 = vsel %vm1536, %v2358, 0.0
  %v2406 = vsel %vm1536, %v2361, 0.0
  %v2407 = vadd.f32 %v2405, %v2406
  %v2408 = vsel %vm1536, %v2364, 0.0
  %v2409 = vadd.f32 %v2407, %v2408
  %v2410 = vsel %vm1536, %v2367, 0.0
  %v2411 = vadd.f32 %v2409, %v2410
  %v2412 = vsel %vm1536, %v2370, 0.0
  %v2413 = vadd.f32 %v2411, %v2412
  %v2414 = vsel %vm1536, %v2373, 0.0
  %v2415 = vadd.f32 %v2413, %v2414
  %v2416 = vsel %vm1536, %v2376, 0.0
  %v2417 = vadd.f32 %v2415, %v2416
  %v2418 = vsel %vm1536, %v2379, 0.0
  %v2419 = vadd.f32 %v2417, %v2418
  %v2420 = vsel %vm1536, %v2382, 0.0
  %v2421 = vadd.f32 %v2419, %v2420
  %v2422 = vsel %vm1536, %v2385, 0.0
  %v2423 = vadd.f32 %v2421, %v2422
  %v2424 = vsel %vm1536, %v2388, 0.0
  %v2425 = vadd.f32 %v2423, %v2424
  %v2426 = vsel %vm1536, %v2391, 0.0
  %v2427 = vadd.f32 %v2425, %v2426
  %v2428 = vsel %vm1536, %v2394, 0.0
  %v2429 = vadd.f32 %v2427, %v2428
  %v2430 = vsel %vm1536, %v2397, 0.0
  %v2431 = vadd.f32 %v2429, %v2430
  %v2432 = vsel %vm1536, %v2400, 0.0
  %v2433 = vadd.f32 %v2431, %v2432
  %v2434 = vsel %vm1536, %v2403, 0.0
  %v2435 = vadd.f32 %v2433, %v2434
  %v2436 = vrot.slane %v2435, 4
  %v2437 = vadd.f32 %v2435, %v2436
  %v2438 = vrot.slane %v2437, 2
  %v2439 = vadd.f32 %v2437, %v2438
  %v2440 = vrot.slane %v2439, 1
  %v2441 = vadd.f32 %v2439, %v2440
  %v2442 = vadd.f32 %v2441, 0.0
  %v2443 = vmul.f32 %v2358, %v2358
  %v2444 = vmul.f32 %v2361, %v2361
  %v2445 = vmul.f32 %v2364, %v2364
  %v2446 = vmul.f32 %v2367, %v2367
  %v2447 = vmul.f32 %v2370, %v2370
  %v2448 = vmul.f32 %v2373, %v2373
  %v2449 = vmul.f32 %v2376, %v2376
  %v2450 = vmul.f32 %v2379, %v2379
  %v2451 = vmul.f32 %v2382, %v2382
  %v2452 = vmul.f32 %v2385, %v2385
  %v2453 = vmul.f32 %v2388, %v2388
  %v2454 = vmul.f32 %v2391, %v2391
  %v2455 = vmul.f32 %v2394, %v2394
  %v2456 = vmul.f32 %v2397, %v2397
  %v2457 = vmul.f32 %v2400, %v2400
  %v2458 = vmul.f32 %v2403, %v2403
  %v2459 = vsel %vm1536, %v2443, 0.0
  %v2460 = vsel %vm1536, %v2444, 0.0
  %v2461 = vadd.f32 %v2459, %v2460
  %v2462 = vsel %vm1536, %v2445, 0.0
  %v2463 = vadd.f32 %v2461, %v2462
  %v2464 = vsel %vm1536, %v2446, 0.0
  %v2465 = vadd.f32 %v2463, %v2464
  %v2466 = vsel %vm1536, %v2447, 0.0
  %v2467 = vadd.f32 %v2465, %v2466
  %v2468 = vsel %vm1536, %v2448, 0.0
  %v2469 = vadd.f32 %v2467, %v2468
  %v2470 = vsel %vm1536, %v2449, 0.0
  %v2471 = vadd.f32 %v2469, %v2470
  %v2472 = vsel %vm1536, %v2450, 0.0
  %v2473 = vadd.f32 %v2471, %v2472
  %v2474 = vsel %vm1536, %v2451, 0.0
  %v2475 = vadd.f32 %v2473, %v2474
  %v2476 = vsel %vm1536, %v2452, 0.0
  %v2477 = vadd.f32 %v2475, %v2476
  %v2478 = vsel %vm1536, %v2453, 0.0
  %v2479 = vadd.f32 %v2477, %v2478
  %v2480 = vsel %vm1536, %v2454, 0.0
  %v2481 = vadd.f32 %v2479, %v2480
  %v2482 = vsel %vm1536, %v2455, 0.0
  %v2483 = vadd.f32 %v2481, %v2482
  %v2484 = vsel %vm1536, %v2456, 0.0
  %v2485 = vadd.f32 %v2483, %v2484
  %v2486 = vsel %vm1536, %v2457, 0.0
  %v2487 = vadd.f32 %v2485, %v2486
  %v2488 = vsel %vm1536, %v2458, 0.0
  %v2489 = vadd.f32 %v2487, %v2488
  %v2490 = vrot.slane %v2489, 4
  %v2491 = vadd.f32 %v2489, %v2490
  %v2492 = vrot.slane %v2491, 2
  %v2493 = vadd.f32 %v2491, %v2492
  %v2494 = vrot.slane %v2493, 1
  %v2495 = vadd.f32 %v2493, %v2494
  %v2496 = vadd.f32 %v2495, 0.0
  %2497 = vrot.lane.b32.xlu0 %v2046, 8
  %v2498 = vpop.permute.xlu0 %2497
  %2499 = vrot.lane.b32.xlu0 %v2049, 8
  %v2500 = vpop.permute.xlu0 %2499
  %2501 = vrot.lane.b32.xlu0 %v2052, 8
  %v2502 = vpop.permute.xlu0 %2501
  %2503 = vrot.lane.b32.xlu0 %v2055, 8
  %v2504 = vpop.permute.xlu0 %2503
  %2505 = vrot.lane.b32.xlu0 %v2058, 8
  %v2506 = vpop.permute.xlu0 %2505
  %2507 = vrot.lane.b32.xlu0 %v2061, 8
  %v2508 = vpop.permute.xlu0 %2507
  %2509 = vrot.lane.b32.xlu0 %v2064, 8
  %v2510 = vpop.permute.xlu0 %2509
  %2511 = vrot.lane.b32.xlu0 %v2067, 8
  %v2512 = vpop.permute.xlu0 %2511
  %2513 = vrot.lane.b32.xlu0 %v2070, 8
  %v2514 = vpop.permute.xlu0 %2513
  %2515 = vrot.lane.b32.xlu0 %v2073, 8
  %v2516 = vpop.permute.xlu0 %2515
  %2517 = vrot.lane.b32.xlu0 %v2076, 8
  %v2518 = vpop.permute.xlu0 %2517
  %2519 = vrot.lane.b32.xlu0 %v2079, 8
  %v2520 = vpop.permute.xlu0 %2519
  %2521 = vrot.lane.b32.xlu0 %v2082, 8
  %v2522 = vpop.permute.xlu0 %2521
  %2523 = vrot.lane.b32.xlu0 %v2085, 8
  %v2524 = vpop.permute.xlu0 %2523
  %2525 = vrot.lane.b32.xlu0 %v2088, 8
  %v2526 = vpop.permute.xlu0 %2525
  %2542 = vrot.lane.b32.xlu0 %v1999, 16
  %v2543 = vpop.permute.xlu0 %2542
  %2544 = vrot.lane.b32.xlu0 %v2000, 16
  %v2545 = vpop.permute.xlu0 %2544
  %2546 = vrot.lane.b32.xlu0 %v2001, 16
  %v2547 = vpop.permute.xlu0 %2546
  %2548 = vrot.lane.b32.xlu0 %v2002, 16
  %v2549 = vpop.permute.xlu0 %2548
  %2550 = vrot.lane.b32.xlu0 %v2003, 16
  %v2551 = vpop.permute.xlu0 %2550
  %2552 = vrot.lane.b32.xlu0 %v2004, 16
  %v2553 = vpop.permute.xlu0 %2552
  %2554 = vrot.lane.b32.xlu0 %v2005, 16
  %v2555 = vpop.permute.xlu0 %2554
  %2556 = vrot.lane.b32.xlu0 %v2006, 16
  %v2557 = vpop.permute.xlu0 %2556
  %2558 = vrot.lane.b32.xlu0 %v2007, 16
  %v2559 = vpop.permute.xlu0 %2558
  %2560 = vrot.lane.b32.xlu0 %v2008, 16
  %v2561 = vpop.permute.xlu0 %2560
  %2562 = vrot.lane.b32.xlu0 %v2009, 16
  %v2563 = vpop.permute.xlu0 %2562
  %2564 = vrot.lane.b32.xlu0 %v2010, 16
  %v2565 = vpop.permute.xlu0 %2564
  %2566 = vrot.lane.b32.xlu0 %v2011, 16
  %v2567 = vpop.permute.xlu0 %2566
  %2568 = vrot.lane.b32.xlu0 %v2012, 16
  %v2569 = vpop.permute.xlu0 %2568
  %2570 = vrot.lane.b32.xlu0 %v2013, 16
  %v2571 = vpop.permute.xlu0 %2570
  %2572 = vrot.lane.b32.xlu0 %v2014, 16
  %v2573 = vpop.permute.xlu0 %2572
  %2590 = vrot.lane.b32.xlu0 %v2049, 24
  %v2591 = vpop.permute.xlu0 %2590
  %2592 = vrot.lane.b32.xlu0 %v2052, 24
  %v2593 = vpop.permute.xlu0 %2592
  %2594 = vrot.lane.b32.xlu0 %v2055, 24
  %v2595 = vpop.permute.xlu0 %2594
  %2596 = vrot.lane.b32.xlu0 %v2058, 24
  %v2597 = vpop.permute.xlu0 %2596
  %2598 = vrot.lane.b32.xlu0 %v2061, 24
  %v2599 = vpop.permute.xlu0 %2598
  %2600 = vrot.lane.b32.xlu0 %v2064, 24
  %v2601 = vpop.permute.xlu0 %2600
  %2602 = vrot.lane.b32.xlu0 %v2067, 24
  %v2603 = vpop.permute.xlu0 %2602
  %2604 = vrot.lane.b32.xlu0 %v2188, 24
  %v2605 = vpop.permute.xlu0 %2604
  %2606 = vrot.lane.b32.xlu0 %v2070, 24
  %v2607 = vpop.permute.xlu0 %2606
  %2608 = vrot.lane.b32.xlu0 %v2073, 24
  %v2609 = vpop.permute.xlu0 %2608
  %2610 = vrot.lane.b32.xlu0 %v2076, 24
  %v2611 = vpop.permute.xlu0 %2610
  %2612 = vrot.lane.b32.xlu0 %v2079, 24
  %v2613 = vpop.permute.xlu0 %2612
  %2614 = vrot.lane.b32.xlu0 %v2082, 24
  %v2615 = vpop.permute.xlu0 %2614
  %2616 = vrot.lane.b32.xlu0 %v2085, 24
  %v2617 = vpop.permute.xlu0 %2616
  %2618 = vrot.lane.b32.xlu0 %v2088, 24
  %v2619 = vpop.permute.xlu0 %2618
  %2620 = vrot.lane.b32.xlu0 %v2191, 24
  %v2621 = vpop.permute.xlu0 %2620
  %v2638 = vsel %vm1553, %v1998, %v2498
  %v2639 = vsel %vm1553, %v1999, %v2500
  %v2640 = vsel %vm1553, %v2000, %v2502
  %v2641 = vsel %vm1553, %v2001, %v2504
  %v2642 = vsel %vm1553, %v2002, %v2506
  %v2643 = vsel %vm1553, %v2003, %v2508
  %v2644 = vsel %vm1553, %v2004, %v2510
  %v2645 = vsel %vm1553, %v2005, %v2512
  %v2646 = vsel %vm1553, %v2007, %v2514
  %v2647 = vsel %vm1553, %v2008, %v2516
  %v2648 = vsel %vm1553, %v2009, %v2518
  %v2649 = vsel %vm1553, %v2010, %v2520
  %v2650 = vsel %vm1553, %v2011, %v2522
  %v2651 = vsel %vm1553, %v2012, %v2524
  %v2652 = vsel %vm1553, %v2013, %v2526
  %v2653 = vsel %vm1587, %v2638, %v2543
  %v2654 = vsel %vm1587, %v2639, %v2545
  %v2655 = vsel %vm1587, %v2640, %v2547
  %v2656 = vsel %vm1587, %v2641, %v2549
  %v2657 = vsel %vm1587, %v2642, %v2551
  %v2658 = vsel %vm1587, %v2643, %v2553
  %v2659 = vsel %vm1587, %v2644, %v2555
  %v2660 = vsel %vm1587, %v2645, %v2557
  %v2661 = vsel %vm1587, %v2638, %v2559
  %v2662 = vsel %vm1587, %v2646, %v2561
  %v2663 = vsel %vm1587, %v2647, %v2563
  %v2664 = vsel %vm1587, %v2648, %v2565
  %v2665 = vsel %vm1587, %v2649, %v2567
  %v2666 = vsel %vm1587, %v2650, %v2569
  %v2667 = vsel %vm1587, %v2651, %v2571
  %v2668 = vsel %vm1587, %v2652, %v2573
  %v2669 = vsel %vm1621, %v2653, %v2591
  %v2670 = vsel %vm1621, %v2654, %v2593
  %v2671 = vsel %vm1621, %v2655, %v2595
  %v2672 = vsel %vm1621, %v2656, %v2597
  %v2673 = vsel %vm1621, %v2657, %v2599
  %v2674 = vsel %vm1621, %v2658, %v2601
  %v2675 = vsel %vm1621, %v2659, %v2603
  %v2676 = vsel %vm1621, %v2660, %v2605
  %v2677 = vsel %vm1621, %v2661, %v2607
  %v2678 = vsel %vm1621, %v2662, %v2609
  %v2679 = vsel %vm1621, %v2663, %v2611
  %v2680 = vsel %vm1621, %v2664, %v2613
  %v2681 = vsel %vm1621, %v2665, %v2615
  %v2682 = vsel %vm1621, %v2666, %v2617
  %v2683 = vsel %vm1621, %v2667, %v2619
  %v2684 = vsel %vm1621, %v2668, %v2621
  %v2701 = vrot.slane %v2272, 1
  %v2702 = vrot.slane %v2669, 1
  %v2703 = vsel %vm487, %v2701, %v2702
  %v2704 = vrot.slane %v2273, 1
  %v2705 = vrot.slane %v2670, 1
  %v2706 = vsel %vm487, %v2704, %v2705
  %v2707 = vrot.slane %v2274, 1
  %v2708 = vrot.slane %v2671, 1
  %v2709 = vsel %vm487, %v2707, %v2708
  %v2710 = vrot.slane %v2275, 1
  %v2711 = vrot.slane %v2672, 1
  %v2712 = vsel %vm487, %v2710, %v2711
  %v2713 = vrot.slane %v2276, 1
  %v2714 = vrot.slane %v2673, 1
  %v2715 = vsel %vm487, %v2713, %v2714
  %v2716 = vrot.slane %v2277, 1
  %v2717 = vrot.slane %v2674, 1
  %v2718 = vsel %vm487, %v2716, %v2717
  %v2719 = vrot.slane %v2278, 1
  %v2720 = vrot.slane %v2675, 1
  %v2721 = vsel %vm487, %v2719, %v2720
  %v2722 = vrot.slane %v2279, 1
  %v2723 = vrot.slane %v2676, 1
  %v2724 = vsel %vm487, %v2722, %v2723
  %v2725 = vrot.slane %v2280, 1
  %v2726 = vrot.slane %v2677, 1
  %v2727 = vsel %vm487, %v2725, %v2726
  %v2728 = vrot.slane %v2281, 1
  %v2729 = vrot.slane %v2678, 1
  %v2730 = vsel %vm487, %v2728, %v2729
  %v2731 = vrot.slane %v2282, 1
  %v2732 = vrot.slane %v2679, 1
  %v2733 = vsel %vm487, %v2731, %v2732
  %v2734 = vrot.slane %v2283, 1
  %v2735 = vrot.slane %v2680, 1
  %v2736 = vsel %vm487, %v2734, %v2735
  %v2737 = vrot.slane %v2284, 1
  %v2738 = vrot.slane %v2681, 1
  %v2739 = vsel %vm487, %v2737, %v2738
  %v2740 = vrot.slane %v2285, 1
  %v2741 = vrot.slane %v2682, 1
  %v2742 = vsel %vm487, %v2740, %v2741
  %v2743 = vrot.slane %v2286, 1
  %v2744 = vrot.slane %v2683, 1
  %v2745 = vsel %vm487, %v2743, %v2744
  %v2746 = vrot.slane %v2287, 1
  %v2747 = vrot.slane %v2684, 1
  %v2748 = vsel %vm487, %v2746, %v2747
  %s2749 = scalar_lea.vmem %s2, 32
  %v2750 = vld [vmem:[%s2749] sm:$0xff]
  %v2751 = vld [vmem:[%s2749 + $0x8] sm:$0xff]
  %v2752 = vld [vmem:[%s2749 + $0x10] sm:$0xff]
  %v2753 = vld [vmem:[%s2749 + $0x18] sm:$0xff]
  %v2754 = vsel %vm1655, %v2703, 0
  %v2756 = vsel %vm1655, %v2706, 0
  %v2758 = vsel %vm1655, %v2709, 0
  %v2760 = vsel %vm1655, %v2712, 0
  %v2762 = vsel %vm1655, %v2715, 0
  %v2764 = vsel %vm1655, %v2718, 0
  %v2766 = vsel %vm1655, %v2721, 0
  %v2768 = vsel %vm1655, %v2724, 0
  %v2770 = vsel %vm1655, %v2727, 0
  %v2772 = vsel %vm1655, %v2730, 0
  %v2774 = vsel %vm1655, %v2733, 0
  %v2776 = vsel %vm1655, %v2736, 0
  %v2778 = vsel %vm1655, %v2739, 0
  %v2780 = vsel %vm1655, %v2742, 0
  %v2782 = vsel %vm1655, %v2745, 0
  %v2784 = vsel %vm1655, %v2748, 0
  %2786 = vmatpush.msra.mxu0 0.0
  %2787 = vmatpush.msra.mxu0 0.0
  %2788 = vmatpush.msra.mxu0 0.0
  %2789 = vmatpush.msra.mxu0 0.0
  %2790 = vmatpush.msra.mxu0 0.0
  %2791 = vmatpush.msra.mxu0 0.0
  %2792 = vmatpush.msra.mxu0 0.0
  %2793 = vmatpush.msra.mxu0 0.0
  %2794 = vmatpush.msra.mxu0 0.0
  %2795 = vmatpush.msra.mxu0 0.0
  %2796 = vmatpush.msra.mxu0 0.0
  %2797 = vmatpush.msra.mxu0 0.0
  %2798 = vmatpush.msra.mxu0 %v2753
  %2799 = vmatpush.msra.mxu0 %v2752
  %2800 = vmatpush.msra.mxu0 %v2751
  %2801 = vmatpush.msra.mxu0 %v2750
  %2802 = vmatmul.f32.gmra.mxu0 %v2754
  %v2803 = vpop.f32.mrf.mxu0
  %v2804 = vadd.f32 0.0, %v2803
  %2805 = vmatmul.f32.gmra.mxu0 %v2756
  %v2806 = vpop.f32.mrf.mxu0
  %v2807 = vadd.f32 0.0, %v2806
  %2808 = vmatmul.f32.gmra.mxu0 %v2758
  %v2809 = vpop.f32.mrf.mxu0
  %v2810 = vadd.f32 0.0, %v2809
  %2811 = vmatmul.f32.gmra.mxu0 %v2760
  %v2812 = vpop.f32.mrf.mxu0
  %v2813 = vadd.f32 0.0, %v2812
  %2814 = vmatmul.f32.gmra.mxu0 %v2762
  %v2815 = vpop.f32.mrf.mxu0
  %v2816 = vadd.f32 0.0, %v2815
  %2817 = vmatmul.f32.gmra.mxu0 %v2764
  %v2818 = vpop.f32.mrf.mxu0
  %v2819 = vadd.f32 0.0, %v2818
  %2820 = vmatmul.f32.gmra.mxu0 %v2766
  %v2821 = vpop.f32.mrf.mxu0
  %v2822 = vadd.f32 0.0, %v2821
  %2823 = vmatmul.f32.gmra.mxu0 %v2768
  %v2824 = vpop.f32.mrf.mxu0
  %v2825 = vadd.f32 0.0, %v2824
  %2826 = vmatmul.f32.gmra.mxu0 %v2770
  %v2827 = vpop.f32.mrf.mxu0
  %v2828 = vadd.f32 0.0, %v2827
  %2829 = vmatmul.f32.gmra.mxu0 %v2772
  %v2830 = vpop.f32.mrf.mxu0
  %v2831 = vadd.f32 0.0, %v2830
  %2832 = vmatmul.f32.gmra.mxu0 %v2774
  %v2833 = vpop.f32.mrf.mxu0
  %v2834 = vadd.f32 0.0, %v2833
  %2835 = vmatmul.f32.gmra.mxu0 %v2776
  %v2836 = vpop.f32.mrf.mxu0
  %v2837 = vadd.f32 0.0, %v2836
  %2838 = vmatmul.f32.gmra.mxu0 %v2778
  %v2839 = vpop.f32.mrf.mxu0
  %v2840 = vadd.f32 0.0, %v2839
  %2841 = vmatmul.f32.gmra.mxu0 %v2780
  %v2842 = vpop.f32.mrf.mxu0
  %v2843 = vadd.f32 0.0, %v2842
  %2844 = vmatmul.f32.gmra.mxu0 %v2782
  %v2845 = vpop.f32.mrf.mxu0
  %v2846 = vadd.f32 0.0, %v2845
  %2847 = vmatmul.f32.gmra.mxu0 %v2784
  %v2848 = vpop.f32.mrf.mxu0
  %v2849 = vadd.f32 0.0, %v2848
  %2850 = vdwg.mxu0
  %v2851 = vsel %vm1536, %v2804, 0.0
  %v2852 = vsel %vm1536, %v2807, 0.0
  %v2853 = vadd.f32 %v2851, %v2852
  %v2854 = vsel %vm1536, %v2810, 0.0
  %v2855 = vadd.f32 %v2853, %v2854
  %v2856 = vsel %vm1536, %v2813, 0.0
  %v2857 = vadd.f32 %v2855, %v2856
  %v2858 = vsel %vm1536, %v2816, 0.0
  %v2859 = vadd.f32 %v2857, %v2858
  %v2860 = vsel %vm1536, %v2819, 0.0
  %v2861 = vadd.f32 %v2859, %v2860
  %v2862 = vsel %vm1536, %v2822, 0.0
  %v2863 = vadd.f32 %v2861, %v2862
  %v2864 = vsel %vm1536, %v2825, 0.0
  %v2865 = vadd.f32 %v2863, %v2864
  %v2866 = vsel %vm1536, %v2828, 0.0
  %v2867 = vadd.f32 %v2865, %v2866
  %v2868 = vsel %vm1536, %v2831, 0.0
  %v2869 = vadd.f32 %v2867, %v2868
  %v2870 = vsel %vm1536, %v2834, 0.0
  %v2871 = vadd.f32 %v2869, %v2870
  %v2872 = vsel %vm1536, %v2837, 0.0
  %v2873 = vadd.f32 %v2871, %v2872
  %v2874 = vsel %vm1536, %v2840, 0.0
  %v2875 = vadd.f32 %v2873, %v2874
  %v2876 = vsel %vm1536, %v2843, 0.0
  %v2877 = vadd.f32 %v2875, %v2876
  %v2878 = vsel %vm1536, %v2846, 0.0
  %v2879 = vadd.f32 %v2877, %v2878
  %v2880 = vsel %vm1536, %v2849, 0.0
  %v2881 = vadd.f32 %v2879, %v2880
  %v2882 = vrot.slane %v2881, 4
  %v2883 = vadd.f32 %v2881, %v2882
  %v2884 = vrot.slane %v2883, 2
  %v2885 = vadd.f32 %v2883, %v2884
  %v2886 = vrot.slane %v2885, 1
  %v2887 = vadd.f32 %v2885, %v2886
  %v2888 = vadd.f32 %v2442, %v2887
  %v2889 = vmul.f32 %v2804, %v2804
  %v2890 = vmul.f32 %v2807, %v2807
  %v2891 = vmul.f32 %v2810, %v2810
  %v2892 = vmul.f32 %v2813, %v2813
  %v2893 = vmul.f32 %v2816, %v2816
  %v2894 = vmul.f32 %v2819, %v2819
  %v2895 = vmul.f32 %v2822, %v2822
  %v2896 = vmul.f32 %v2825, %v2825
  %v2897 = vmul.f32 %v2828, %v2828
  %v2898 = vmul.f32 %v2831, %v2831
  %v2899 = vmul.f32 %v2834, %v2834
  %v2900 = vmul.f32 %v2837, %v2837
  %v2901 = vmul.f32 %v2840, %v2840
  %v2902 = vmul.f32 %v2843, %v2843
  %v2903 = vmul.f32 %v2846, %v2846
  %v2904 = vmul.f32 %v2849, %v2849
  %v2905 = vsel %vm1536, %v2889, 0.0
  %v2906 = vsel %vm1536, %v2890, 0.0
  %v2907 = vadd.f32 %v2905, %v2906
  %v2908 = vsel %vm1536, %v2891, 0.0
  %v2909 = vadd.f32 %v2907, %v2908
  %v2910 = vsel %vm1536, %v2892, 0.0
  %v2911 = vadd.f32 %v2909, %v2910
  %v2912 = vsel %vm1536, %v2893, 0.0
  %v2913 = vadd.f32 %v2911, %v2912
  %v2914 = vsel %vm1536, %v2894, 0.0
  %v2915 = vadd.f32 %v2913, %v2914
  %v2916 = vsel %vm1536, %v2895, 0.0
  %v2917 = vadd.f32 %v2915, %v2916
  %v2918 = vsel %vm1536, %v2896, 0.0
  %v2919 = vadd.f32 %v2917, %v2918
  %v2920 = vsel %vm1536, %v2897, 0.0
  %v2921 = vadd.f32 %v2919, %v2920
  %v2922 = vsel %vm1536, %v2898, 0.0
  %v2923 = vadd.f32 %v2921, %v2922
  %v2924 = vsel %vm1536, %v2899, 0.0
  %v2925 = vadd.f32 %v2923, %v2924
  %v2926 = vsel %vm1536, %v2900, 0.0
  %v2927 = vadd.f32 %v2925, %v2926
  %v2928 = vsel %vm1536, %v2901, 0.0
  %v2929 = vadd.f32 %v2927, %v2928
  %v2930 = vsel %vm1536, %v2902, 0.0
  %v2931 = vadd.f32 %v2929, %v2930
  %v2932 = vsel %vm1536, %v2903, 0.0
  %v2933 = vadd.f32 %v2931, %v2932
  %v2934 = vsel %vm1536, %v2904, 0.0
  %v2935 = vadd.f32 %v2933, %v2934
  %v2936 = vrot.slane %v2935, 4
  %v2937 = vadd.f32 %v2935, %v2936
  %v2938 = vrot.slane %v2937, 2
  %v2939 = vadd.f32 %v2937, %v2938
  %v2940 = vrot.slane %v2939, 1
  %v2941 = vadd.f32 %v2939, %v2940
  %v2942 = vadd.f32 %v2496, %v2941
  %2943 = vrot.lane.b32.xlu0 %v2189, 8
  %v2944 = vpop.permute.xlu0 %2943
  %2945 = vrot.lane.b32.xlu0 %v2192, 8
  %v2946 = vpop.permute.xlu0 %2945
  %2949 = vrot.lane.b32.xlu0 %v1981, 16
  %v2950 = vpop.permute.xlu0 %2949
  %2952 = vrot.lane.b32.xlu0 %v2047, 24
  %v2953 = vpop.permute.xlu0 %2952
  %v2955 = vsel %vm1553, %v1989, %v2944
  %v2956 = vsel %vm1553, %v1997, %v2946
  %v2957 = vsel %vm1587, %v2955, %v2950
  %v2958 = vsel %vm1587, %v2956, %v2950
  %v2959 = vsel %vm1621, %v2957, %v2953
  %v2960 = vsel %vm1621, %v2958, %v2953
  %s2961 = scalar_lea.vmem %s2, 64
  %v2962 = vld [vmem:[%s2961] sm:$0xff]
  %v2963 = vld [vmem:[%s2961 + $0x8] sm:$0xff]
  %v2964 = vld [vmem:[%s2961 + $0x10] sm:$0xff]
  %v2965 = vld [vmem:[%s2961 + $0x18] sm:$0xff]
  %v2967 = vsel %vm1655, %v2959, 0
  %v2970 = vsel %vm1655, %v2960, 0
  %2972 = vmatpush.msra.mxu0 0.0
  %2973 = vmatpush.msra.mxu0 0.0
  %2974 = vmatpush.msra.mxu0 0.0
  %2975 = vmatpush.msra.mxu0 0.0
  %2976 = vmatpush.msra.mxu0 0.0
  %2977 = vmatpush.msra.mxu0 0.0
  %2978 = vmatpush.msra.mxu0 0.0
  %2979 = vmatpush.msra.mxu0 0.0
  %2980 = vmatpush.msra.mxu0 0.0
  %2981 = vmatpush.msra.mxu0 0.0
  %2982 = vmatpush.msra.mxu0 0.0
  %2983 = vmatpush.msra.mxu0 0.0
  %2984 = vmatpush.msra.mxu0 %v2965
  %2985 = vmatpush.msra.mxu0 %v2964
  %2986 = vmatpush.msra.mxu0 %v2963
  %2987 = vmatpush.msra.mxu0 %v2962
  %2988 = vmatmul.f32.gmra.mxu0 %v2296
  %v2989 = vpop.f32.mrf.mxu0
  %v2990 = vadd.f32 0.0, %v2989
  %2991 = vmatmul.f32.gmra.mxu0 %v2299
  %v2992 = vpop.f32.mrf.mxu0
  %v2993 = vadd.f32 0.0, %v2992
  %2994 = vmatmul.f32.gmra.mxu0 %v2302
  %v2995 = vpop.f32.mrf.mxu0
  %v2996 = vadd.f32 0.0, %v2995
  %2997 = vmatmul.f32.gmra.mxu0 %v2305
  %v2998 = vpop.f32.mrf.mxu0
  %v2999 = vadd.f32 0.0, %v2998
  %3000 = vmatmul.f32.gmra.mxu0 %v2308
  %v3001 = vpop.f32.mrf.mxu0
  %v3002 = vadd.f32 0.0, %v3001
  %3003 = vmatmul.f32.gmra.mxu0 %v2311
  %v3004 = vpop.f32.mrf.mxu0
  %v3005 = vadd.f32 0.0, %v3004
  %3006 = vmatmul.f32.gmra.mxu0 %v2314
  %v3007 = vpop.f32.mrf.mxu0
  %v3008 = vadd.f32 0.0, %v3007
  %3009 = vmatmul.f32.gmra.mxu0 %v2967
  %v3010 = vpop.f32.mrf.mxu0
  %v3011 = vadd.f32 0.0, %v3010
  %3012 = vmatmul.f32.gmra.mxu0 %v2320
  %v3013 = vpop.f32.mrf.mxu0
  %v3014 = vadd.f32 0.0, %v3013
  %3015 = vmatmul.f32.gmra.mxu0 %v2323
  %v3016 = vpop.f32.mrf.mxu0
  %v3017 = vadd.f32 0.0, %v3016
  %3018 = vmatmul.f32.gmra.mxu0 %v2326
  %v3019 = vpop.f32.mrf.mxu0
  %v3020 = vadd.f32 0.0, %v3019
  %3021 = vmatmul.f32.gmra.mxu0 %v2329
  %v3022 = vpop.f32.mrf.mxu0
  %v3023 = vadd.f32 0.0, %v3022
  %3024 = vmatmul.f32.gmra.mxu0 %v2332
  %v3025 = vpop.f32.mrf.mxu0
  %v3026 = vadd.f32 0.0, %v3025
  %3027 = vmatmul.f32.gmra.mxu0 %v2335
  %v3028 = vpop.f32.mrf.mxu0
  %v3029 = vadd.f32 0.0, %v3028
  %3030 = vmatmul.f32.gmra.mxu0 %v2338
  %v3031 = vpop.f32.mrf.mxu0
  %v3032 = vadd.f32 0.0, %v3031
  %3033 = vmatmul.f32.gmra.mxu0 %v2970
  %v3034 = vpop.f32.mrf.mxu0
  %v3035 = vadd.f32 0.0, %v3034
  %3036 = vdwg.mxu0
  %v3037 = vsel %vm1536, %v2990, 0.0
  %v3038 = vsel %vm1536, %v2993, 0.0
  %v3039 = vadd.f32 %v3037, %v3038
  %v3040 = vsel %vm1536, %v2996, 0.0
  %v3041 = vadd.f32 %v3039, %v3040
  %v3042 = vsel %vm1536, %v2999, 0.0
  %v3043 = vadd.f32 %v3041, %v3042
  %v3044 = vsel %vm1536, %v3002, 0.0
  %v3045 = vadd.f32 %v3043, %v3044
  %v3046 = vsel %vm1536, %v3005, 0.0
  %v3047 = vadd.f32 %v3045, %v3046
  %v3048 = vsel %vm1536, %v3008, 0.0
  %v3049 = vadd.f32 %v3047, %v3048
  %v3050 = vsel %vm1536, %v3011, 0.0
  %v3051 = vadd.f32 %v3049, %v3050
  %v3052 = vsel %vm1536, %v3014, 0.0
  %v3053 = vadd.f32 %v3051, %v3052
  %v3054 = vsel %vm1536, %v3017, 0.0
  %v3055 = vadd.f32 %v3053, %v3054
  %v3056 = vsel %vm1536, %v3020, 0.0
  %v3057 = vadd.f32 %v3055, %v3056
  %v3058 = vsel %vm1536, %v3023, 0.0
  %v3059 = vadd.f32 %v3057, %v3058
  %v3060 = vsel %vm1536, %v3026, 0.0
  %v3061 = vadd.f32 %v3059, %v3060
  %v3062 = vsel %vm1536, %v3029, 0.0
  %v3063 = vadd.f32 %v3061, %v3062
  %v3064 = vsel %vm1536, %v3032, 0.0
  %v3065 = vadd.f32 %v3063, %v3064
  %v3066 = vsel %vm1536, %v3035, 0.0
  %v3067 = vadd.f32 %v3065, %v3066
  %v3068 = vrot.slane %v3067, 4
  %v3069 = vadd.f32 %v3067, %v3068
  %v3070 = vrot.slane %v3069, 2
  %v3071 = vadd.f32 %v3069, %v3070
  %v3072 = vrot.slane %v3071, 1
  %v3073 = vadd.f32 %v3071, %v3072
  %v3074 = vadd.f32 %v2888, %v3073
  %v3075 = vmul.f32 %v2990, %v2990
  %v3076 = vmul.f32 %v2993, %v2993
  %v3077 = vmul.f32 %v2996, %v2996
  %v3078 = vmul.f32 %v2999, %v2999
  %v3079 = vmul.f32 %v3002, %v3002
  %v3080 = vmul.f32 %v3005, %v3005
  %v3081 = vmul.f32 %v3008, %v3008
  %v3082 = vmul.f32 %v3011, %v3011
  %v3083 = vmul.f32 %v3014, %v3014
  %v3084 = vmul.f32 %v3017, %v3017
  %v3085 = vmul.f32 %v3020, %v3020
  %v3086 = vmul.f32 %v3023, %v3023
  %v3087 = vmul.f32 %v3026, %v3026
  %v3088 = vmul.f32 %v3029, %v3029
  %v3089 = vmul.f32 %v3032, %v3032
  %v3090 = vmul.f32 %v3035, %v3035
  %v3091 = vsel %vm1536, %v3075, 0.0
  %v3092 = vsel %vm1536, %v3076, 0.0
  %v3093 = vadd.f32 %v3091, %v3092
  %v3094 = vsel %vm1536, %v3077, 0.0
  %v3095 = vadd.f32 %v3093, %v3094
  %v3096 = vsel %vm1536, %v3078, 0.0
  %v3097 = vadd.f32 %v3095, %v3096
  %v3098 = vsel %vm1536, %v3079, 0.0
  %v3099 = vadd.f32 %v3097, %v3098
  %v3100 = vsel %vm1536, %v3080, 0.0
  %v3101 = vadd.f32 %v3099, %v3100
  %v3102 = vsel %vm1536, %v3081, 0.0
  %v3103 = vadd.f32 %v3101, %v3102
  %v3104 = vsel %vm1536, %v3082, 0.0
  %v3105 = vadd.f32 %v3103, %v3104
  %v3106 = vsel %vm1536, %v3083, 0.0
  %v3107 = vadd.f32 %v3105, %v3106
  %v3108 = vsel %vm1536, %v3084, 0.0
  %v3109 = vadd.f32 %v3107, %v3108
  %v3110 = vsel %vm1536, %v3085, 0.0
  %v3111 = vadd.f32 %v3109, %v3110
  %v3112 = vsel %vm1536, %v3086, 0.0
  %v3113 = vadd.f32 %v3111, %v3112
  %v3114 = vsel %vm1536, %v3087, 0.0
  %v3115 = vadd.f32 %v3113, %v3114
  %v3116 = vsel %vm1536, %v3088, 0.0
  %v3117 = vadd.f32 %v3115, %v3116
  %v3118 = vsel %vm1536, %v3089, 0.0
  %v3119 = vadd.f32 %v3117, %v3118
  %v3120 = vsel %vm1536, %v3090, 0.0
  %v3121 = vadd.f32 %v3119, %v3120
  %v3122 = vrot.slane %v3121, 4
  %v3123 = vadd.f32 %v3121, %v3122
  %v3124 = vrot.slane %v3123, 2
  %v3125 = vadd.f32 %v3123, %v3124
  %v3126 = vrot.slane %v3125, 1
  %v3127 = vadd.f32 %v3125, %v3126
  %v3128 = vadd.f32 %v2942, %v3127
  %3129 = vrot.lane.b32.xlu0 %v2188, 8
  %v3130 = vpop.permute.xlu0 %3129
  %3131 = vrot.lane.b32.xlu0 %v2191, 8
  %v3132 = vpop.permute.xlu0 %3131
  %3135 = vrot.lane.b32.xlu0 %v1998, 16
  %v3136 = vpop.permute.xlu0 %3135
  %3138 = vrot.lane.b32.xlu0 %v2046, 24
  %v3139 = vpop.permute.xlu0 %3138
  %v3141 = vsel %vm1553, %v2006, %v3130
  %v3142 = vsel %vm1553, %v2014, %v3132
  %v3143 = vsel %vm1587, %v3141, %v3136
  %v3144 = vsel %vm1587, %v3142, %v3136
  %v3145 = vsel %vm1621, %v3143, %v3139
  %v3146 = vsel %vm1621, %v3144, %v3139
  %v3149 = vrot.slane %v2959, 1
  %v3150 = vrot.slane %v3145, 1
  %v3151 = vsel %vm487, %v3149, %v3150
  %v3152 = vrot.slane %v2960, 1
  %v3153 = vrot.slane %v3146, 1
  %v3154 = vsel %vm487, %v3152, %v3153
  %s3155 = scalar_lea.vmem %s2, 96
  %v3156 = vld [vmem:[%s3155] sm:$0xff]
  %v3157 = vld [vmem:[%s3155 + $0x8] sm:$0xff]
  %v3158 = vld [vmem:[%s3155 + $0x10] sm:$0xff]
  %v3159 = vld [vmem:[%s3155 + $0x18] sm:$0xff]
  %v3160 = vsel %vm1655, %v3151, 0
  %v3162 = vsel %vm1655, %v3154, 0
  %3164 = vmatpush.msra.mxu0 0.0
  %3165 = vmatpush.msra.mxu0 0.0
  %3166 = vmatpush.msra.mxu0 0.0
  %3167 = vmatpush.msra.mxu0 0.0
  %3168 = vmatpush.msra.mxu0 0.0
  %3169 = vmatpush.msra.mxu0 0.0
  %3170 = vmatpush.msra.mxu0 0.0
  %3171 = vmatpush.msra.mxu0 0.0
  %3172 = vmatpush.msra.mxu0 0.0
  %3173 = vmatpush.msra.mxu0 0.0
  %3174 = vmatpush.msra.mxu0 0.0
  %3175 = vmatpush.msra.mxu0 0.0
  %3176 = vmatpush.msra.mxu0 %v3159
  %3177 = vmatpush.msra.mxu0 %v3158
  %3178 = vmatpush.msra.mxu0 %v3157
  %3179 = vmatpush.msra.mxu0 %v3156
  %3180 = vmatmul.f32.gmra.mxu0 %v2756
  %v3181 = vpop.f32.mrf.mxu0
  %v3182 = vadd.f32 0.0, %v3181
  %3183 = vmatmul.f32.gmra.mxu0 %v2758
  %v3184 = vpop.f32.mrf.mxu0
  %v3185 = vadd.f32 0.0, %v3184
  %3186 = vmatmul.f32.gmra.mxu0 %v2760
  %v3187 = vpop.f32.mrf.mxu0
  %v3188 = vadd.f32 0.0, %v3187
  %3189 = vmatmul.f32.gmra.mxu0 %v2762
  %v3190 = vpop.f32.mrf.mxu0
  %v3191 = vadd.f32 0.0, %v3190
  %3192 = vmatmul.f32.gmra.mxu0 %v2764
  %v3193 = vpop.f32.mrf.mxu0
  %v3194 = vadd.f32 0.0, %v3193
  %3195 = vmatmul.f32.gmra.mxu0 %v2766
  %v3196 = vpop.f32.mrf.mxu0
  %v3197 = vadd.f32 0.0, %v3196
  %3198 = vmatmul.f32.gmra.mxu0 %v2768
  %v3199 = vpop.f32.mrf.mxu0
  %v3200 = vadd.f32 0.0, %v3199
  %3201 = vmatmul.f32.gmra.mxu0 %v3160
  %v3202 = vpop.f32.mrf.mxu0
  %v3203 = vadd.f32 0.0, %v3202
  %3204 = vmatmul.f32.gmra.mxu0 %v2772
  %v3205 = vpop.f32.mrf.mxu0
  %v3206 = vadd.f32 0.0, %v3205
  %3207 = vmatmul.f32.gmra.mxu0 %v2774
  %v3208 = vpop.f32.mrf.mxu0
  %v3209 = vadd.f32 0.0, %v3208
  %3210 = vmatmul.f32.gmra.mxu0 %v2776
  %v3211 = vpop.f32.mrf.mxu0
  %v3212 = vadd.f32 0.0, %v3211
  %3213 = vmatmul.f32.gmra.mxu0 %v2778
  %v3214 = vpop.f32.mrf.mxu0
  %v3215 = vadd.f32 0.0, %v3214
  %3216 = vmatmul.f32.gmra.mxu0 %v2780
  %v3217 = vpop.f32.mrf.mxu0
  %v3218 = vadd.f32 0.0, %v3217
  %3219 = vmatmul.f32.gmra.mxu0 %v2782
  %v3220 = vpop.f32.mrf.mxu0
  %v3221 = vadd.f32 0.0, %v3220
  %3222 = vmatmul.f32.gmra.mxu0 %v2784
  %v3223 = vpop.f32.mrf.mxu0
  %v3224 = vadd.f32 0.0, %v3223
  %3225 = vmatmul.f32.gmra.mxu0 %v3162
  %v3226 = vpop.f32.mrf.mxu0
  %v3227 = vadd.f32 0.0, %v3226
  %3228 = vdwg.mxu0
  %v3229 = vsel %vm1536, %v3182, 0.0
  %v3230 = vsel %vm1536, %v3185, 0.0
  %v3231 = vadd.f32 %v3229, %v3230
  %v3232 = vsel %vm1536, %v3188, 0.0
  %v3233 = vadd.f32 %v3231, %v3232
  %v3234 = vsel %vm1536, %v3191, 0.0
  %v3235 = vadd.f32 %v3233, %v3234
  %v3236 = vsel %vm1536, %v3194, 0.0
  %v3237 = vadd.f32 %v3235, %v3236
  %v3238 = vsel %vm1536, %v3197, 0.0
  %v3239 = vadd.f32 %v3237, %v3238
  %v3240 = vsel %vm1536, %v3200, 0.0
  %v3241 = vadd.f32 %v3239, %v3240
  %v3242 = vsel %vm1536, %v3203, 0.0
  %v3243 = vadd.f32 %v3241, %v3242
  %v3244 = vsel %vm1536, %v3206, 0.0
  %v3245 = vadd.f32 %v3243, %v3244
  %v3246 = vsel %vm1536, %v3209, 0.0
  %v3247 = vadd.f32 %v3245, %v3246
  %v3248 = vsel %vm1536, %v3212, 0.0
  %v3249 = vadd.f32 %v3247, %v3248
  %v3250 = vsel %vm1536, %v3215, 0.0
  %v3251 = vadd.f32 %v3249, %v3250
  %v3252 = vsel %vm1536, %v3218, 0.0
  %v3253 = vadd.f32 %v3251, %v3252
  %v3254 = vsel %vm1536, %v3221, 0.0
  %v3255 = vadd.f32 %v3253, %v3254
  %v3256 = vsel %vm1536, %v3224, 0.0
  %v3257 = vadd.f32 %v3255, %v3256
  %v3258 = vsel %vm1536, %v3227, 0.0
  %v3259 = vadd.f32 %v3257, %v3258
  %v3260 = vrot.slane %v3259, 4
  %v3261 = vadd.f32 %v3259, %v3260
  %v3262 = vrot.slane %v3261, 2
  %v3263 = vadd.f32 %v3261, %v3262
  %v3264 = vrot.slane %v3263, 1
  %v3265 = vadd.f32 %v3263, %v3264
  %v3266 = vadd.f32 %v3074, %v3265
  %v3267 = vmul.f32 %v3182, %v3182
  %v3268 = vmul.f32 %v3185, %v3185
  %v3269 = vmul.f32 %v3188, %v3188
  %v3270 = vmul.f32 %v3191, %v3191
  %v3271 = vmul.f32 %v3194, %v3194
  %v3272 = vmul.f32 %v3197, %v3197
  %v3273 = vmul.f32 %v3200, %v3200
  %v3274 = vmul.f32 %v3203, %v3203
  %v3275 = vmul.f32 %v3206, %v3206
  %v3276 = vmul.f32 %v3209, %v3209
  %v3277 = vmul.f32 %v3212, %v3212
  %v3278 = vmul.f32 %v3215, %v3215
  %v3279 = vmul.f32 %v3218, %v3218
  %v3280 = vmul.f32 %v3221, %v3221
  %v3281 = vmul.f32 %v3224, %v3224
  %v3282 = vmul.f32 %v3227, %v3227
  %v3283 = vsel %vm1536, %v3267, 0.0
  %v3284 = vsel %vm1536, %v3268, 0.0
  %v3285 = vadd.f32 %v3283, %v3284
  %v3286 = vsel %vm1536, %v3269, 0.0
  %v3287 = vadd.f32 %v3285, %v3286
  %v3288 = vsel %vm1536, %v3270, 0.0
  %v3289 = vadd.f32 %v3287, %v3288
  %v3290 = vsel %vm1536, %v3271, 0.0
  %v3291 = vadd.f32 %v3289, %v3290
  %v3292 = vsel %vm1536, %v3272, 0.0
  %v3293 = vadd.f32 %v3291, %v3292
  %v3294 = vsel %vm1536, %v3273, 0.0
  %v3295 = vadd.f32 %v3293, %v3294
  %v3296 = vsel %vm1536, %v3274, 0.0
  %v3297 = vadd.f32 %v3295, %v3296
  %v3298 = vsel %vm1536, %v3275, 0.0
  %v3299 = vadd.f32 %v3297, %v3298
  %v3300 = vsel %vm1536, %v3276, 0.0
  %v3301 = vadd.f32 %v3299, %v3300
  %v3302 = vsel %vm1536, %v3277, 0.0
  %v3303 = vadd.f32 %v3301, %v3302
  %v3304 = vsel %vm1536, %v3278, 0.0
  %v3305 = vadd.f32 %v3303, %v3304
  %v3306 = vsel %vm1536, %v3279, 0.0
  %v3307 = vadd.f32 %v3305, %v3306
  %v3308 = vsel %vm1536, %v3280, 0.0
  %v3309 = vadd.f32 %v3307, %v3308
  %v3310 = vsel %vm1536, %v3281, 0.0
  %v3311 = vadd.f32 %v3309, %v3310
  %v3312 = vsel %vm1536, %v3282, 0.0
  %v3313 = vadd.f32 %v3311, %v3312
  %v3314 = vrot.slane %v3313, 4
  %v3315 = vadd.f32 %v3313, %v3314
  %v3316 = vrot.slane %v3315, 2
  %v3317 = vadd.f32 %v3315, %v3316
  %v3318 = vrot.slane %v3317, 1
  %v3319 = vadd.f32 %v3317, %v3318
  %v3320 = vadd.f32 %v3128, %v3319
  %v3321 = vrcp.pop 512.0
  %v3322 = vmul.f32 512.0, %v3321
  %v3323 = vsub.f32 1.0, %v3322
  %v3324 = vmul.f32 %v3321, %v3323
  %v3325 = vadd.f32 %v3321, %v3324
  %vm3326 = vweird.f32 %v3321
  %v3327 = vsel %vm3326, %v3321, %v3325
  %v3328 = vmul.f32 %v3266, %v3327
  %v3329 = vmul.f32 %v3320, %v3327
  %v3330 = vmul.f32 %v3328, %v3328
  %v3331 = vsub.f32 %v3329, %v3330
  %v3332 = vmax.f32 %v3331, 0.0
  %v3333 = vld [vmem:[%s3] sm:$0x1]
  %v3334 = vadd.f32 %v3332, 1e-05
  %v3335 = vrsqrt.pop %v3334
  %v3336 = vmul.f32 %v3335, %v3334
  %v3337 = vmul.f32 %v3336, %v3335
  %v3338 = vmul.f32 0.5, %v3337
  %v3339 = vsub.f32 1.5, %v3338
  %v3340 = vmul.f32 %v3335, %v3339
  %vm3341 = vweird.f32 %v3334
  %vm3342 = vweird.f32 %v3335
  %vm3343 = vmor %vm3341, %vm3342
  %v3344 = vsel %vm3343, %v3335, %v3340
  %v3345 = vmul.f32 %v3333, %v3344
  %v3346 = vld [vmem:[%s4] sm:$0x1]
  %v3347 = vmul.f32 %v3328, %v3345
  %v3348 = vsub.f32 %v3346, %v3347
  %v3350 = vperm.slane %v3345, 0
  %v3352 = vmul.f32 %v2358, %v3350
  %v3353 = vmul.f32 %v2361, %v3350
  %v3354 = vmul.f32 %v2364, %v3350
  %v3355 = vmul.f32 %v2367, %v3350
  %v3356 = vmul.f32 %v2370, %v3350
  %v3357 = vmul.f32 %v2373, %v3350
  %v3358 = vmul.f32 %v2376, %v3350
  %v3359 = vmul.f32 %v2379, %v3350
  %v3360 = vmul.f32 %v2382, %v3350
  %v3361 = vmul.f32 %v2385, %v3350
  %v3362 = vmul.f32 %v2388, %v3350
  %v3363 = vmul.f32 %v2391, %v3350
  %v3364 = vmul.f32 %v2394, %v3350
  %v3365 = vmul.f32 %v2397, %v3350
  %v3366 = vmul.f32 %v2400, %v3350
  %v3367 = vmul.f32 %v2403, %v3350
  %v3369 = vperm.slane %v3348, 0
  %v3371 = vadd.f32 %v3352, %v3369
  %v3372 = vadd.f32 %v3353, %v3369
  %v3373 = vadd.f32 %v3354, %v3369
  %v3374 = vadd.f32 %v3355, %v3369
  %v3375 = vadd.f32 %v3356, %v3369
  %v3376 = vadd.f32 %v3357, %v3369
  %v3377 = vadd.f32 %v3358, %v3369
  %v3378 = vadd.f32 %v3359, %v3369
  %v3379 = vadd.f32 %v3360, %v3369
  %v3380 = vadd.f32 %v3361, %v3369
  %v3381 = vadd.f32 %v3362, %v3369
  %v3382 = vadd.f32 %v3363, %v3369
  %v3383 = vadd.f32 %v3364, %v3369
  %v3384 = vadd.f32 %v3365, %v3369
  %v3385 = vadd.f32 %v3366, %v3369
  %v3386 = vadd.f32 %v3367, %v3369
  %v3387 = vmul.f32 %v2804, %v3350
  %v3388 = vmul.f32 %v2807, %v3350
  %v3389 = vmul.f32 %v2810, %v3350
  %v3390 = vmul.f32 %v2813, %v3350
  %v3391 = vmul.f32 %v2816, %v3350
  %v3392 = vmul.f32 %v2819, %v3350
  %v3393 = vmul.f32 %v2822, %v3350
  %v3394 = vmul.f32 %v2825, %v3350
  %v3395 = vmul.f32 %v2828, %v3350
  %v3396 = vmul.f32 %v2831, %v3350
  %v3397 = vmul.f32 %v2834, %v3350
  %v3398 = vmul.f32 %v2837, %v3350
  %v3399 = vmul.f32 %v2840, %v3350
  %v3400 = vmul.f32 %v2843, %v3350
  %v3401 = vmul.f32 %v2846, %v3350
  %v3402 = vmul.f32 %v2849, %v3350
  %v3403 = vadd.f32 %v3387, %v3369
  %v3404 = vadd.f32 %v3388, %v3369
  %v3405 = vadd.f32 %v3389, %v3369
  %v3406 = vadd.f32 %v3390, %v3369
  %v3407 = vadd.f32 %v3391, %v3369
  %v3408 = vadd.f32 %v3392, %v3369
  %v3409 = vadd.f32 %v3393, %v3369
  %v3410 = vadd.f32 %v3394, %v3369
  %v3411 = vadd.f32 %v3395, %v3369
  %v3412 = vadd.f32 %v3396, %v3369
  %v3413 = vadd.f32 %v3397, %v3369
  %v3414 = vadd.f32 %v3398, %v3369
  %v3415 = vadd.f32 %v3399, %v3369
  %v3416 = vadd.f32 %v3400, %v3369
  %v3417 = vadd.f32 %v3401, %v3369
  %v3418 = vadd.f32 %v3402, %v3369
  %v3419 = vmul.f32 %v2990, %v3350
  %v3420 = vmul.f32 %v2993, %v3350
  %v3421 = vmul.f32 %v2996, %v3350
  %v3422 = vmul.f32 %v2999, %v3350
  %v3423 = vmul.f32 %v3002, %v3350
  %v3424 = vmul.f32 %v3005, %v3350
  %v3425 = vmul.f32 %v3008, %v3350
  %v3426 = vmul.f32 %v3011, %v3350
  %v3427 = vmul.f32 %v3014, %v3350
  %v3428 = vmul.f32 %v3017, %v3350
  %v3429 = vmul.f32 %v3020, %v3350
  %v3430 = vmul.f32 %v3023, %v3350
  %v3431 = vmul.f32 %v3026, %v3350
  %v3432 = vmul.f32 %v3029, %v3350
  %v3433 = vmul.f32 %v3032, %v3350
  %v3434 = vmul.f32 %v3035, %v3350
  %v3435 = vadd.f32 %v3419, %v3369
  %v3436 = vadd.f32 %v3420, %v3369
  %v3437 = vadd.f32 %v3421, %v3369
  %v3438 = vadd.f32 %v3422, %v3369
  %v3439 = vadd.f32 %v3423, %v3369
  %v3440 = vadd.f32 %v3424, %v3369
  %v3441 = vadd.f32 %v3425, %v3369
  %v3442 = vadd.f32 %v3426, %v3369
  %v3443 = vadd.f32 %v3427, %v3369
  %v3444 = vadd.f32 %v3428, %v3369
  %v3445 = vadd.f32 %v3429, %v3369
  %v3446 = vadd.f32 %v3430, %v3369
  %v3447 = vadd.f32 %v3431, %v3369
  %v3448 = vadd.f32 %v3432, %v3369
  %v3449 = vadd.f32 %v3433, %v3369
  %v3450 = vadd.f32 %v3434, %v3369
  %v3451 = vmul.f32 %v3182, %v3350
  %v3452 = vmul.f32 %v3185, %v3350
  %v3453 = vmul.f32 %v3188, %v3350
  %v3454 = vmul.f32 %v3191, %v3350
  %v3455 = vmul.f32 %v3194, %v3350
  %v3456 = vmul.f32 %v3197, %v3350
  %v3457 = vmul.f32 %v3200, %v3350
  %v3458 = vmul.f32 %v3203, %v3350
  %v3459 = vmul.f32 %v3206, %v3350
  %v3460 = vmul.f32 %v3209, %v3350
  %v3461 = vmul.f32 %v3212, %v3350
  %v3462 = vmul.f32 %v3215, %v3350
  %v3463 = vmul.f32 %v3218, %v3350
  %v3464 = vmul.f32 %v3221, %v3350
  %v3465 = vmul.f32 %v3224, %v3350
  %v3466 = vmul.f32 %v3227, %v3350
  %v3467 = vadd.f32 %v3451, %v3369
  %v3468 = vadd.f32 %v3452, %v3369
  %v3469 = vadd.f32 %v3453, %v3369
  %v3470 = vadd.f32 %v3454, %v3369
  %v3471 = vadd.f32 %v3455, %v3369
  %v3472 = vadd.f32 %v3456, %v3369
  %v3473 = vadd.f32 %v3457, %v3369
  %v3474 = vadd.f32 %v3458, %v3369
  %v3475 = vadd.f32 %v3459, %v3369
  %v3476 = vadd.f32 %v3460, %v3369
  %v3477 = vadd.f32 %v3461, %v3369
  %v3478 = vadd.f32 %v3462, %v3369
  %v3479 = vadd.f32 %v3463, %v3369
  %v3480 = vadd.f32 %v3464, %v3369
  %v3481 = vadd.f32 %v3465, %v3369
  %v3482 = vadd.f32 %v3466, %v3369
  %3499 = vrot.lane.b32.xlu0 %v3403, 4
  %v3500 = vpop.permute.xlu0 %3499
  %3501 = vrot.lane.b32.xlu0 %v3404, 4
  %v3502 = vpop.permute.xlu0 %3501
  %3503 = vrot.lane.b32.xlu0 %v3405, 4
  %v3504 = vpop.permute.xlu0 %3503
  %3505 = vrot.lane.b32.xlu0 %v3406, 4
  %v3506 = vpop.permute.xlu0 %3505
  %3507 = vrot.lane.b32.xlu0 %v3407, 4
  %v3508 = vpop.permute.xlu0 %3507
  %3509 = vrot.lane.b32.xlu0 %v3408, 4
  %v3510 = vpop.permute.xlu0 %3509
  %3511 = vrot.lane.b32.xlu0 %v3409, 4
  %v3512 = vpop.permute.xlu0 %3511
  %3513 = vrot.lane.b32.xlu0 %v3410, 4
  %v3514 = vpop.permute.xlu0 %3513
  %3515 = vrot.lane.b32.xlu0 %v3411, 4
  %v3516 = vpop.permute.xlu0 %3515
  %3517 = vrot.lane.b32.xlu0 %v3412, 4
  %v3518 = vpop.permute.xlu0 %3517
  %3519 = vrot.lane.b32.xlu0 %v3413, 4
  %v3520 = vpop.permute.xlu0 %3519
  %3521 = vrot.lane.b32.xlu0 %v3414, 4
  %v3522 = vpop.permute.xlu0 %3521
  %3523 = vrot.lane.b32.xlu0 %v3415, 4
  %v3524 = vpop.permute.xlu0 %3523
  %3525 = vrot.lane.b32.xlu0 %v3416, 4
  %v3526 = vpop.permute.xlu0 %3525
  %3527 = vrot.lane.b32.xlu0 %v3417, 4
  %v3528 = vpop.permute.xlu0 %3527
  %3529 = vrot.lane.b32.xlu0 %v3418, 4
  %v3530 = vpop.permute.xlu0 %3529
  %3563 = vrot.lane.b32.xlu0 %v3435, 8
  %v3564 = vpop.permute.xlu0 %3563
  %3565 = vrot.lane.b32.xlu0 %v3436, 8
  %v3566 = vpop.permute.xlu0 %3565
  %3567 = vrot.lane.b32.xlu0 %v3437, 8
  %v3568 = vpop.permute.xlu0 %3567
  %3569 = vrot.lane.b32.xlu0 %v3438, 8
  %v3570 = vpop.permute.xlu0 %3569
  %3571 = vrot.lane.b32.xlu0 %v3439, 8
  %v3572 = vpop.permute.xlu0 %3571
  %3573 = vrot.lane.b32.xlu0 %v3440, 8
  %v3574 = vpop.permute.xlu0 %3573
  %3575 = vrot.lane.b32.xlu0 %v3441, 8
  %v3576 = vpop.permute.xlu0 %3575
  %3577 = vrot.lane.b32.xlu0 %v3442, 8
  %v3578 = vpop.permute.xlu0 %3577
  %3579 = vrot.lane.b32.xlu0 %v3443, 8
  %v3580 = vpop.permute.xlu0 %3579
  %3581 = vrot.lane.b32.xlu0 %v3444, 8
  %v3582 = vpop.permute.xlu0 %3581
  %3583 = vrot.lane.b32.xlu0 %v3445, 8
  %v3584 = vpop.permute.xlu0 %3583
  %3585 = vrot.lane.b32.xlu0 %v3446, 8
  %v3586 = vpop.permute.xlu0 %3585
  %3587 = vrot.lane.b32.xlu0 %v3447, 8
  %v3588 = vpop.permute.xlu0 %3587
  %3589 = vrot.lane.b32.xlu0 %v3448, 8
  %v3590 = vpop.permute.xlu0 %3589
  %3591 = vrot.lane.b32.xlu0 %v3449, 8
  %v3592 = vpop.permute.xlu0 %3591
  %3593 = vrot.lane.b32.xlu0 %v3450, 8
  %v3594 = vpop.permute.xlu0 %3593
  %3627 = vrot.lane.b32.xlu0 %v3467, 12
  %v3628 = vpop.permute.xlu0 %3627
  %3629 = vrot.lane.b32.xlu0 %v3468, 12
  %v3630 = vpop.permute.xlu0 %3629
  %3631 = vrot.lane.b32.xlu0 %v3469, 12
  %v3632 = vpop.permute.xlu0 %3631
  %3633 = vrot.lane.b32.xlu0 %v3470, 12
  %v3634 = vpop.permute.xlu0 %3633
  %3635 = vrot.lane.b32.xlu0 %v3471, 12
  %v3636 = vpop.permute.xlu0 %3635
  %3637 = vrot.lane.b32.xlu0 %v3472, 12
  %v3638 = vpop.permute.xlu0 %3637
  %3639 = vrot.lane.b32.xlu0 %v3473, 12
  %v3640 = vpop.permute.xlu0 %3639
  %3641 = vrot.lane.b32.xlu0 %v3474, 12
  %v3642 = vpop.permute.xlu0 %3641
  %3643 = vrot.lane.b32.xlu0 %v3475, 12
  %v3644 = vpop.permute.xlu0 %3643
  %3645 = vrot.lane.b32.xlu0 %v3476, 12
  %v3646 = vpop.permute.xlu0 %3645
  %3647 = vrot.lane.b32.xlu0 %v3477, 12
  %v3648 = vpop.permute.xlu0 %3647
  %3649 = vrot.lane.b32.xlu0 %v3478, 12
  %v3650 = vpop.permute.xlu0 %3649
  %3651 = vrot.lane.b32.xlu0 %v3479, 12
  %v3652 = vpop.permute.xlu0 %3651
  %3653 = vrot.lane.b32.xlu0 %v3480, 12
  %v3654 = vpop.permute.xlu0 %3653
  %3655 = vrot.lane.b32.xlu0 %v3481, 12
  %v3656 = vpop.permute.xlu0 %3655
  %3657 = vrot.lane.b32.xlu0 %v3482, 12
  %v3658 = vpop.permute.xlu0 %3657
  %v3675 = vsel %vm1536, %v3371, %v3500
  %v3676 = vsel %vm1536, %v3372, %v3502
  %v3677 = vsel %vm1536, %v3373, %v3504
  %v3678 = vsel %vm1536, %v3374, %v3506
  %v3679 = vsel %vm1536, %v3375, %v3508
  %v3680 = vsel %vm1536, %v3376, %v3510
  %v3681 = vsel %vm1536, %v3377, %v3512
  %v3682 = vsel %vm1536, %v3378, %v3514
  %v3683 = vsel %vm1536, %v3379, %v3516
  %v3684 = vsel %vm1536, %v3380, %v3518
  %v3685 = vsel %vm1536, %v3381, %v3520
  %v3686 = vsel %vm1536, %v3382, %v3522
  %v3687 = vsel %vm1536, %v3383, %v3524
  %v3688 = vsel %vm1536, %v3384, %v3526
  %v3689 = vsel %vm1536, %v3385, %v3528
  %v3690 = vsel %vm1536, %v3386, %v3530
  %v3691 = vsel %vm1553, %v3675, %v3564
  %v3692 = vsel %vm1553, %v3676, %v3566
  %v3693 = vsel %vm1553, %v3677, %v3568
  %v3694 = vsel %vm1553, %v3678, %v3570
  %v3695 = vsel %vm1553, %v3679, %v3572
  %v3696 = vsel %vm1553, %v3680, %v3574
  %v3697 = vsel %vm1553, %v3681, %v3576
  %v3698 = vsel %vm1553, %v3682, %v3578
  %v3699 = vsel %vm1553, %v3683, %v3580
  %v3700 = vsel %vm1553, %v3684, %v3582
  %v3701 = vsel %vm1553, %v3685, %v3584
  %v3702 = vsel %vm1553, %v3686, %v3586
  %v3703 = vsel %vm1553, %v3687, %v3588
  %v3704 = vsel %vm1553, %v3688, %v3590
  %v3705 = vsel %vm1553, %v3689, %v3592
  %v3706 = vsel %vm1553, %v3690, %v3594
  %v3707 = vsel %vm1570, %v3691, %v3628
  %v3708 = vsel %vm1570, %v3692, %v3630
  %v3709 = vsel %vm1570, %v3693, %v3632
  %v3710 = vsel %vm1570, %v3694, %v3634
  %v3711 = vsel %vm1570, %v3695, %v3636
  %v3712 = vsel %vm1570, %v3696, %v3638
  %v3713 = vsel %vm1570, %v3697, %v3640
  %v3714 = vsel %vm1570, %v3698, %v3642
  %v3715 = vsel %vm1570, %v3699, %v3644
  %v3716 = vsel %vm1570, %v3700, %v3646
  %v3717 = vsel %vm1570, %v3701, %v3648
  %v3718 = vsel %vm1570, %v3702, %v3650
  %v3719 = vsel %vm1570, %v3703, %v3652
  %v3720 = vsel %vm1570, %v3704, %v3654
  %v3721 = vsel %vm1570, %v3705, %v3656
  %v3722 = vsel %vm1570, %v3706, %v3658
  %3723 = vst.msk [vmem:[%s5] sm:$0xff] %vm1587, %v3707
  %3724 = vst.msk [vmem:[%s5 + $0x8] sm:$0xff] %vm1587, %v3708
  %3725 = vst.msk [vmem:[%s5 + $0x10] sm:$0xff] %vm1587, %v3709
  %3726 = vst.msk [vmem:[%s5 + $0x18] sm:$0xff] %vm1587, %v3710
  %3727 = vst.msk [vmem:[%s5 + $0x20] sm:$0xff] %vm1587, %v3711
  %3728 = vst.msk [vmem:[%s5 + $0x28] sm:$0xff] %vm1587, %v3712
  %3729 = vst.msk [vmem:[%s5 + $0x30] sm:$0xff] %vm1587, %v3713
  %3730 = vst.msk [vmem:[%s5 + $0x38] sm:$0xff] %vm1587, %v3714
  %3731 = vst.msk [vmem:[%s5 + $0x40] sm:$0xff] %vm1587, %v3715
  %3732 = vst.msk [vmem:[%s5 + $0x48] sm:$0xff] %vm1587, %v3716
  %3733 = vst.msk [vmem:[%s5 + $0x50] sm:$0xff] %vm1587, %v3717
  %3734 = vst.msk [vmem:[%s5 + $0x58] sm:$0xff] %vm1587, %v3718
  %3735 = vst.msk [vmem:[%s5 + $0x60] sm:$0xff] %vm1587, %v3719
  %3736 = vst.msk [vmem:[%s5 + $0x68] sm:$0xff] %vm1587, %v3720
  %3737 = vst.msk [vmem:[%s5 + $0x70] sm:$0xff] %vm1587, %v3721
  %3738 = vst.msk [vmem:[%s5 + $0x78] sm:$0xff] %vm1587, %v3722
  // Predicated region
  $region22: #{unet_innermost_forward.1} parent=0 // pred_check
    _
  $region23: #{unet_innermost_forward.1} parent=0 // pred_check_branch
    %3740 = sbr.rel (0) target = $region25
  $region24: #{unet_innermost_forward.1} parent=0 // pred_region
    _
  $region25: #{unet_innermost_forward.1} parent=0 // pred_fallthru
    _
  // Predicated region
  $region26: #{unet_innermost_forward.1} parent=0 // pred_check
    _
  $region27: #{unet_innermost_forward.1} parent=0 // pred_check_branch
    %3742 = sbr.rel (0) target = $region29
  $region28: #{unet_innermost_forward.1} parent=0 // pred_region
    _
  $region29: #{unet_innermost_forward.1} parent=0 // pred_fallthru
    _

</llo_original>
